<compile_context>
chip_gen: v7x
topology: tpu7x:2x2x1
jax: 0.10.0
libtpu: 0.0.40
codegen_flags: <defaults>
</compile_context>

<pallas_src>
import functools

import jax
import jax.numpy as jnp
from jax.experimental import pallas as pl
from jax.experimental.pallas import tpu as pltpu


def _round_up(a, b):
    return (a + b - 1) // b * b


def _cdiv(a, b):
    return (a + b - 1) // b


def derivnet2d_kernel(xt_ref, w1_ref, b1_ref, w2_ref, b2_ref, w3_ref, b3_ref,
                      out_ref, lhs2_ref, lhs3_ref):
    """One batch tile, feature-major layout: (features, batch-lanes)."""
    tm = xt_ref.shape[1]                  # batch tile width (lane axis), static
    n_h1 = w1_ref.shape[0]                # padded hidden-1 width
    n_o = w3_ref.shape[0]                 # padded output width (multiple of 8)
    mxu_dtype = lhs2_ref.dtype            # operand dtype fed to the MXU

    xt = xt_ref[...]                      # (2,  tm)
    w1 = w1_ref[...]                      # (h1, 2)  f32 (VPU path)
    x0 = xt[0:1, :]                       # (1, tm)
    x1 = xt[1:2, :]

    # Hoisted lane-broadcasts: each is reused below; JAX does not CSE
    # broadcast_in_dim, so materialize them exactly once per tile.
    w1c0 = jnp.broadcast_to(w1[:, 0:1], (n_h1, tm))        # dh1/dx1
    w1c1 = jnp.broadcast_to(w1[:, 1:2], (n_h1, tm))        # dh1/dx2
    b1 = jnp.broadcast_to(b1_ref[...], (n_h1, tm))

    # ----- layer 1 on the VPU: a K=2 matmul would waste a full MXU pass.
    h1 = w1c0 * x0 + w1c1 * x1 + b1                        # (h1, tm)
    z1 = jnp.tanh(h1)
    dz1 = 1.0 - z1 * z1        # sech^2(h1) == 4 / (exp(-h1) + exp(h1))^2

    # ----- pack [ z1 | dz1*w1[:,0] | dz1*w1[:,1] ] straight into VMEM scratch
    #       (tm-aligned slice stores; no lane-axis concatenate copy).
    lhs2_ref[:, 0:tm] = z1.astype(mxu_dtype)
    lhs2_ref[:, tm:2 * tm] = (dz1 * w1c0).astype(mxu_dtype)
    lhs2_ref[:, 2 * tm:3 * tm] = (dz1 * w1c1).astype(mxu_dtype)

    # ----- one MXU pass shared by the forward and both derivative chains.
    r2 = jnp.dot(w2_ref[...], lhs2_ref[...],
                 preferred_element_type=jnp.float32)        # (h2, 3*tm) f32

    h2 = r2[:, 0:tm] + b2_ref[...]                          # (h2, tm)
    z2 = jnp.tanh(h2)
    dz2 = 1.0 - z2 * z2

    # ----- transform r2 block-by-block into the second packed operand:
    #       [ z2 | dz2 * (W2 dz1 w1c0) | dz2 * (W2 dz1 w1c1) ]
    lhs3_ref[:, 0:tm] = z2.astype(mxu_dtype)
    lhs3_ref[:, tm:2 * tm] = (dz2 * r2[:, tm:2 * tm]).astype(mxu_dtype)
    lhs3_ref[:, 2 * tm:3 * tm] = (dz2 * r2[:, 2 * tm:3 * tm]).astype(mxu_dtype)

    # ----- second shared MXU pass.
    r3 = jnp.dot(w3_ref[...], lhs3_ref[...],
                 preferred_element_type=jnp.float32)        # (n_o, 3*tm) f32

    # ----- three full-sublane (n_o % 8 == 0), lane-dense slice stores.
    out_ref[0:n_o, :] = r3[:, 0:tm] + b3_ref[...]           # y
    out_ref[n_o:2 * n_o, :] = r3[:, 2 * tm:3 * tm]          # v1 =  dy/dx2
    out_ref[2 * n_o:3 * n_o, :] = -r3[:, tm:2 * tm]         # v2 = -dy/dx1


def derivnet2d(x, w1, b1, w2, b2, w3, b3, *, max_tile=2048,
               mxu_dtype=jnp.bfloat16):
    nx, n_in = x.shape
    assert n_in == 2, "DerivNet2D expects 2 input features"
    n_h1, n_h2, n_o = w1.shape[0], w2.shape[0], w3.shape[0]

    # Pad hidden / output widths to full sublanes (8); zero padding is
    # mathematically inert (padded tanh rows feed zero weight columns).
    h1p = _round_up(n_h1, 8)
    h2p = _round_up(n_h2, 8)
    nop = _round_up(n_o, 8)

    # Batch tiling: lane-aligned tiles; keep >= 2 grid steps and an even step
    # count so both v7x TensorCores get work under "parallel" semantics,
    # without padding a whole wasted tile when nx is large.
    n_steps = max(2, _cdiv(nx, max_tile))
    n_steps += n_steps % 2
    tm = max(128, _round_up(_cdiv(nx, n_steps), 128))
    n_steps = _cdiv(nx, tm)
    n_steps += n_steps % 2
    nx_pad = n_steps * tm

    f32 = jnp.float32
    # Single pad + transpose for the input; weights stay in their PyTorch
    # (out, in) layout which is already feature-major for this kernel.
    xt = jnp.pad(jnp.asarray(x, f32).T, ((0, 0), (0, nx_pad - nx)))
    w1f = jnp.pad(jnp.asarray(w1, f32), ((0, h1p - n_h1), (0, 0)))
    b1c = jnp.pad(jnp.asarray(b1, f32), (0, h1p - n_h1)).reshape(h1p, 1)
    w2f = jnp.pad(jnp.asarray(w2, f32),
                  ((0, h2p - n_h2), (0, h1p - n_h1))).astype(mxu_dtype)
    b2c = jnp.pad(jnp.asarray(b2, f32), (0, h2p - n_h2)).reshape(h2p, 1)
    w3f = jnp.pad(jnp.asarray(w3, f32),
                  ((0, nop - n_o), (0, h2p - n_h2))).astype(mxu_dtype)
    b3c = jnp.pad(jnp.asarray(b3, f32), (0, nop - n_o)).reshape(nop, 1)

    def resident(shape):                  # weights/biases: constant index_map
        return pl.BlockSpec(shape, lambda i: (0, 0))

    cost = pl.CostEstimate(
        flops=2 * nx_pad * (n_in * h1p + 3 * h1p * h2p + 3 * h2p * nop),
        transcendentals=nx_pad * (h1p + h2p),
        bytes_accessed=4 * nx_pad * (n_in + 3 * nop)
        + 4 * (h1p * (n_in + 1) + h2p * (h1p + 1) + nop * (h2p + 1)),
    )

    out = pl.pallas_call(
        derivnet2d_kernel,
        out_shape=jax.ShapeDtypeStruct((3 * nop, nx_pad), f32),
        grid_spec=pltpu.PrefetchScalarGridSpec(
            num_scalar_prefetch=0,
            grid=(n_steps,),
            in_specs=[
                pl.BlockSpec((n_in, tm), lambda i: (0, i)),   # x batch tile
                resident((h1p, n_in)),                        # w1  (f32, VPU)
                resident((h1p, 1)),                           # b1
                resident((h2p, h1p)),                         # w2  (mxu_dtype)
                resident((h2p, 1)),                           # b2
                resident((nop, h2p)),                         # w3  (mxu_dtype)
                resident((nop, 1)),                           # b3
            ],
            out_specs=pl.BlockSpec((3 * nop, tm), lambda i: (0, i)),
            scratch_shapes=[
                pltpu.VMEM((h1p, 3 * tm), mxu_dtype),   # packed LHS for W2 pass
                pltpu.VMEM((h2p, 3 * tm), mxu_dtype),   # packed LHS for W3 pass
            ],
        ),
        compiler_params=pltpu.CompilerParams(
            dimension_semantics=("parallel",),
            vmem_limit_bytes=32 * 1024 * 1024,
        ),
        cost_estimate=cost,
    )(xt, w1f, b1c, w2f, b2c, w3f, b3c)

    # One transpose back to the PyTorch (nx, n_o) convention, then slices.
    out_t = out[:, :nx].T                                   # (nx, 3*nop)
    y = out_t[:, 0:n_o]
    v1 = out_t[:, nop:nop + n_o]
    v2 = out_t[:, 2 * nop:2 * nop + n_o]
    return y, v1, v2


def _reference(x, w1, b1, w2, b2, w3, b3):
    # Literal transcription of the PyTorch forward (for validation).
    dot = functools.partial(jnp.dot, precision=jax.lax.Precision.HIGHEST)
    h1 = dot(x, w1.T) + b1
    z1 = jnp.tanh(h1)
    h2 = dot(z1, w2.T) + b2
    z2 = jnp.tanh(h2)
    y = dot(z2, w3.T) + b3
    nx = x.shape[0]
    dh1dx1 = jnp.repeat(w1[:, 0:1], nx, axis=1)
    dh1dx2 = jnp.repeat(w1[:, 1:2], nx, axis=1)
    dz1dh1 = 4.0 / jnp.square(jnp.exp(-h1.T) + jnp.exp(h1.T))
    dz2dh2 = 4.0 / jnp.square(jnp.exp(-h2.T) + jnp.exp(h2.T))
    dydx1 = dot(w3, dz2dh2 * dot(w2, dz1dh1 * dh1dx1)).T
    dydx2 = dot(w3, dz2dh2 * dot(w2, dz1dh1 * dh1dx2)).T
    return y, dydx2, -dydx1


if __name__ == "__main__":
    # Small shapes implied by the module: x is (nx, 2).
    nx, n_in, n_h1, n_h2, n_o = 2000, 2, 32, 32, 4   # -> 2 batch tiles of 1024

    key = jax.random.PRNGKey(0)
    k = jax.random.split(key, 7)
    x = jax.random.normal(k[0], (nx, n_in), jnp.float32)
    # deterministic synthetic parameters (PyTorch-Linear-like uniform init)
    w1 = jax.random.uniform(k[1], (n_h1, n_in), jnp.float32, -1.0, 1.0) / jnp.sqrt(n_in)
    b1 = jax.random.uniform(k[2], (n_h1,), jnp.float32, -1.0, 1.0) / jnp.sqrt(n_in)
    w2 = jax.random.uniform(k[3], (n_h2, n_h1), jnp.float32, -1.0, 1.0) / jnp.sqrt(n_h1)
    b2 = jax.random.uniform(k[4], (n_h2,), jnp.float32, -1.0, 1.0) / jnp.sqrt(n_h1)
    w3 = jax.random.uniform(k[5], (n_o, n_h2), jnp.float32, -1.0, 1.0) / jnp.sqrt(n_h2)
    b3 = jax.random.uniform(k[6], (n_o,), jnp.float32, -1.0, 1.0) / jnp.sqrt(n_h2)

    y_ref, v1_ref, v2_ref = _reference(x, w1, b1, w2, b2, w3, b3)

    # Strict structural check: f32 MXU operands, tight tolerance.
    y, v1, v2 = derivnet2d(x, w1, b1, w2, b2, w3, b3, mxu_dtype=jnp.float32)
    jax.block_until_ready((y, v1, v2))
    assert y.shape == (nx, n_o) and v1.shape == (nx, n_o) and v2.shape == (nx, n_o)
    assert jnp.allclose(y, y_ref, atol=1e-4, rtol=1e-4)
    assert jnp.allclose(v1, v1_ref, atol=1e-4, rtol=1e-4)
    assert jnp.allclose(v2, v2_ref, atol=1e-4, rtol=1e-4)

    # Perf path (default): bf16 MXU operands, f32 accumulation & VPU/EUP math.
    yb, v1b, v2b = derivnet2d(x, w1, b1, w2, b2, w3, b3)
    jax.block_until_ready((yb, v1b, v2b))
    assert jnp.allclose(yb, y_ref, atol=2e-2, rtol=2e-2)
    assert jnp.allclose(v1b, v1_ref, atol=2e-2, rtol=2e-2)
    assert jnp.allclose(v2b, v2_ref, atol=2e-2, rtol=2e-2)

    print("KERNEL_OK")
</pallas_src>

<mosaic_0001>
module attributes {stable_mosaic.version = 11 : i64} {
  func.func @derivnet2d_kernel(%arg0: i32, %arg1: memref<2x1024xf32, #tpu.memory_space<vmem>>, %arg2: memref<32x2xf32, #tpu.memory_space<vmem>>, %arg3: memref<32x1xf32, #tpu.memory_space<vmem>>, %arg4: memref<32x32xf32, #tpu.memory_space<vmem>>, %arg5: memref<32x1xf32, #tpu.memory_space<vmem>>, %arg6: memref<8x32xf32, #tpu.memory_space<vmem>>, %arg7: memref<8x1xf32, #tpu.memory_space<vmem>>, %arg8: memref<24x1024xf32, #tpu.memory_space<vmem>>, %arg9: memref<32x3072xf32, #tpu.memory_space<vmem>>, %arg10: memref<32x3072xf32, #tpu.memory_space<vmem>>) attributes {dimension_semantics = [#tpu.dimension_semantics<parallel>], iteration_bounds = array<i64: 2>, scalar_prefetch = 0 : i64, scratch_operands = 2 : i64, tpu.core_type = #tpu.core_type<tc>, window_params = [{transform_indices = @transform_0, window_bounds = array<i64: 2, 1024>}, {pipeline_mode = #tpu.pipeline_mode<synchronous>, transform_indices = @transform_1, window_bounds = array<i64: 32, 2>}, {pipeline_mode = #tpu.pipeline_mode<synchronous>, transform_indices = @transform_2, window_bounds = array<i64: 32, 1>}, {pipeline_mode = #tpu.pipeline_mode<synchronous>, transform_indices = @transform_3, window_bounds = array<i64: 32, 32>}, {pipeline_mode = #tpu.pipeline_mode<synchronous>, transform_indices = @transform_4, window_bounds = array<i64: 32, 1>}, {pipeline_mode = #tpu.pipeline_mode<synchronous>, transform_indices = @transform_5, window_bounds = array<i64: 8, 32>}, {pipeline_mode = #tpu.pipeline_mode<synchronous>, transform_indices = @transform_6, window_bounds = array<i64: 8, 1>}, {transform_indices = @transform_7, window_bounds = array<i64: 24, 1024>}]} {
    %c0 = arith.constant 0 : index
    %c0_0 = arith.constant 0 : index
    %0 = vector.load %arg1[%c0, %c0_0] : memref<2x1024xf32, #tpu.memory_space<vmem>>, vector<2x1024xf32>
    %c0_1 = arith.constant 0 : index
    %c0_2 = arith.constant 0 : index
    %1 = vector.load %arg2[%c0_1, %c0_2] : memref<32x2xf32, #tpu.memory_space<vmem>>, vector<32x2xf32>
    %2 = vector.extract_strided_slice %0 {offsets = [0, 0], sizes = [1, 1024], strides = [1, 1]} : vector<2x1024xf32> to vector<1x1024xf32>
    %3 = vector.extract_strided_slice %0 {offsets = [1, 0], sizes = [1, 1024], strides = [1, 1]} : vector<2x1024xf32> to vector<1x1024xf32>
    %4 = vector.extract_strided_slice %1 {offsets = [0, 0], sizes = [32, 1], strides = [1, 1]} : vector<32x2xf32> to vector<32x1xf32>
    %5 = vector.shape_cast %4 : vector<32x1xf32> to vector<32x1xf32>
    %6 = vector.broadcast %5 : vector<32x1xf32> to vector<32x1024xf32>
    %7 = vector.extract_strided_slice %1 {offsets = [0, 1], sizes = [32, 1], strides = [1, 1]} : vector<32x2xf32> to vector<32x1xf32>
    %8 = vector.shape_cast %7 : vector<32x1xf32> to vector<32x1xf32>
    %9 = vector.broadcast %8 : vector<32x1xf32> to vector<32x1024xf32>
    %c0_3 = arith.constant 0 : index
    %c0_4 = arith.constant 0 : index
    %10 = vector.load %arg3[%c0_3, %c0_4] : memref<32x1xf32, #tpu.memory_space<vmem>>, vector<32x1xf32>
    %11 = vector.shape_cast %10 : vector<32x1xf32> to vector<32x1xf32>
    %12 = vector.broadcast %11 : vector<32x1xf32> to vector<32x1024xf32>
    %13 = vector.broadcast %2 : vector<1x1024xf32> to vector<32x1024xf32>
    %14 = arith.mulf %6, %13 : vector<32x1024xf32>
    %15 = vector.broadcast %3 : vector<1x1024xf32> to vector<32x1024xf32>
    %16 = arith.mulf %9, %15 : vector<32x1024xf32>
    %17 = arith.addf %14, %16 : vector<32x1024xf32>
    %18 = arith.addf %17, %12 : vector<32x1024xf32>
    %19 = math.tanh %18 : vector<32x1024xf32>
    %20 = arith.mulf %19, %19 : vector<32x1024xf32>
    %cst = arith.constant 1.000000e+00 : f32
    %21 = vector.broadcast %cst : f32 to vector<32x1024xf32>
    %22 = arith.subf %21, %20 : vector<32x1024xf32>
    %c0_5 = arith.constant 0 : index
    %c0_6 = arith.constant 0 : index
    %23 = vector.load %arg9[%c0_5, %c0_6] : memref<32x3072xf32, #tpu.memory_space<vmem>>, vector<32x1024xf32>
    tpu.vector_store %arg9[%c0_5, %c0_6], %19 {strides = array<i32>} : memref<32x3072xf32, #tpu.memory_space<vmem>>, vector<32x1024xf32>,
    %24 = arith.mulf %22, %6 : vector<32x1024xf32>
    %c0_7 = arith.constant 0 : index
    %c1024 = arith.constant 1024 : index
    %25 = vector.load %arg9[%c0_7, %c1024] : memref<32x3072xf32, #tpu.memory_space<vmem>>, vector<32x1024xf32>
    tpu.vector_store %arg9[%c0_7, %c1024], %24 {strides = array<i32>} : memref<32x3072xf32, #tpu.memory_space<vmem>>, vector<32x1024xf32>,
    %26 = arith.mulf %22, %9 : vector<32x1024xf32>
    %c0_8 = arith.constant 0 : index
    %c2048 = arith.constant 2048 : index
    %27 = vector.load %arg9[%c0_8, %c2048] : memref<32x3072xf32, #tpu.memory_space<vmem>>, vector<32x1024xf32>
    tpu.vector_store %arg9[%c0_8, %c2048], %26 {strides = array<i32>} : memref<32x3072xf32, #tpu.memory_space<vmem>>, vector<32x1024xf32>,
    %c0_9 = arith.constant 0 : index
    %c0_10 = arith.constant 0 : index
    %28 = vector.load %arg4[%c0_9, %c0_10] : memref<32x32xf32, #tpu.memory_space<vmem>>, vector<32x32xf32>
    %c0_11 = arith.constant 0 : index
    %c0_12 = arith.constant 0 : index
    %29 = vector.load %arg9[%c0_11, %c0_12] : memref<32x3072xf32, #tpu.memory_space<vmem>>, vector<32x3072xf32>
    %cst_13 = arith.constant dense<0.000000e+00> : vector<32x3072xf32>
    %30 = tpu.matmul %28, %29, %cst_13 {dimension_numbers = #tpu.dot_dimension_numbers<[1], [0], [0], [1], [0, 0, 1, 1], [], []>} : vector<32x32xf32>, vector<32x3072xf32>, vector<32x3072xf32> -> vector<32x3072xf32>
    %31 = vector.extract_strided_slice %30 {offsets = [0, 0], sizes = [32, 1024], strides = [1, 1]} : vector<32x3072xf32> to vector<32x1024xf32>
    %c0_14 = arith.constant 0 : index
    %c0_15 = arith.constant 0 : index
    %32 = vector.load %arg5[%c0_14, %c0_15] : memref<32x1xf32, #tpu.memory_space<vmem>>, vector<32x1xf32>
    %33 = vector.broadcast %32 : vector<32x1xf32> to vector<32x1024xf32>
    %34 = arith.addf %31, %33 : vector<32x1024xf32>
    %35 = math.tanh %34 : vector<32x1024xf32>
    %36 = arith.mulf %35, %35 : vector<32x1024xf32>
    %cst_16 = arith.constant 1.000000e+00 : f32
    %37 = vector.broadcast %cst_16 : f32 to vector<32x1024xf32>
    %38 = arith.subf %37, %36 : vector<32x1024xf32>
    %c0_17 = arith.constant 0 : index
    %c0_18 = arith.constant 0 : index
    %39 = vector.load %arg10[%c0_17, %c0_18] : memref<32x3072xf32, #tpu.memory_space<vmem>>, vector<32x1024xf32>
    tpu.vector_store %arg10[%c0_17, %c0_18], %35 {strides = array<i32>} : memref<32x3072xf32, #tpu.memory_space<vmem>>, vector<32x1024xf32>,
    %40 = vector.extract_strided_slice %30 {offsets = [0, 1024], sizes = [32, 1024], strides = [1, 1]} : vector<32x3072xf32> to vector<32x1024xf32>
    %41 = arith.mulf %38, %40 : vector<32x1024xf32>
    %c0_19 = arith.constant 0 : index
    %c1024_20 = arith.constant 1024 : index
    %42 = vector.load %arg10[%c0_19, %c1024_20] : memref<32x3072xf32, #tpu.memory_space<vmem>>, vector<32x1024xf32>
    tpu.vector_store %arg10[%c0_19, %c1024_20], %41 {strides = array<i32>} : memref<32x3072xf32, #tpu.memory_space<vmem>>, vector<32x1024xf32>,
    %43 = vector.extract_strided_slice %30 {offsets = [0, 2048], sizes = [32, 1024], strides = [1, 1]} : vector<32x3072xf32> to vector<32x1024xf32>
    %44 = arith.mulf %38, %43 : vector<32x1024xf32>
    %c0_21 = arith.constant 0 : index
    %c2048_22 = arith.constant 2048 : index
    %45 = vector.load %arg10[%c0_21, %c2048_22] : memref<32x3072xf32, #tpu.memory_space<vmem>>, vector<32x1024xf32>
    tpu.vector_store %arg10[%c0_21, %c2048_22], %44 {strides = array<i32>} : memref<32x3072xf32, #tpu.memory_space<vmem>>, vector<32x1024xf32>,
    %c0_23 = arith.constant 0 : index
    %c0_24 = arith.constant 0 : index
    %46 = vector.load %arg6[%c0_23, %c0_24] : memref<8x32xf32, #tpu.memory_space<vmem>>, vector<8x32xf32>
    %c0_25 = arith.constant 0 : index
    %c0_26 = arith.constant 0 : index
    %47 = vector.load %arg10[%c0_25, %c0_26] : memref<32x3072xf32, #tpu.memory_space<vmem>>, vector<32x3072xf32>
    %cst_27 = arith.constant dense<0.000000e+00> : vector<8x3072xf32>
    %48 = tpu.matmul %46, %47, %cst_27 {dimension_numbers = #tpu.dot_dimension_numbers<[1], [0], [0], [1], [0, 0, 1, 1], [], []>} : vector<8x32xf32>, vector<32x3072xf32>, vector<8x3072xf32> -> vector<8x3072xf32>
    %49 = vector.extract_strided_slice %48 {offsets = [0, 0], sizes = [8, 1024], strides = [1, 1]} : vector<8x3072xf32> to vector<8x1024xf32>
    %c0_28 = arith.constant 0 : index
    %c0_29 = arith.constant 0 : index
    %50 = vector.load %arg7[%c0_28, %c0_29] : memref<8x1xf32, #tpu.memory_space<vmem>>, vector<8x1xf32>
    %51 = vector.broadcast %50 : vector<8x1xf32> to vector<8x1024xf32>
    %52 = arith.addf %49, %51 : vector<8x1024xf32>
    %c0_30 = arith.constant 0 : index
    %c0_31 = arith.constant 0 : index
    %53 = vector.load %arg8[%c0_30, %c0_31] : memref<24x1024xf32, #tpu.memory_space<vmem>>, vector<8x1024xf32>
    tpu.vector_store %arg8[%c0_30, %c0_31], %52 {strides = array<i32>} : memref<24x1024xf32, #tpu.memory_space<vmem>>, vector<8x1024xf32>,
    %54 = vector.extract_strided_slice %48 {offsets = [0, 2048], sizes = [8, 1024], strides = [1, 1]} : vector<8x3072xf32> to vector<8x1024xf32>
    %c8 = arith.constant 8 : index
    %c0_32 = arith.constant 0 : index
    %55 = vector.load %arg8[%c8, %c0_32] : memref<24x1024xf32, #tpu.memory_space<vmem>>, vector<8x1024xf32>
    tpu.vector_store %arg8[%c8, %c0_32], %54 {strides = array<i32>} : memref<24x1024xf32, #tpu.memory_space<vmem>>, vector<8x1024xf32>,
    %56 = vector.extract_strided_slice %48 {offsets = [0, 1024], sizes = [8, 1024], strides = [1, 1]} : vector<8x3072xf32> to vector<8x1024xf32>
    %cst_33 = arith.constant 0.000000e+00 : f32
    %57 = vector.broadcast %cst_33 : f32 to vector<8x1024xf32>
    %58 = arith.subf %57, %56 : vector<8x1024xf32>
    %c16 = arith.constant 16 : index
    %c0_34 = arith.constant 0 : index
    %59 = vector.load %arg8[%c16, %c0_34] : memref<24x1024xf32, #tpu.memory_space<vmem>>, vector<8x1024xf32>
    tpu.vector_store %arg8[%c16, %c0_34], %58 {strides = array<i32>} : memref<24x1024xf32, #tpu.memory_space<vmem>>, vector<8x1024xf32>,
    return
  }
  func.func @transform_0(%arg0: i32) -> (i32, i32) {
    %c0_i32 = arith.constant 0 : i32
    %c0_i32_0 = arith.constant 0 : i32
    return %c0_i32, %arg0 : i32, i32
  }
  func.func @transform_1(%arg0: i32) -> (i32, i32) {
    %c0_i32 = arith.constant 0 : i32
    %c0_i32_0 = arith.constant 0 : i32
    %c0_i32_1 = arith.constant 0 : i32
    return %c0_i32, %c0_i32_0 : i32, i32
  }
  func.func @transform_2(%arg0: i32) -> (i32, i32) {
    %c0_i32 = arith.constant 0 : i32
    %c0_i32_0 = arith.constant 0 : i32
    %c0_i32_1 = arith.constant 0 : i32
    return %c0_i32, %c0_i32_0 : i32, i32
  }
  func.func @transform_3(%arg0: i32) -> (i32, i32) {
    %c0_i32 = arith.constant 0 : i32
    %c0_i32_0 = arith.constant 0 : i32
    %c0_i32_1 = arith.constant 0 : i32
    return %c0_i32, %c0_i32_0 : i32, i32
  }
  func.func @transform_4(%arg0: i32) -> (i32, i32) {
    %c0_i32 = arith.constant 0 : i32
    %c0_i32_0 = arith.constant 0 : i32
    %c0_i32_1 = arith.constant 0 : i32
    return %c0_i32, %c0_i32_0 : i32, i32
  }
  func.func @transform_5(%arg0: i32) -> (i32, i32) {
    %c0_i32 = arith.constant 0 : i32
    %c0_i32_0 = arith.constant 0 : i32
    %c0_i32_1 = arith.constant 0 : i32
    return %c0_i32, %c0_i32_0 : i32, i32
  }
  func.func @transform_6(%arg0: i32) -> (i32, i32) {
    %c0_i32 = arith.constant 0 : i32
    %c0_i32_0 = arith.constant 0 : i32
    %c0_i32_1 = arith.constant 0 : i32
    return %c0_i32, %c0_i32_0 : i32, i32
  }
  func.func @transform_7(%arg0: i32) -> (i32, i32) {
    %c0_i32 = arith.constant 0 : i32
    %c0_i32_0 = arith.constant 0 : i32
    return %c0_i32, %arg0 : i32, i32
  }
}

</mosaic_0001>

<llo_original>
// kernel: tpu_custom_call.1
$region0: #{tpu_custom_call.1}
  #allocation0 [shape = 'u32[]', space=smem, size = 0x4, offset = 0x4, fixed_abs, tag = 'smem constant byte address 0x4 - core index']
  #allocation1 [shape = 'u32[144,128]{1,0:T(1,128)}', space=vmem, size = 0x12000, scoped, tag = 'internal scratch']
  #allocation2 [shape = 'f32[32,3072]{1,0:T(8,128)}', space=vmem, size = 0x60000, scoped, tag = 'scratch operand']
  #allocation3 [shape = 'f32[32,3072]{1,0:T(8,128)}', space=vmem, size = 0x60000, scoped, tag = 'scratch operand']
  %s0 = inlined_call_operand.vmem [shape: f32[2,2048], index: 0, kind: input, shape index: {}]
  %s1 = inlined_call_operand.vmem [shape: f32[32,2], index: 1, kind: input, shape index: {}]
  %s2 = inlined_call_operand.vmem [shape: f32[32,1], index: 2, kind: input, shape index: {}]
  %s3 = inlined_call_operand.vmem [shape: f32[32,32], index: 3, kind: input, shape index: {}]
  %s4 = inlined_call_operand.vmem [shape: f32[32,1], index: 4, kind: input, shape index: {}]
  %s5 = inlined_call_operand.vmem [shape: f32[8,32], index: 5, kind: input, shape index: {}]
  %s6 = inlined_call_operand.vmem [shape: f32[8,1], index: 6, kind: input, shape index: {}]
  %s7 = inlined_call_operand.hbm [shape: f32[24,2048], index: 7, kind: output, shape index: {}]
  %s8 = sld [smem:[#allocation0]]
  $region61: #{tpu_custom_call.1} parent=0
    _
  %s10 = ssub.s32 1, %s8
  %s11 = scalar_select 0, %s10, %s8
  $region1: #{tpu_custom_call.1} parent=0
    #allocation4 [shape = 'u8[196608]{0}', space=vmem, size = 0x30000, scoped, tag = 'output window, operand 0']
    #allocation5 [shape = 's32[2]{0}', space=sflag, size = 0x8, scoped, tag = 'scoped memory for tpu_custom_call.1']
    %12 = vsyncpa [#allocation5], 0
    %s13 = scalar_lea.sflag [#allocation5], 1
    %14 = vsyncpa %s13, 0
    loop: start=0, step=1, limit=4
    $region2: #{tpu_custom_call.1} parent=1 // loop_pre_header
      _
    $region3: #{tpu_custom_call.1} parent=1 // loop_header
      %s16 = sphi 0, %s20
      %p17 = scmp.ge.s32.totalorder %s16, 4
      %s26 = sphi 0, %s28
      %s29 = sphi 0, %s26
      %s30 = sphi 0, %s29
      %s46 = sphi 0, %s30
      %s50 = sphi 0, %s50
      %s52 = sphi 0, %s50
      %s53 = sphi 0, %s52
      %s67 = sphi 0, %s53
      %s71 = sphi 0, %s71
      %s73 = sphi 0, %s71
      %s74 = sphi 0, %s73
      %s88 = sphi 0, %s74
      %s92 = sphi 0, %s92
      %s94 = sphi 0, %s92
      %s95 = sphi 0, %s94
      %s109 = sphi 0, %s95
      %s113 = sphi 0, %s113
      %s115 = sphi 0, %s113
      %s116 = sphi 0, %s115
      %s130 = sphi 0, %s116
      %s134 = sphi 0, %s134
      %s136 = sphi 0, %s134
      %s137 = sphi 0, %s136
      %s151 = sphi 0, %s137
      %s155 = sphi 0, %s155
      %s157 = sphi 0, %s155
      %s158 = sphi 0, %s157
      %s172 = sphi 0, %s158
      %s178 = sphi 0, %s180
      %s181 = sphi 0, %s178
      %s182 = sphi 0, %s181
      %s198 = sphi 0, %s182
    $region4: #{tpu_custom_call.1} parent=1 // loop_header_branch
      %19 = sbr.rel (%p17) target = $region8
    $region5: #{tpu_custom_call.1} parent=1 // loop_body
      %s21 = ssub.s32 %s16, 1
      %s22 = ssub.s32 %s16, 2
      %s23 = sadd.s32 %s16, 1
      %s24 = ssub.s32 %s16, %s23
      %p25 = scmp.eq.s32.totalorder %s24, 0
      %s27 = sadd.s32 %s26, 1
      %s28 = scalar_select %p25, %s26, %s27
      %p31 = pneg %p25
      %p32 = scmp.eq.s32.totalorder %s16, 1
      %p33 = por %p31, %p32
      %p34 = scmp.ne.s32.totalorder %s26, %s29
      %p35 = scmp.eq.s32.totalorder %s16, 0
      %p36 = por %p34, %p35
      %p37 = scmp.ne.s32.totalorder %s26, %s29
      %p38 = scmp.eq.s32.totalorder %s21, 1
      %p39 = por %p37, %p38
      %p40 = scmp.ne.s32.totalorder %s29, %s30
      %p41 = scmp.eq.s32.totalorder %s21, 0
      %p42 = por %p40, %p41
      %p43 = scmp.ne.s32.totalorder %s29, %s30
      %p44 = scmp.eq.s32.totalorder %s22, 1
      %p45 = por %p43, %p44
      %p47 = scmp.ne.s32.totalorder %s30, %s46
      %p48 = scmp.eq.s32.totalorder %s22, 0
      %p49 = por %p47, %p48
      %s51 = sadd.s32 %s50, 1
      %p54 = scmp.eq.s32.totalorder %s16, 1
      %p55 = scmp.ne.s32.totalorder %s50, %s52
      %p56 = scmp.eq.s32.totalorder %s16, 0
      %p57 = por %p55, %p56
      %p58 = scmp.ne.s32.totalorder %s50, %s52
      %p59 = scmp.eq.s32.totalorder %s21, 1
      %p60 = por %p58, %p59
      %p61 = scmp.ne.s32.totalorder %s52, %s53
      %p62 = scmp.eq.s32.totalorder %s21, 0
      %p63 = por %p61, %p62
      %p64 = scmp.ne.s32.totalorder %s52, %s53
      %p65 = scmp.eq.s32.totalorder %s22, 1
      %p66 = por %p64, %p65
      %p68 = scmp.ne.s32.totalorder %s53, %s67
      %p69 = scmp.eq.s32.totalorder %s22, 0
      %p70 = por %p68, %p69
      %s72 = sadd.s32 %s71, 1
      %p75 = scmp.eq.s32.totalorder %s16, 1
      %p76 = scmp.ne.s32.totalorder %s71, %s73
      %p77 = scmp.eq.s32.totalorder %s16, 0
      %p78 = por %p76, %p77
      %p79 = scmp.ne.s32.totalorder %s71, %s73
      %p80 = scmp.eq.s32.totalorder %s21, 1
      %p81 = por %p79, %p80
      %p82 = scmp.ne.s32.totalorder %s73, %s74
      %p83 = scmp.eq.s32.totalorder %s21, 0
      %p84 = por %p82, %p83
      %p85 = scmp.ne.s32.totalorder %s73, %s74
      %p86 = scmp.eq.s32.totalorder %s22, 1
      %p87 = por %p85, %p86
      %p89 = scmp.ne.s32.totalorder %s74, %s88
      %p90 = scmp.eq.s32.totalorder %s22, 0
      %p91 = por %p89, %p90
      %s93 = sadd.s32 %s92, 1
      %p96 = scmp.eq.s32.totalorder %s16, 1
      %p97 = scmp.ne.s32.totalorder %s92, %s94
      %p98 = scmp.eq.s32.totalorder %s16, 0
      %p99 = por %p97, %p98
      %p100 = scmp.ne.s32.totalorder %s92, %s94
      %p101 = scmp.eq.s32.totalorder %s21, 1
      %p102 = por %p100, %p101
      %p103 = scmp.ne.s32.totalorder %s94, %s95
      %p104 = scmp.eq.s32.totalorder %s21, 0
      %p105 = por %p103, %p104
      %p106 = scmp.ne.s32.totalorder %s94, %s95
      %p107 = scmp.eq.s32.totalorder %s22, 1
      %p108 = por %p106, %p107
      %p110 = scmp.ne.s32.totalorder %s95, %s109
      %p111 = scmp.eq.s32.totalorder %s22, 0
      %p112 = por %p110, %p111
      %s114 = sadd.s32 %s113, 1
      %p117 = scmp.eq.s32.totalorder %s16, 1
      %p118 = scmp.ne.s32.totalorder %s113, %s115
      %p119 = scmp.eq.s32.totalorder %s16, 0
      %p120 = por %p118, %p119
      %p121 = scmp.ne.s32.totalorder %s113, %s115
      %p122 = scmp.eq.s32.totalorder %s21, 1
      %p123 = por %p121, %p122
      %p124 = scmp.ne.s32.totalorder %s115, %s116
      %p125 = scmp.eq.s32.totalorder %s21, 0
      %p126 = por %p124, %p125
      %p127 = scmp.ne.s32.totalorder %s115, %s116
      %p128 = scmp.eq.s32.totalorder %s22, 1
      %p129 = por %p127, %p128
      %p131 = scmp.ne.s32.totalorder %s116, %s130
      %p132 = scmp.eq.s32.totalorder %s22, 0
      %p133 = por %p131, %p132
      %s135 = sadd.s32 %s134, 1
      %p138 = scmp.eq.s32.totalorder %s16, 1
      %p139 = scmp.ne.s32.totalorder %s134, %s136
      %p140 = scmp.eq.s32.totalorder %s16, 0
      %p141 = por %p139, %p140
      %p142 = scmp.ne.s32.totalorder %s134, %s136
      %p143 = scmp.eq.s32.totalorder %s21, 1
      %p144 = por %p142, %p143
      %p145 = scmp.ne.s32.totalorder %s136, %s137
      %p146 = scmp.eq.s32.totalorder %s21, 0
      %p147 = por %p145, %p146
      %p148 = scmp.ne.s32.totalorder %s136, %s137
      %p149 = scmp.eq.s32.totalorder %s22, 1
      %p150 = por %p148, %p149
      %p152 = scmp.ne.s32.totalorder %s137, %s151
      %p153 = scmp.eq.s32.totalorder %s22, 0
      %p154 = por %p152, %p153
      %s156 = sadd.s32 %s155, 1
      %p159 = scmp.eq.s32.totalorder %s16, 1
      %p160 = scmp.ne.s32.totalorder %s155, %s157
      %p161 = scmp.eq.s32.totalorder %s16, 0
      %p162 = por %p160, %p161
      %p163 = scmp.ne.s32.totalorder %s155, %s157
      %p164 = scmp.eq.s32.totalorder %s21, 1
      %p165 = por %p163, %p164
      %p166 = scmp.ne.s32.totalorder %s157, %s158
      %p167 = scmp.eq.s32.totalorder %s21, 0
      %p168 = por %p166, %p167
      %p169 = scmp.ne.s32.totalorder %s157, %s158
      %p170 = scmp.eq.s32.totalorder %s22, 1
      %p171 = por %p169, %p170
      %p173 = scmp.ne.s32.totalorder %s158, %s172
      %p174 = scmp.eq.s32.totalorder %s22, 0
      %p175 = por %p173, %p174
      %s176 = ssub.s32 %s16, %s23
      %p177 = scmp.eq.s32.totalorder %s176, 0
      %s179 = sadd.s32 %s178, 1
      %s180 = scalar_select %p177, %s178, %s179
      %p183 = pneg %p177
      %p184 = scmp.eq.s32.totalorder %s16, 1
      %p185 = por %p183, %p184
      %p186 = scmp.ne.s32.totalorder %s178, %s181
      %p187 = scmp.eq.s32.totalorder %s16, 0
      %p188 = por %p186, %p187
      %p189 = scmp.ne.s32.totalorder %s178, %s181
      %p190 = scmp.eq.s32.totalorder %s21, 1
      %p191 = por %p189, %p190
      %p192 = scmp.ne.s32.totalorder %s181, %s182
      %p193 = scmp.eq.s32.totalorder %s21, 0
      %p194 = por %p192, %p193
      %p195 = scmp.ne.s32.totalorder %s181, %s182
      %p196 = scmp.eq.s32.totalorder %s22, 1
      %p197 = por %p195, %p196
      %p199 = scmp.ne.s32.totalorder %s182, %s198
      %p200 = scmp.eq.s32.totalorder %s22, 0
      %p201 = por %p199, %p200
      %p202 = scmp.le.s32.totalorder 1, %s16
      %p203 = scmp.lt.s32.totalorder %s16, 3
      %p204 = pnand %p202, %p203
      %p205 = pneg %p204
      // Predicated region
      $region9: #{tpu_custom_call.1} parent=5 // pred_check
        _
      $region10: #{tpu_custom_call.1} parent=5 // pred_check_branch
        %207 = sbr.rel (%p204) target = $region12
      $region11: #{tpu_custom_call.1} parent=5 // pred_region
        %s208 = ssub.s32 %s16, 1
        // Predicated region
        $region13: #{tpu_custom_call.1} parent=11 // pred_check
          %p209 = pneg %p63
        $region14: #{tpu_custom_call.1} parent=11 // pred_check_branch
          %211 = sbr.rel (%p209) target = $region16
        $region15: #{tpu_custom_call.1} parent=11 // pred_region
          _
        $region16: #{tpu_custom_call.1} parent=11 // pred_fallthru
          _
        // Predicated region
        $region17: #{tpu_custom_call.1} parent=11 // pred_check
          %p212 = pneg %p84
        $region18: #{tpu_custom_call.1} parent=11 // pred_check_branch
          %214 = sbr.rel (%p212) target = $region20
        $region19: #{tpu_custom_call.1} parent=11 // pred_region
          _
        $region20: #{tpu_custom_call.1} parent=11 // pred_fallthru
          _
        // Predicated region
        $region21: #{tpu_custom_call.1} parent=11 // pred_check
          %p215 = pneg %p105
        $region22: #{tpu_custom_call.1} parent=11 // pred_check_branch
          %217 = sbr.rel (%p215) target = $region24
        $region23: #{tpu_custom_call.1} parent=11 // pred_region
          _
        $region24: #{tpu_custom_call.1} parent=11 // pred_fallthru
          _
        // Predicated region
        $region25: #{tpu_custom_call.1} parent=11 // pred_check
          %p218 = pneg %p126
        $region26: #{tpu_custom_call.1} parent=11 // pred_check_branch
          %220 = sbr.rel (%p218) target = $region28
        $region27: #{tpu_custom_call.1} parent=11 // pred_region
          _
        $region28: #{tpu_custom_call.1} parent=11 // pred_fallthru
          _
        // Predicated region
        $region29: #{tpu_custom_call.1} parent=11 // pred_check
          %p221 = pneg %p147
        $region30: #{tpu_custom_call.1} parent=11 // pred_check_branch
          %223 = sbr.rel (%p221) target = $region32
        $region31: #{tpu_custom_call.1} parent=11 // pred_region
          _
        $region32: #{tpu_custom_call.1} parent=11 // pred_fallthru
          _
        // Predicated region
        $region33: #{tpu_custom_call.1} parent=11 // pred_check
          %p224 = pneg %p168
        $region34: #{tpu_custom_call.1} parent=11 // pred_check_branch
          %226 = sbr.rel (%p224) target = $region36
        $region35: #{tpu_custom_call.1} parent=11 // pred_region
          _
        $region36: #{tpu_custom_call.1} parent=11 // pred_fallthru
          _
      $region12: #{tpu_custom_call.1} parent=5 // pred_fallthru
        _
      %p227 = scmp.lt.s32.totalorder %s16, 2
      // Predicated region
      $region37: #{tpu_custom_call.1} parent=5 // pred_check
        %p228 = pneg %p227
      $region38: #{tpu_custom_call.1} parent=5 // pred_check_branch
        %230 = sbr.rel (%p228) target = $region40
      $region39: #{tpu_custom_call.1} parent=5 // pred_region
        // Predicated region
        $region41: #{tpu_custom_call.1} parent=39 // pred_check
          %p231 = pneg %p36
        $region42: #{tpu_custom_call.1} parent=39 // pred_check_branch
          %233 = sbr.rel (%p231) target = $region44
        $region43: #{tpu_custom_call.1} parent=39 // pred_region
          %s234 = smul.u32 8, %s16
          %p235 = scmp.lt.s32.totalorder %s234, 15
          %s236 = scalar_select %p235, %s234, 15
          %s237 = smul.addr %s236, 2
          %s238 = scalar_lea.vmem %s0, %s237
          %s239 = smul.u32 8, %s16
        $region44: #{tpu_custom_call.1} parent=39 // pred_fallthru
          _
      $region40: #{tpu_custom_call.1} parent=5 // pred_fallthru
        _
      %p240 = scmp.le.s32.totalorder 1, %s16
      %p241 = scmp.lt.s32.totalorder %s16, 3
      %p242 = pnand %p240, %p241
      %p243 = pneg %p242
      // Predicated region
      $region45: #{tpu_custom_call.1} parent=5 // pred_check
        _
      $region46: #{tpu_custom_call.1} parent=5 // pred_check_branch
        %245 = sbr.rel (%p242) target = $region48
      $region47: #{tpu_custom_call.1} parent=5 // pred_region
        %s246 = ssub.s32 %s16, 1
        %s247 = smul.u32 8, %s21
        %p248 = scmp.lt.s32.totalorder %s247, 15
        %s249 = scalar_select %p248, %s247, 15
        %s250 = smul.addr %s249, 2
        %s251 = scalar_lea.vmem %s0, %s250
        %p252 = pneg %p42
        %p253 = pneg %p39
        %p254 = pneg %p63
        %p255 = pneg %p60
        %p256 = pneg %p84
        %p257 = pneg %p81
        %p258 = pneg %p105
        %p259 = pneg %p102
        %p260 = pneg %p126
        %p261 = pneg %p123
        %p262 = pneg %p147
        %p263 = pneg %p144
        %p264 = pneg %p168
        %p265 = pneg %p165
        %p266 = pneg %p194
        %p267 = pneg %p191
        %s268 = sand.u32 %s181, 1
        %s269 = scalar_lea.sflag [#allocation5], %s268
        %s270 = sand.u32 %s181, 1
        %s271 = smul.addr %s270, 192
        %s272 = scalar_lea.vmem [#allocation4], %s271
        %s273 = smul.u32 8, %s21
        %p274 = scmp.lt.s32.totalorder %s273, 15
        %s275 = scalar_select %p274, %s273, 15
        %s276 = smul.addr %s275, 2
        %s277 = scalar_lea.vmem %s0, %s276
        %s278 = smul.u32 8, %s21
        %s279 = smul.u32 8, %s21
        %v280 = vld [vmem:[%s277] sm:$0xff]
        %v281 = vld [vmem:[%s277 + $0x8] sm:$0xff]
        %v282 = vld [vmem:[%s1] sm:$0xff]
        %v283 = vld [vmem:[%s1 + $0x8] sm:$0xff]
        %v284 = vld [vmem:[%s1 + $0x10] sm:$0xff]
        %v285 = vld [vmem:[%s1 + $0x18] sm:$0xff]
        %287 = vset.pattern.permute.xlu0 0
        %288 = vperm.xlu0 %287, %v282
        %v289 = vpop.permute.xlu0 %288
        %292 = vset.pattern.permute.xlu0 0
        %293 = vperm.xlu0 %292, %v283
        %v294 = vpop.permute.xlu0 %293
        %297 = vset.pattern.permute.xlu0 0
        %298 = vperm.xlu0 %297, %v284
        %v299 = vpop.permute.xlu0 %298
        %302 = vset.pattern.permute.xlu0 0
        %303 = vperm.xlu0 %302, %v285
        %v304 = vpop.permute.xlu0 %303
        %306 = vset.pattern.permute.xlu0 1
        %307 = vperm.xlu0 %306, %v282
        %v308 = vpop.permute.xlu0 %307
        %310 = vset.pattern.permute.xlu0 1
        %311 = vperm.xlu0 %310, %v283
        %v312 = vpop.permute.xlu0 %311
        %314 = vset.pattern.permute.xlu0 1
        %315 = vperm.xlu0 %314, %v284
        %v316 = vpop.permute.xlu0 %315
        %318 = vset.pattern.permute.xlu0 1
        %319 = vperm.xlu0 %318, %v285
        %v320 = vpop.permute.xlu0 %319
        %v322 = vld [vmem:[%s2] sm:$0xff]
        %v323 = vld [vmem:[%s2 + $0x8] sm:$0xff]
        %v324 = vld [vmem:[%s2 + $0x10] sm:$0xff]
        %v325 = vld [vmem:[%s2 + $0x18] sm:$0xff]
        %327 = vset.pattern.permute.xlu0 0
        %328 = vperm.xlu0 %327, %v322
        %v329 = vpop.permute.xlu0 %328
        %332 = vset.pattern.permute.xlu0 0
        %333 = vperm.xlu0 %332, %v323
        %v334 = vpop.permute.xlu0 %333
        %337 = vset.pattern.permute.xlu0 0
        %338 = vperm.xlu0 %337, %v324
        %v339 = vpop.permute.xlu0 %338
        %342 = vset.pattern.permute.xlu0 0
        %343 = vperm.xlu0 %342, %v325
        %v344 = vpop.permute.xlu0 %343
        %v348 = vlaneseq
        %v349 = vshrl.u32 %v348, 7
        %v350 = vsub.s32 0, %v349
        %v351 = vrot.slane %v280, %v350
        %v352 = vlaneseq
        %v353 = vshrl.u32 %v352, 7
        %v354 = vsub.s32 2, %v353
        %v355 = vrot.slane %v280, %v354
        %v356 = vlaneseq
        %v357 = vshrl.u32 %v356, 7
        %v358 = vsub.s32 4, %v357
        %v359 = vrot.slane %v280, %v358
        %v360 = vlaneseq
        %v361 = vshrl.u32 %v360, 7
        %v362 = vsub.s32 6, %v361
        %v363 = vrot.slane %v280, %v362
        %v364 = vlaneseq
        %v365 = vshrl.u32 %v364, 7
        %v366 = vsub.s32 0, %v365
        %v367 = vrot.slane %v281, %v366
        %v368 = vlaneseq
        %v369 = vshrl.u32 %v368, 7
        %v370 = vsub.s32 2, %v369
        %v371 = vrot.slane %v281, %v370
        %v372 = vlaneseq
        %v373 = vshrl.u32 %v372, 7
        %v374 = vsub.s32 4, %v373
        %v375 = vrot.slane %v281, %v374
        %v376 = vlaneseq
        %v377 = vshrl.u32 %v376, 7
        %v378 = vsub.s32 6, %v377
        %v379 = vrot.slane %v281, %v378
        %v388 = vlaneseq
        %v389 = vshrl.u32 %v388, 7
        %v390 = vsub.s32 0, %v389
        %v391 = vrot.slane %v351, %v390
        %v392 = vlaneseq
        %v393 = vshrl.u32 %v392, 7
        %v394 = vsub.s32 0, %v393
        %v395 = vrot.slane %v355, %v394
        %v396 = vlaneseq
        %v397 = vshrl.u32 %v396, 7
        %v398 = vsub.s32 0, %v397
        %v399 = vrot.slane %v359, %v398
        %v400 = vlaneseq
        %v401 = vshrl.u32 %v400, 7
        %v402 = vsub.s32 0, %v401
        %v403 = vrot.slane %v363, %v402
        %v404 = vlaneseq
        %v405 = vshrl.u32 %v404, 7
        %v406 = vsub.s32 0, %v405
        %v407 = vrot.slane %v367, %v406
        %v408 = vlaneseq
        %v409 = vshrl.u32 %v408, 7
        %v410 = vsub.s32 0, %v409
        %v411 = vrot.slane %v371, %v410
        %v412 = vlaneseq
        %v413 = vshrl.u32 %v412, 7
        %v414 = vsub.s32 0, %v413
        %v415 = vrot.slane %v375, %v414
        %v416 = vlaneseq
        %v417 = vshrl.u32 %v416, 7
        %v418 = vsub.s32 0, %v417
        %v419 = vrot.slane %v379, %v418
        %v420 = vmul.f32 %v289, %v391
        %v421 = vmul.f32 %v289, %v395
        %v422 = vmul.f32 %v289, %v399
        %v423 = vmul.f32 %v289, %v403
        %v424 = vmul.f32 %v289, %v407
        %v425 = vmul.f32 %v289, %v411
        %v426 = vmul.f32 %v289, %v415
        %v427 = vmul.f32 %v289, %v419
        %v428 = vmul.f32 %v294, %v391
        %v429 = vmul.f32 %v294, %v395
        %v430 = vmul.f32 %v294, %v399
        %v431 = vmul.f32 %v294, %v403
        %v432 = vmul.f32 %v294, %v407
        %v433 = vmul.f32 %v294, %v411
        %v434 = vmul.f32 %v294, %v415
        %v435 = vmul.f32 %v294, %v419
        %v436 = vmul.f32 %v299, %v391
        %v437 = vmul.f32 %v299, %v395
        %v438 = vmul.f32 %v299, %v399
        %v439 = vmul.f32 %v299, %v403
        %v440 = vmul.f32 %v299, %v407
        %v441 = vmul.f32 %v299, %v411
        %v442 = vmul.f32 %v299, %v415
        %v443 = vmul.f32 %v299, %v419
        %v444 = vmul.f32 %v304, %v391
        %v445 = vmul.f32 %v304, %v395
        %v446 = vmul.f32 %v304, %v399
        %v447 = vmul.f32 %v304, %v403
        %v448 = vmul.f32 %v304, %v407
        %v449 = vmul.f32 %v304, %v411
        %v450 = vmul.f32 %v304, %v415
        %v451 = vmul.f32 %v304, %v419
        %v452 = vlaneseq
        %v453 = vshrl.u32 %v452, 7
        %v454 = vsub.s32 1, %v453
        %v455 = vrot.slane %v280, %v454
        %v456 = vlaneseq
        %v457 = vshrl.u32 %v456, 7
        %v458 = vsub.s32 3, %v457
        %v459 = vrot.slane %v280, %v458
        %v460 = vlaneseq
        %v461 = vshrl.u32 %v460, 7
        %v462 = vsub.s32 5, %v461
        %v463 = vrot.slane %v280, %v462
        %v464 = vlaneseq
        %v465 = vshrl.u32 %v464, 7
        %v466 = vsub.s32 7, %v465
        %v467 = vrot.slane %v280, %v466
        %v468 = vlaneseq
        %v469 = vshrl.u32 %v468, 7
        %v470 = vsub.s32 1, %v469
        %v471 = vrot.slane %v281, %v470
        %v472 = vlaneseq
        %v473 = vshrl.u32 %v472, 7
        %v474 = vsub.s32 3, %v473
        %v475 = vrot.slane %v281, %v474
        %v476 = vlaneseq
        %v477 = vshrl.u32 %v476, 7
        %v478 = vsub.s32 5, %v477
        %v479 = vrot.slane %v281, %v478
        %v480 = vlaneseq
        %v481 = vshrl.u32 %v480, 7
        %v482 = vsub.s32 7, %v481
        %v483 = vrot.slane %v281, %v482
        %v492 = vlaneseq
        %v493 = vshrl.u32 %v492, 7
        %v494 = vsub.s32 1, %v493
        %v495 = vrot.slane %v455, %v494
        %v496 = vlaneseq
        %v497 = vshrl.u32 %v496, 7
        %v498 = vsub.s32 1, %v497
        %v499 = vrot.slane %v459, %v498
        %v500 = vlaneseq
        %v501 = vshrl.u32 %v500, 7
        %v502 = vsub.s32 1, %v501
        %v503 = vrot.slane %v463, %v502
        %v504 = vlaneseq
        %v505 = vshrl.u32 %v504, 7
        %v506 = vsub.s32 1, %v505
        %v507 = vrot.slane %v467, %v506
        %v508 = vlaneseq
        %v509 = vshrl.u32 %v508, 7
        %v510 = vsub.s32 1, %v509
        %v511 = vrot.slane %v471, %v510
        %v512 = vlaneseq
        %v513 = vshrl.u32 %v512, 7
        %v514 = vsub.s32 1, %v513
        %v515 = vrot.slane %v475, %v514
        %v516 = vlaneseq
        %v517 = vshrl.u32 %v516, 7
        %v518 = vsub.s32 1, %v517
        %v519 = vrot.slane %v479, %v518
        %v520 = vlaneseq
        %v521 = vshrl.u32 %v520, 7
        %v522 = vsub.s32 1, %v521
        %v523 = vrot.slane %v483, %v522
        %v524 = vmul.f32 %v308, %v495
        %v525 = vmul.f32 %v308, %v499
        %v526 = vmul.f32 %v308, %v503
        %v527 = vmul.f32 %v308, %v507
        %v528 = vmul.f32 %v308, %v511
        %v529 = vmul.f32 %v308, %v515
        %v530 = vmul.f32 %v308, %v519
        %v531 = vmul.f32 %v308, %v523
        %v532 = vmul.f32 %v312, %v495
        %v533 = vmul.f32 %v312, %v499
        %v534 = vmul.f32 %v312, %v503
        %v535 = vmul.f32 %v312, %v507
        %v536 = vmul.f32 %v312, %v511
        %v537 = vmul.f32 %v312, %v515
        %v538 = vmul.f32 %v312, %v519
        %v539 = vmul.f32 %v312, %v523
        %v540 = vmul.f32 %v316, %v495
        %v541 = vmul.f32 %v316, %v499
        %v542 = vmul.f32 %v316, %v503
        %v543 = vmul.f32 %v316, %v507
        %v544 = vmul.f32 %v316, %v511
        %v545 = vmul.f32 %v316, %v515
        %v546 = vmul.f32 %v316, %v519
        %v547 = vmul.f32 %v316, %v523
        %v548 = vmul.f32 %v320, %v495
        %v549 = vmul.f32 %v320, %v499
        %v550 = vmul.f32 %v320, %v503
        %v551 = vmul.f32 %v320, %v507
        %v552 = vmul.f32 %v320, %v511
        %v553 = vmul.f32 %v320, %v515
        %v554 = vmul.f32 %v320, %v519
        %v555 = vmul.f32 %v320, %v523
        %v556 = vadd.f32 %v420, %v524
        %v557 = vadd.f32 %v421, %v525
        %v558 = vadd.f32 %v422, %v526
        %v559 = vadd.f32 %v423, %v527
        %v560 = vadd.f32 %v424, %v528
        %v561 = vadd.f32 %v425, %v529
        %v562 = vadd.f32 %v426, %v530
        %v563 = vadd.f32 %v427, %v531
        %v564 = vadd.f32 %v428, %v532
        %v565 = vadd.f32 %v429, %v533
        %v566 = vadd.f32 %v430, %v534
        %v567 = vadd.f32 %v431, %v535
        %v568 = vadd.f32 %v432, %v536
        %v569 = vadd.f32 %v433, %v537
        %v570 = vadd.f32 %v434, %v538
        %v571 = vadd.f32 %v435, %v539
        %v572 = vadd.f32 %v436, %v540
        %v573 = vadd.f32 %v437, %v541
        %v574 = vadd.f32 %v438, %v542
        %v575 = vadd.f32 %v439, %v543
        %v576 = vadd.f32 %v440, %v544
        %v577 = vadd.f32 %v441, %v545
        %v578 = vadd.f32 %v442, %v546
        %v579 = vadd.f32 %v443, %v547
        %v580 = vadd.f32 %v444, %v548
        %v581 = vadd.f32 %v445, %v549
        %v582 = vadd.f32 %v446, %v550
        %v583 = vadd.f32 %v447, %v551
        %v584 = vadd.f32 %v448, %v552
        %v585 = vadd.f32 %v449, %v553
        %v586 = vadd.f32 %v450, %v554
        %v587 = vadd.f32 %v451, %v555
        %v588 = vadd.f32 %v556, %v329
        %v589 = vadd.f32 %v557, %v329
        %v590 = vadd.f32 %v558, %v329
        %v591 = vadd.f32 %v559, %v329
        %v592 = vadd.f32 %v560, %v329
        %v593 = vadd.f32 %v561, %v329
        %v594 = vadd.f32 %v562, %v329
        %v595 = vadd.f32 %v563, %v329
        %v596 = vadd.f32 %v564, %v334
        %v597 = vadd.f32 %v565, %v334
        %v598 = vadd.f32 %v566, %v334
        %v599 = vadd.f32 %v567, %v334
        %v600 = vadd.f32 %v568, %v334
        %v601 = vadd.f32 %v569, %v334
        %v602 = vadd.f32 %v570, %v334
        %v603 = vadd.f32 %v571, %v334
        %v604 = vadd.f32 %v572, %v339
        %v605 = vadd.f32 %v573, %v339
        %v606 = vadd.f32 %v574, %v339
        %v607 = vadd.f32 %v575, %v339
        %v608 = vadd.f32 %v576, %v339
        %v609 = vadd.f32 %v577, %v339
        %v610 = vadd.f32 %v578, %v339
        %v611 = vadd.f32 %v579, %v339
        %v612 = vadd.f32 %v580, %v344
        %v613 = vadd.f32 %v581, %v344
        %v614 = vadd.f32 %v582, %v344
        %v615 = vadd.f32 %v583, %v344
        %v616 = vadd.f32 %v584, %v344
        %v617 = vadd.f32 %v585, %v344
        %v618 = vadd.f32 %v586, %v344
        %v619 = vadd.f32 %v587, %v344
        %v620 = vtanh.pop %v588
        %v621 = vtanh.pop %v589
        %v622 = vtanh.pop %v590
        %v623 = vtanh.pop %v591
        %v624 = vtanh.pop %v592
        %v625 = vtanh.pop %v593
        %v626 = vtanh.pop %v594
        %v627 = vtanh.pop %v595
        %v628 = vtanh.pop %v596
        %v629 = vtanh.pop %v597
        %v630 = vtanh.pop %v598
        %v631 = vtanh.pop %v599
        %v632 = vtanh.pop %v600
        %v633 = vtanh.pop %v601
        %v634 = vtanh.pop %v602
        %v635 = vtanh.pop %v603
        %v636 = vtanh.pop %v604
        %v637 = vtanh.pop %v605
        %v638 = vtanh.pop %v606
        %v639 = vtanh.pop %v607
        %v640 = vtanh.pop %v608
        %v641 = vtanh.pop %v609
        %v642 = vtanh.pop %v610
        %v643 = vtanh.pop %v611
        %v644 = vtanh.pop %v612
        %v645 = vtanh.pop %v613
        %v646 = vtanh.pop %v614
        %v647 = vtanh.pop %v615
        %v648 = vtanh.pop %v616
        %v649 = vtanh.pop %v617
        %v650 = vtanh.pop %v618
        %v651 = vtanh.pop %v619
        %v652 = vmul.f32 %v620, %v620
        %v653 = vmul.f32 %v621, %v621
        %v654 = vmul.f32 %v622, %v622
        %v655 = vmul.f32 %v623, %v623
        %v656 = vmul.f32 %v624, %v624
        %v657 = vmul.f32 %v625, %v625
        %v658 = vmul.f32 %v626, %v626
        %v659 = vmul.f32 %v627, %v627
        %v660 = vmul.f32 %v628, %v628
        %v661 = vmul.f32 %v629, %v629
        %v662 = vmul.f32 %v630, %v630
        %v663 = vmul.f32 %v631, %v631
        %v664 = vmul.f32 %v632, %v632
        %v665 = vmul.f32 %v633, %v633
        %v666 = vmul.f32 %v634, %v634
        %v667 = vmul.f32 %v635, %v635
        %v668 = vmul.f32 %v636, %v636
        %v669 = vmul.f32 %v637, %v637
        %v670 = vmul.f32 %v638, %v638
        %v671 = vmul.f32 %v639, %v639
        %v672 = vmul.f32 %v640, %v640
        %v673 = vmul.f32 %v641, %v641
        %v674 = vmul.f32 %v642, %v642
        %v675 = vmul.f32 %v643, %v643
        %v676 = vmul.f32 %v644, %v644
        %v677 = vmul.f32 %v645, %v645
        %v678 = vmul.f32 %v646, %v646
        %v679 = vmul.f32 %v647, %v647
        %v680 = vmul.f32 %v648, %v648
        %v681 = vmul.f32 %v649, %v649
        %v682 = vmul.f32 %v650, %v650
        %v683 = vmul.f32 %v651, %v651
        %v684 = vsub.f32 1.0, %v652
        %v685 = vsub.f32 1.0, %v653
        %v686 = vsub.f32 1.0, %v654
        %v687 = vsub.f32 1.0, %v655
        %v688 = vsub.f32 1.0, %v656
        %v689 = vsub.f32 1.0, %v657
        %v690 = vsub.f32 1.0, %v658
        %v691 = vsub.f32 1.0, %v659
        %v692 = vsub.f32 1.0, %v660
        %v693 = vsub.f32 1.0, %v661
        %v694 = vsub.f32 1.0, %v662
        %v695 = vsub.f32 1.0, %v663
        %v696 = vsub.f32 1.0, %v664
        %v697 = vsub.f32 1.0, %v665
        %v698 = vsub.f32 1.0, %v666
        %v699 = vsub.f32 1.0, %v667
        %v700 = vsub.f32 1.0, %v668
        %v701 = vsub.f32 1.0, %v669
        %v702 = vsub.f32 1.0, %v670
        %v703 = vsub.f32 1.0, %v671
        %v704 = vsub.f32 1.0, %v672
        %v705 = vsub.f32 1.0, %v673
        %v706 = vsub.f32 1.0, %v674
        %v707 = vsub.f32 1.0, %v675
        %v708 = vsub.f32 1.0, %v676
        %v709 = vsub.f32 1.0, %v677
        %v710 = vsub.f32 1.0, %v678
        %v711 = vsub.f32 1.0, %v679
        %v712 = vsub.f32 1.0, %v680
        %v713 = vsub.f32 1.0, %v681
        %v714 = vsub.f32 1.0, %v682
        %v715 = vsub.f32 1.0, %v683
        %716 = vst [vmem:[#allocation2] sm:$0xff] %v620
        %717 = vst [vmem:[#allocation2 + $0x8] sm:$0xff] %v621
        %718 = vst [vmem:[#allocation2 + $0x10] sm:$0xff] %v622
        %719 = vst [vmem:[#allocation2 + $0x18] sm:$0xff] %v623
        %720 = vst [vmem:[#allocation2 + $0x20] sm:$0xff] %v624
        %721 = vst [vmem:[#allocation2 + $0x28] sm:$0xff] %v625
        %722 = vst [vmem:[#allocation2 + $0x30] sm:$0xff] %v626
        %723 = vst [vmem:[#allocation2 + $0x38] sm:$0xff] %v627
        %724 = vst [vmem:[#allocation2 + $0xc0] sm:$0xff] %v628
        %725 = vst [vmem:[#allocation2 + $0xc8] sm:$0xff] %v629
        %726 = vst [vmem:[#allocation2 + $0xd0] sm:$0xff] %v630
        %727 = vst [vmem:[#allocation2 + $0xd8] sm:$0xff] %v631
        %728 = vst [vmem:[#allocation2 + $0xe0] sm:$0xff] %v632
        %729 = vst [vmem:[#allocation2 + $0xe8] sm:$0xff] %v633
        %730 = vst [vmem:[#allocation2 + $0xf0] sm:$0xff] %v634
        %731 = vst [vmem:[#allocation2 + $0xf8] sm:$0xff] %v635
        %732 = vst [vmem:[#allocation2 + $0x180] sm:$0xff] %v636
        %733 = vst [vmem:[#allocation2 + $0x188] sm:$0xff] %v637
        %734 = vst [vmem:[#allocation2 + $0x190] sm:$0xff] %v638
        %735 = vst [vmem:[#allocation2 + $0x198] sm:$0xff] %v639
        %736 = vst [vmem:[#allocation2 + $0x1a0] sm:$0xff] %v640
        %737 = vst [vmem:[#allocation2 + $0x1a8] sm:$0xff] %v641
        %738 = vst [vmem:[#allocation2 + $0x1b0] sm:$0xff] %v642
        %739 = vst [vmem:[#allocation2 + $0x1b8] sm:$0xff] %v643
        %740 = vst [vmem:[#allocation2 + $0x240] sm:$0xff] %v644
        %741 = vst [vmem:[#allocation2 + $0x248] sm:$0xff] %v645
        %742 = vst [vmem:[#allocation2 + $0x250] sm:$0xff] %v646
        %743 = vst [vmem:[#allocation2 + $0x258] sm:$0xff] %v647
        %744 = vst [vmem:[#allocation2 + $0x260] sm:$0xff] %v648
        %745 = vst [vmem:[#allocation2 + $0x268] sm:$0xff] %v649
        %746 = vst [vmem:[#allocation2 + $0x270] sm:$0xff] %v650
        %747 = vst [vmem:[#allocation2 + $0x278] sm:$0xff] %v651
        %v748 = vmul.f32 %v684, %v289
        %v749 = vmul.f32 %v685, %v289
        %v750 = vmul.f32 %v686, %v289
        %v751 = vmul.f32 %v687, %v289
        %v752 = vmul.f32 %v688, %v289
        %v753 = vmul.f32 %v689, %v289
        %v754 = vmul.f32 %v690, %v289
        %v755 = vmul.f32 %v691, %v289
        %v756 = vmul.f32 %v692, %v294
        %v757 = vmul.f32 %v693, %v294
        %v758 = vmul.f32 %v694, %v294
        %v759 = vmul.f32 %v695, %v294
        %v760 = vmul.f32 %v696, %v294
        %v761 = vmul.f32 %v697, %v294
        %v762 = vmul.f32 %v698, %v294
        %v763 = vmul.f32 %v699, %v294
        %v764 = vmul.f32 %v700, %v299
        %v765 = vmul.f32 %v701, %v299
        %v766 = vmul.f32 %v702, %v299
        %v767 = vmul.f32 %v703, %v299
        %v768 = vmul.f32 %v704, %v299
        %v769 = vmul.f32 %v705, %v299
        %v770 = vmul.f32 %v706, %v299
        %v771 = vmul.f32 %v707, %v299
        %v772 = vmul.f32 %v708, %v304
        %v773 = vmul.f32 %v709, %v304
        %v774 = vmul.f32 %v710, %v304
        %v775 = vmul.f32 %v711, %v304
        %v776 = vmul.f32 %v712, %v304
        %v777 = vmul.f32 %v713, %v304
        %v778 = vmul.f32 %v714, %v304
        %v779 = vmul.f32 %v715, %v304
        %780 = vst [vmem:[#allocation2 + $0x40] sm:$0xff] %v748
        %781 = vst [vmem:[#allocation2 + $0x48] sm:$0xff] %v749
        %782 = vst [vmem:[#allocation2 + $0x50] sm:$0xff] %v750
        %783 = vst [vmem:[#allocation2 + $0x58] sm:$0xff] %v751
        %784 = vst [vmem:[#allocation2 + $0x60] sm:$0xff] %v752
        %785 = vst [vmem:[#allocation2 + $0x68] sm:$0xff] %v753
        %786 = vst [vmem:[#allocation2 + $0x70] sm:$0xff] %v754
        %787 = vst [vmem:[#allocation2 + $0x78] sm:$0xff] %v755
        %788 = vst [vmem:[#allocation2 + $0x100] sm:$0xff] %v756
        %789 = vst [vmem:[#allocation2 + $0x108] sm:$0xff] %v757
        %790 = vst [vmem:[#allocation2 + $0x110] sm:$0xff] %v758
        %791 = vst [vmem:[#allocation2 + $0x118] sm:$0xff] %v759
        %792 = vst [vmem:[#allocation2 + $0x120] sm:$0xff] %v760
        %793 = vst [vmem:[#allocation2 + $0x128] sm:$0xff] %v761
        %794 = vst [vmem:[#allocation2 + $0x130] sm:$0xff] %v762
        %795 = vst [vmem:[#allocation2 + $0x138] sm:$0xff] %v763
        %796 = vst [vmem:[#allocation2 + $0x1c0] sm:$0xff] %v764
        %797 = vst [vmem:[#allocation2 + $0x1c8] sm:$0xff] %v765
        %798 = vst [vmem:[#allocation2 + $0x1d0] sm:$0xff] %v766
        %799 = vst [vmem:[#allocation2 + $0x1d8] sm:$0xff] %v767
        %800 = vst [vmem:[#allocation2 + $0x1e0] sm:$0xff] %v768
        %801 = vst [vmem:[#allocation2 + $0x1e8] sm:$0xff] %v769
        %802 = vst [vmem:[#allocation2 + $0x1f0] sm:$0xff] %v770
        %803 = vst [vmem:[#allocation2 + $0x1f8] sm:$0xff] %v771
        %804 = vst [vmem:[#allocation2 + $0x280] sm:$0xff] %v772
        %805 = vst [vmem:[#allocation2 + $0x288] sm:$0xff] %v773
        %806 = vst [vmem:[#allocation2 + $0x290] sm:$0xff] %v774
        %807 = vst [vmem:[#allocation2 + $0x298] sm:$0xff] %v775
        %808 = vst [vmem:[#allocation2 + $0x2a0] sm:$0xff] %v776
        %809 = vst [vmem:[#allocation2 + $0x2a8] sm:$0xff] %v777
        %810 = vst [vmem:[#allocation2 + $0x2b0] sm:$0xff] %v778
        %811 = vst [vmem:[#allocation2 + $0x2b8] sm:$0xff] %v779
        %v812 = vmul.f32 %v684, %v308
        %v813 = vmul.f32 %v685, %v308
        %v814 = vmul.f32 %v686, %v308
        %v815 = vmul.f32 %v687, %v308
        %v816 = vmul.f32 %v688, %v308
        %v817 = vmul.f32 %v689, %v308
        %v818 = vmul.f32 %v690, %v308
        %v819 = vmul.f32 %v691, %v308
        %v820 = vmul.f32 %v692, %v312
        %v821 = vmul.f32 %v693, %v312
        %v822 = vmul.f32 %v694, %v312
        %v823 = vmul.f32 %v695, %v312
        %v824 = vmul.f32 %v696, %v312
        %v825 = vmul.f32 %v697, %v312
        %v826 = vmul.f32 %v698, %v312
        %v827 = vmul.f32 %v699, %v312
        %v828 = vmul.f32 %v700, %v316
        %v829 = vmul.f32 %v701, %v316
        %v830 = vmul.f32 %v702, %v316
        %v831 = vmul.f32 %v703, %v316
        %v832 = vmul.f32 %v704, %v316
        %v833 = vmul.f32 %v705, %v316
        %v834 = vmul.f32 %v706, %v316
        %v835 = vmul.f32 %v707, %v316
        %v836 = vmul.f32 %v708, %v320
        %v837 = vmul.f32 %v709, %v320
        %v838 = vmul.f32 %v710, %v320
        %v839 = vmul.f32 %v711, %v320
        %v840 = vmul.f32 %v712, %v320
        %v841 = vmul.f32 %v713, %v320
        %v842 = vmul.f32 %v714, %v320
        %v843 = vmul.f32 %v715, %v320
        %844 = vst [vmem:[#allocation2 + $0x80] sm:$0xff] %v812
        %845 = vst [vmem:[#allocation2 + $0x88] sm:$0xff] %v813
        %846 = vst [vmem:[#allocation2 + $0x90] sm:$0xff] %v814
        %847 = vst [vmem:[#allocation2 + $0x98] sm:$0xff] %v815
        %848 = vst [vmem:[#allocation2 + $0xa0] sm:$0xff] %v816
        %849 = vst [vmem:[#allocation2 + $0xa8] sm:$0xff] %v817
        %850 = vst [vmem:[#allocation2 + $0xb0] sm:$0xff] %v818
        %851 = vst [vmem:[#allocation2 + $0xb8] sm:$0xff] %v819
        %852 = vst [vmem:[#allocation2 + $0x140] sm:$0xff] %v820
        %853 = vst [vmem:[#allocation2 + $0x148] sm:$0xff] %v821
        %854 = vst [vmem:[#allocation2 + $0x150] sm:$0xff] %v822
        %855 = vst [vmem:[#allocation2 + $0x158] sm:$0xff] %v823
        %856 = vst [vmem:[#allocation2 + $0x160] sm:$0xff] %v824
        %857 = vst [vmem:[#allocation2 + $0x168] sm:$0xff] %v825
        %858 = vst [vmem:[#allocation2 + $0x170] sm:$0xff] %v826
        %859 = vst [vmem:[#allocation2 + $0x178] sm:$0xff] %v827
        %860 = vst [vmem:[#allocation2 + $0x200] sm:$0xff] %v828
        %861 = vst [vmem:[#allocation2 + $0x208] sm:$0xff] %v829
        %862 = vst [vmem:[#allocation2 + $0x210] sm:$0xff] %v830
        %863 = vst [vmem:[#allocation2 + $0x218] sm:$0xff] %v831
        %864 = vst [vmem:[#allocation2 + $0x220] sm:$0xff] %v832
        %865 = vst [vmem:[#allocation2 + $0x228] sm:$0xff] %v833
        %866 = vst [vmem:[#allocation2 + $0x230] sm:$0xff] %v834
        %867 = vst [vmem:[#allocation2 + $0x238] sm:$0xff] %v835
        %868 = vst [vmem:[#allocation2 + $0x2c0] sm:$0xff] %v836
        %869 = vst [vmem:[#allocation2 + $0x2c8] sm:$0xff] %v837
        %870 = vst [vmem:[#allocation2 + $0x2d0] sm:$0xff] %v838
        %871 = vst [vmem:[#allocation2 + $0x2d8] sm:$0xff] %v839
        %872 = vst [vmem:[#allocation2 + $0x2e0] sm:$0xff] %v840
        %873 = vst [vmem:[#allocation2 + $0x2e8] sm:$0xff] %v841
        %874 = vst [vmem:[#allocation2 + $0x2f0] sm:$0xff] %v842
        %875 = vst [vmem:[#allocation2 + $0x2f8] sm:$0xff] %v843
        %v876 = vld [vmem:[%s3] sm:$0xff]
        %v877 = vld [vmem:[%s3 + $0x8] sm:$0xff]
        %v878 = vld [vmem:[%s3 + $0x10] sm:$0xff]
        %v879 = vld [vmem:[%s3 + $0x18] sm:$0xff]
        %v880 = vld [vmem:[#allocation2] sm:$0xff]
        %v881 = vld [vmem:[#allocation2 + $0x8] sm:$0xff]
        %v882 = vld [vmem:[#allocation2 + $0x10] sm:$0xff]
        %v883 = vld [vmem:[#allocation2 + $0x18] sm:$0xff]
        %v884 = vld [vmem:[#allocation2 + $0x20] sm:$0xff]
        %v885 = vld [vmem:[#allocation2 + $0x28] sm:$0xff]
        %v886 = vld [vmem:[#allocation2 + $0x30] sm:$0xff]
        %v887 = vld [vmem:[#allocation2 + $0x38] sm:$0xff]
        %v888 = vld [vmem:[#allocation2 + $0x40] sm:$0xff]
        %v889 = vld [vmem:[#allocation2 + $0x48] sm:$0xff]
        %v890 = vld [vmem:[#allocation2 + $0x50] sm:$0xff]
        %v891 = vld [vmem:[#allocation2 + $0x58] sm:$0xff]
        %v892 = vld [vmem:[#allocation2 + $0x60] sm:$0xff]
        %v893 = vld [vmem:[#allocation2 + $0x68] sm:$0xff]
        %v894 = vld [vmem:[#allocation2 + $0x70] sm:$0xff]
        %v895 = vld [vmem:[#allocation2 + $0x78] sm:$0xff]
        %v896 = vld [vmem:[#allocation2 + $0x80] sm:$0xff]
        %v897 = vld [vmem:[#allocation2 + $0x88] sm:$0xff]
        %v898 = vld [vmem:[#allocation2 + $0x90] sm:$0xff]
        %v899 = vld [vmem:[#allocation2 + $0x98] sm:$0xff]
        %v900 = vld [vmem:[#allocation2 + $0xa0] sm:$0xff]
        %v901 = vld [vmem:[#allocation2 + $0xa8] sm:$0xff]
        %v902 = vld [vmem:[#allocation2 + $0xb0] sm:$0xff]
        %v903 = vld [vmem:[#allocation2 + $0xb8] sm:$0xff]
        %v904 = vld [vmem:[#allocation2 + $0xc0] sm:$0xff]
        %v905 = vld [vmem:[#allocation2 + $0xc8] sm:$0xff]
        %v906 = vld [vmem:[#allocation2 + $0xd0] sm:$0xff]
        %v907 = vld [vmem:[#allocation2 + $0xd8] sm:$0xff]
        %v908 = vld [vmem:[#allocation2 + $0xe0] sm:$0xff]
        %v909 = vld [vmem:[#allocation2 + $0xe8] sm:$0xff]
        %v910 = vld [vmem:[#allocation2 + $0xf0] sm:$0xff]
        %v911 = vld [vmem:[#allocation2 + $0xf8] sm:$0xff]
        %v912 = vld [vmem:[#allocation2 + $0x100] sm:$0xff]
        %v913 = vld [vmem:[#allocation2 + $0x108] sm:$0xff]
        %v914 = vld [vmem:[#allocation2 + $0x110] sm:$0xff]
        %v915 = vld [vmem:[#allocation2 + $0x118] sm:$0xff]
        %v916 = vld [vmem:[#allocation2 + $0x120] sm:$0xff]
        %v917 = vld [vmem:[#allocation2 + $0x128] sm:$0xff]
        %v918 = vld [vmem:[#allocation2 + $0x130] sm:$0xff]
        %v919 = vld [vmem:[#allocation2 + $0x138] sm:$0xff]
        %v920 = vld [vmem:[#allocation2 + $0x140] sm:$0xff]
        %v921 = vld [vmem:[#allocation2 + $0x148] sm:$0xff]
        %v922 = vld [vmem:[#allocation2 + $0x150] sm:$0xff]
        %v923 = vld [vmem:[#allocation2 + $0x158] sm:$0xff]
        %v924 = vld [vmem:[#allocation2 + $0x160] sm:$0xff]
        %v925 = vld [vmem:[#allocation2 + $0x168] sm:$0xff]
        %v926 = vld [vmem:[#allocation2 + $0x170] sm:$0xff]
        %v927 = vld [vmem:[#allocation2 + $0x178] sm:$0xff]
        %v928 = vld [vmem:[#allocation2 + $0x180] sm:$0xff]
        %v929 = vld [vmem:[#allocation2 + $0x188] sm:$0xff]
        %v930 = vld [vmem:[#allocation2 + $0x190] sm:$0xff]
        %v931 = vld [vmem:[#allocation2 + $0x198] sm:$0xff]
        %v932 = vld [vmem:[#allocation2 + $0x1a0] sm:$0xff]
        %v933 = vld [vmem:[#allocation2 + $0x1a8] sm:$0xff]
        %v934 = vld [vmem:[#allocation2 + $0x1b0] sm:$0xff]
        %v935 = vld [vmem:[#allocation2 + $0x1b8] sm:$0xff]
        %v936 = vld [vmem:[#allocation2 + $0x1c0] sm:$0xff]
        %v937 = vld [vmem:[#allocation2 + $0x1c8] sm:$0xff]
        %v938 = vld [vmem:[#allocation2 + $0x1d0] sm:$0xff]
        %v939 = vld [vmem:[#allocation2 + $0x1d8] sm:$0xff]
        %v940 = vld [vmem:[#allocation2 + $0x1e0] sm:$0xff]
        %v941 = vld [vmem:[#allocation2 + $0x1e8] sm:$0xff]
        %v942 = vld [vmem:[#allocation2 + $0x1f0] sm:$0xff]
        %v943 = vld [vmem:[#allocation2 + $0x1f8] sm:$0xff]
        %v944 = vld [vmem:[#allocation2 + $0x200] sm:$0xff]
        %v945 = vld [vmem:[#allocation2 + $0x208] sm:$0xff]
        %v946 = vld [vmem:[#allocation2 + $0x210] sm:$0xff]
        %v947 = vld [vmem:[#allocation2 + $0x218] sm:$0xff]
        %v948 = vld [vmem:[#allocation2 + $0x220] sm:$0xff]
        %v949 = vld [vmem:[#allocation2 + $0x228] sm:$0xff]
        %v950 = vld [vmem:[#allocation2 + $0x230] sm:$0xff]
        %v951 = vld [vmem:[#allocation2 + $0x238] sm:$0xff]
        %v952 = vld [vmem:[#allocation2 + $0x240] sm:$0xff]
        %v953 = vld [vmem:[#allocation2 + $0x248] sm:$0xff]
        %v954 = vld [vmem:[#allocation2 + $0x250] sm:$0xff]
        %v955 = vld [vmem:[#allocation2 + $0x258] sm:$0xff]
        %v956 = vld [vmem:[#allocation2 + $0x260] sm:$0xff]
        %v957 = vld [vmem:[#allocation2 + $0x268] sm:$0xff]
        %v958 = vld [vmem:[#allocation2 + $0x270] sm:$0xff]
        %v959 = vld [vmem:[#allocation2 + $0x278] sm:$0xff]
        %v960 = vld [vmem:[#allocation2 + $0x280] sm:$0xff]
        %v961 = vld [vmem:[#allocation2 + $0x288] sm:$0xff]
        %v962 = vld [vmem:[#allocation2 + $0x290] sm:$0xff]
        %v963 = vld [vmem:[#allocation2 + $0x298] sm:$0xff]
        %v964 = vld [vmem:[#allocation2 + $0x2a0] sm:$0xff]
        %v965 = vld [vmem:[#allocation2 + $0x2a8] sm:$0xff]
        %v966 = vld [vmem:[#allocation2 + $0x2b0] sm:$0xff]
        %v967 = vld [vmem:[#allocation2 + $0x2b8] sm:$0xff]
        %v968 = vld [vmem:[#allocation2 + $0x2c0] sm:$0xff]
        %v969 = vld [vmem:[#allocation2 + $0x2c8] sm:$0xff]
        %v970 = vld [vmem:[#allocation2 + $0x2d0] sm:$0xff]
        %v971 = vld [vmem:[#allocation2 + $0x2d8] sm:$0xff]
        %v972 = vld [vmem:[#allocation2 + $0x2e0] sm:$0xff]
        %v973 = vld [vmem:[#allocation2 + $0x2e8] sm:$0xff]
        %v974 = vld [vmem:[#allocation2 + $0x2f0] sm:$0xff]
        %v975 = vld [vmem:[#allocation2 + $0x2f8] sm:$0xff]
        %vm976 = vcmask 261120
        %v978 = vsel %vm976, %v876, 0
        %v981 = vsel %vm976, %v877, 0
        %v984 = vsel %vm976, %v878, 0
        %v987 = vsel %vm976, %v879, 0
        %989 = vmatprep.subr.mxu0 %v881
        %990 = vmatpush1.msra.mxu0 %v880
        %991 = vmatprep.subr.mxu0 %v905
        %992 = vmatpush1.msra.mxu0 %v904
        %993 = vmatprep.subr.mxu0 %v929
        %994 = vmatpush1.msra.mxu0 %v928
        %995 = vmatprep.subr.mxu0 %v953
        %996 = vmatpush1.msra.mxu0 %v952
        %997 = vmatprep.subr.mxu0 0.0
        %998 = vmatpush1.msra.mxu0 0.0
        %999 = vmatprep.subr.mxu0 0.0
        %1000 = vmatpush1.msra.mxu0 0.0
        %1001 = vmatprep.subr.mxu0 0.0
        %1002 = vmatpush1.msra.mxu0 0.0
        %1003 = vmatprep.subr.mxu0 0.0
        %1004 = vmatpush1.msra.mxu0 0.0
        %1005 = vmatprep.subr.mxu0 0.0
        %1006 = vmatpush1.msra.mxu0 0.0
        %1007 = vmatprep.subr.mxu0 0.0
        %1008 = vmatpush1.msra.mxu0 0.0
        %1009 = vmatprep.subr.mxu0 0.0
        %1010 = vmatpush1.msra.mxu0 0.0
        %1011 = vmatprep.subr.mxu0 0.0
        %1012 = vmatpush1.msra.mxu0 0.0
        %1013 = vmatprep.subr.mxu0 0.0
        %1014 = vmatpush1.msra.mxu0 0.0
        %1015 = vmatprep.subr.mxu0 0.0
        %1016 = vmatpush1.msra.mxu0 0.0
        %1017 = vmatprep.subr.mxu0 0.0
        %1018 = vmatpush1.msra.mxu0 0.0
        %1019 = vmatprep.subr.mxu0 0.0
        %1020 = vmatpush1.msra.mxu0 0.0
        %1021 = vmatprep.subr.mxu0 0.0
        %1022 = vmatpush1.msra.mxu0 0.0
        %1023 = vmatprep.subr.mxu0 0.0
        %1024 = vmatpush1.msra.mxu0 0.0
        %1025 = vmatprep.subr.mxu0 0.0
        %1026 = vmatpush1.msra.mxu0 0.0
        %1027 = vmatprep.subr.mxu0 0.0
        %1028 = vmatpush1.msra.mxu0 0.0
        %1029 = vmatprep.subr.mxu0 0.0
        %1030 = vmatpush1.msra.mxu0 0.0
        %1031 = vmatprep.subr.mxu0 0.0
        %1032 = vmatpush1.msra.mxu0 0.0
        %1033 = vmatprep.subr.mxu0 0.0
        %1034 = vmatpush1.msra.mxu0 0.0
        %1035 = vmatprep.subr.mxu0 0.0
        %1036 = vmatpush1.msra.mxu0 0.0
        %1037 = vmatprep.subr.mxu0 0.0
        %1038 = vmatpush1.msra.mxu0 0.0
        %1039 = vmatprep.subr.mxu0 0.0
        %1040 = vmatpush1.msra.mxu0 0.0
        %1041 = vmatprep.subr.mxu0 0.0
        %1042 = vmatpush1.msra.mxu0 0.0
        %1043 = vmatprep.subr.mxu0 0.0
        %1044 = vmatpush1.msra.mxu0 0.0
        %1045 = vmatprep.subr.mxu0 0.0
        %1046 = vmatpush1.msra.mxu0 0.0
        %1047 = vmatprep.subr.mxu0 0.0
        %1048 = vmatpush1.msra.mxu0 0.0
        %1049 = vmatprep.subr.mxu0 0.0
        %1050 = vmatpush1.msra.mxu0 0.0
        %1051 = vmatprep.subr.mxu0 0.0
        %1052 = vmatpush1.msra.mxu0 0.0
        %1053 = vmatprep.mubr.f32.mxu0 0.0
        %1054 = vmatmul.mubr.f32.gmra.mrb[0].mxu0 %v978
        %v1055 = vpop.f32.mrb[0].mxu0
        %v1056 = vadd.f32 0.0, %v1055
        %v1057 = vpop.f32.mrb[0].mxu0
        %v1058 = vadd.f32 0.0, %v1057
        %1059 = vmatprep.mubr.f32.mxu0 0.0
        %1060 = vmatmul.mubr.f32.gmra.mrb[0].mxu0 %v981
        %v1061 = vpop.f32.mrb[0].mxu0
        %v1062 = vadd.f32 0.0, %v1061
        %v1063 = vpop.f32.mrb[0].mxu0
        %v1064 = vadd.f32 0.0, %v1063
        %1065 = vmatprep.mubr.f32.mxu0 0.0
        %1066 = vmatmul.mubr.f32.gmra.mrb[0].mxu0 %v984
        %v1067 = vpop.f32.mrb[0].mxu0
        %v1068 = vadd.f32 0.0, %v1067
        %v1069 = vpop.f32.mrb[0].mxu0
        %v1070 = vadd.f32 0.0, %v1069
        %1071 = vmatprep.mubr.f32.mxu0 0.0
        %1072 = vmatmul.mubr.f32.gmra.mrb[0].mxu0 %v987
        %v1073 = vpop.f32.mrb[0].mxu0
        %v1074 = vadd.f32 0.0, %v1073
        %v1075 = vpop.f32.mrb[0].mxu0
        %v1076 = vadd.f32 0.0, %v1075
        %1077 = vdwg.mxu0
        %1078 = vmatprep.subr.mxu0 %v883
        %1079 = vmatpush1.msra.mxu0 %v882
        %1080 = vmatprep.subr.mxu0 %v907
        %1081 = vmatpush1.msra.mxu0 %v906
        %1082 = vmatprep.subr.mxu0 %v931
        %1083 = vmatpush1.msra.mxu0 %v930
        %1084 = vmatprep.subr.mxu0 %v955
        %1085 = vmatpush1.msra.mxu0 %v954
        %1086 = vmatprep.subr.mxu0 0.0
        %1087 = vmatpush1.msra.mxu0 0.0
        %1088 = vmatprep.subr.mxu0 0.0
        %1089 = vmatpush1.msra.mxu0 0.0
        %1090 = vmatprep.subr.mxu0 0.0
        %1091 = vmatpush1.msra.mxu0 0.0
        %1092 = vmatprep.subr.mxu0 0.0
        %1093 = vmatpush1.msra.mxu0 0.0
        %1094 = vmatprep.subr.mxu0 0.0
        %1095 = vmatpush1.msra.mxu0 0.0
        %1096 = vmatprep.subr.mxu0 0.0
        %1097 = vmatpush1.msra.mxu0 0.0
        %1098 = vmatprep.subr.mxu0 0.0
        %1099 = vmatpush1.msra.mxu0 0.0
        %1100 = vmatprep.subr.mxu0 0.0
        %1101 = vmatpush1.msra.mxu0 0.0
        %1102 = vmatprep.subr.mxu0 0.0
        %1103 = vmatpush1.msra.mxu0 0.0
        %1104 = vmatprep.subr.mxu0 0.0
        %1105 = vmatpush1.msra.mxu0 0.0
        %1106 = vmatprep.subr.mxu0 0.0
        %1107 = vmatpush1.msra.mxu0 0.0
        %1108 = vmatprep.subr.mxu0 0.0
        %1109 = vmatpush1.msra.mxu0 0.0
        %1110 = vmatprep.subr.mxu0 0.0
        %1111 = vmatpush1.msra.mxu0 0.0
        %1112 = vmatprep.subr.mxu0 0.0
        %1113 = vmatpush1.msra.mxu0 0.0
        %1114 = vmatprep.subr.mxu0 0.0
        %1115 = vmatpush1.msra.mxu0 0.0
        %1116 = vmatprep.subr.mxu0 0.0
        %1117 = vmatpush1.msra.mxu0 0.0
        %1118 = vmatprep.subr.mxu0 0.0
        %1119 = vmatpush1.msra.mxu0 0.0
        %1120 = vmatprep.subr.mxu0 0.0
        %1121 = vmatpush1.msra.mxu0 0.0
        %1122 = vmatprep.subr.mxu0 0.0
        %1123 = vmatpush1.msra.mxu0 0.0
        %1124 = vmatprep.subr.mxu0 0.0
        %1125 = vmatpush1.msra.mxu0 0.0
        %1126 = vmatprep.subr.mxu0 0.0
        %1127 = vmatpush1.msra.mxu0 0.0
        %1128 = vmatprep.subr.mxu0 0.0
        %1129 = vmatpush1.msra.mxu0 0.0
        %1130 = vmatprep.subr.mxu0 0.0
        %1131 = vmatpush1.msra.mxu0 0.0
        %1132 = vmatprep.subr.mxu0 0.0
        %1133 = vmatpush1.msra.mxu0 0.0
        %1134 = vmatprep.subr.mxu0 0.0
        %1135 = vmatpush1.msra.mxu0 0.0
        %1136 = vmatprep.subr.mxu0 0.0
        %1137 = vmatpush1.msra.mxu0 0.0
        %1138 = vmatprep.subr.mxu0 0.0
        %1139 = vmatpush1.msra.mxu0 0.0
        %1140 = vmatprep.subr.mxu0 0.0
        %1141 = vmatpush1.msra.mxu0 0.0
        %1142 = vmatprep.mubr.f32.mxu0 0.0
        %1143 = vmatmul.mubr.f32.gmra.mrb[0].mxu0 %v978
        %v1144 = vpop.f32.mrb[0].mxu0
        %v1145 = vadd.f32 0.0, %v1144
        %v1146 = vpop.f32.mrb[0].mxu0
        %v1147 = vadd.f32 0.0, %v1146
        %1148 = vmatprep.mubr.f32.mxu0 0.0
        %1149 = vmatmul.mubr.f32.gmra.mrb[0].mxu0 %v981
        %v1150 = vpop.f32.mrb[0].mxu0
        %v1151 = vadd.f32 0.0, %v1150
        %v1152 = vpop.f32.mrb[0].mxu0
        %v1153 = vadd.f32 0.0, %v1152
        %1154 = vmatprep.mubr.f32.mxu0 0.0
        %1155 = vmatmul.mubr.f32.gmra.mrb[0].mxu0 %v984
        %v1156 = vpop.f32.mrb[0].mxu0
        %v1157 = vadd.f32 0.0, %v1156
        %v1158 = vpop.f32.mrb[0].mxu0
        %v1159 = vadd.f32 0.0, %v1158
        %1160 = vmatprep.mubr.f32.mxu0 0.0
        %1161 = vmatmul.mubr.f32.gmra.mrb[0].mxu0 %v987
        %v1162 = vpop.f32.mrb[0].mxu0
        %v1163 = vadd.f32 0.0, %v1162
        %v1164 = vpop.f32.mrb[0].mxu0
        %v1165 = vadd.f32 0.0, %v1164
        %1166 = vdwg.mxu0
        %1167 = vmatprep.subr.mxu0 %v885
        %1168 = vmatpush1.msra.mxu0 %v884
        %1169 = vmatprep.subr.mxu0 %v909
        %1170 = vmatpush1.msra.mxu0 %v908
        %1171 = vmatprep.subr.mxu0 %v933
        %1172 = vmatpush1.msra.mxu0 %v932
        %1173 = vmatprep.subr.mxu0 %v957
        %1174 = vmatpush1.msra.mxu0 %v956
        %1175 = vmatprep.subr.mxu0 0.0
        %1176 = vmatpush1.msra.mxu0 0.0
        %1177 = vmatprep.subr.mxu0 0.0
        %1178 = vmatpush1.msra.mxu0 0.0
        %1179 = vmatprep.subr.mxu0 0.0
        %1180 = vmatpush1.msra.mxu0 0.0
        %1181 = vmatprep.subr.mxu0 0.0
        %1182 = vmatpush1.msra.mxu0 0.0
        %1183 = vmatprep.subr.mxu0 0.0
        %1184 = vmatpush1.msra.mxu0 0.0
        %1185 = vmatprep.subr.mxu0 0.0
        %1186 = vmatpush1.msra.mxu0 0.0
        %1187 = vmatprep.subr.mxu0 0.0
        %1188 = vmatpush1.msra.mxu0 0.0
        %1189 = vmatprep.subr.mxu0 0.0
        %1190 = vmatpush1.msra.mxu0 0.0
        %1191 = vmatprep.subr.mxu0 0.0
        %1192 = vmatpush1.msra.mxu0 0.0
        %1193 = vmatprep.subr.mxu0 0.0
        %1194 = vmatpush1.msra.mxu0 0.0
        %1195 = vmatprep.subr.mxu0 0.0
        %1196 = vmatpush1.msra.mxu0 0.0
        %1197 = vmatprep.subr.mxu0 0.0
        %1198 = vmatpush1.msra.mxu0 0.0
        %1199 = vmatprep.subr.mxu0 0.0
        %1200 = vmatpush1.msra.mxu0 0.0
        %1201 = vmatprep.subr.mxu0 0.0
        %1202 = vmatpush1.msra.mxu0 0.0
        %1203 = vmatprep.subr.mxu0 0.0
        %1204 = vmatpush1.msra.mxu0 0.0
        %1205 = vmatprep.subr.mxu0 0.0
        %1206 = vmatpush1.msra.mxu0 0.0
        %1207 = vmatprep.subr.mxu0 0.0
        %1208 = vmatpush1.msra.mxu0 0.0
        %1209 = vmatprep.subr.mxu0 0.0
        %1210 = vmatpush1.msra.mxu0 0.0
        %1211 = vmatprep.subr.mxu0 0.0
        %1212 = vmatpush1.msra.mxu0 0.0
        %1213 = vmatprep.subr.mxu0 0.0
        %1214 = vmatpush1.msra.mxu0 0.0
        %1215 = vmatprep.subr.mxu0 0.0
        %1216 = vmatpush1.msra.mxu0 0.0
        %1217 = vmatprep.subr.mxu0 0.0
        %1218 = vmatpush1.msra.mxu0 0.0
        %1219 = vmatprep.subr.mxu0 0.0
        %1220 = vmatpush1.msra.mxu0 0.0
        %1221 = vmatprep.subr.mxu0 0.0
        %1222 = vmatpush1.msra.mxu0 0.0
        %1223 = vmatprep.subr.mxu0 0.0
        %1224 = vmatpush1.msra.mxu0 0.0
        %1225 = vmatprep.subr.mxu0 0.0
        %1226 = vmatpush1.msra.mxu0 0.0
        %1227 = vmatprep.subr.mxu0 0.0
        %1228 = vmatpush1.msra.mxu0 0.0
        %1229 = vmatprep.subr.mxu0 0.0
        %1230 = vmatpush1.msra.mxu0 0.0
        %1231 = vmatprep.mubr.f32.mxu0 0.0
        %1232 = vmatmul.mubr.f32.gmra.mrb[0].mxu0 %v978
        %v1233 = vpop.f32.mrb[0].mxu0
        %v1234 = vadd.f32 0.0, %v1233
        %v1235 = vpop.f32.mrb[0].mxu0
        %v1236 = vadd.f32 0.0, %v1235
        %1237 = vmatprep.mubr.f32.mxu0 0.0
        %1238 = vmatmul.mubr.f32.gmra.mrb[0].mxu0 %v981
        %v1239 = vpop.f32.mrb[0].mxu0
        %v1240 = vadd.f32 0.0, %v1239
        %v1241 = vpop.f32.mrb[0].mxu0
        %v1242 = vadd.f32 0.0, %v1241
        %1243 = vmatprep.mubr.f32.mxu0 0.0
        %1244 = vmatmul.mubr.f32.gmra.mrb[0].mxu0 %v984
        %v1245 = vpop.f32.mrb[0].mxu0
        %v1246 = vadd.f32 0.0, %v1245
        %v1247 = vpop.f32.mrb[0].mxu0
        %v1248 = vadd.f32 0.0, %v1247
        %1249 = vmatprep.mubr.f32.mxu0 0.0
        %1250 = vmatmul.mubr.f32.gmra.mrb[0].mxu0 %v987
        %v1251 = vpop.f32.mrb[0].mxu0
        %v1252 = vadd.f32 0.0, %v1251
        %v1253 = vpop.f32.mrb[0].mxu0
        %v1254 = vadd.f32 0.0, %v1253
        %1255 = vdwg.mxu0
        %1256 = vmatprep.subr.mxu0 %v887
        %1257 = vmatpush1.msra.mxu0 %v886
        %1258 = vmatprep.subr.mxu0 %v911
        %1259 = vmatpush1.msra.mxu0 %v910
        %1260 = vmatprep.subr.mxu0 %v935
        %1261 = vmatpush1.msra.mxu0 %v934
        %1262 = vmatprep.subr.mxu0 %v959
        %1263 = vmatpush1.msra.mxu0 %v958
        %1264 = vmatprep.subr.mxu0 0.0
        %1265 = vmatpush1.msra.mxu0 0.0
        %1266 = vmatprep.subr.mxu0 0.0
        %1267 = vmatpush1.msra.mxu0 0.0
        %1268 = vmatprep.subr.mxu0 0.0
        %1269 = vmatpush1.msra.mxu0 0.0
        %1270 = vmatprep.subr.mxu0 0.0
        %1271 = vmatpush1.msra.mxu0 0.0
        %1272 = vmatprep.subr.mxu0 0.0
        %1273 = vmatpush1.msra.mxu0 0.0
        %1274 = vmatprep.subr.mxu0 0.0
        %1275 = vmatpush1.msra.mxu0 0.0
        %1276 = vmatprep.subr.mxu0 0.0
        %1277 = vmatpush1.msra.mxu0 0.0
        %1278 = vmatprep.subr.mxu0 0.0
        %1279 = vmatpush1.msra.mxu0 0.0
        %1280 = vmatprep.subr.mxu0 0.0
        %1281 = vmatpush1.msra.mxu0 0.0
        %1282 = vmatprep.subr.mxu0 0.0
        %1283 = vmatpush1.msra.mxu0 0.0
        %1284 = vmatprep.subr.mxu0 0.0
        %1285 = vmatpush1.msra.mxu0 0.0
        %1286 = vmatprep.subr.mxu0 0.0
        %1287 = vmatpush1.msra.mxu0 0.0
        %1288 = vmatprep.subr.mxu0 0.0
        %1289 = vmatpush1.msra.mxu0 0.0
        %1290 = vmatprep.subr.mxu0 0.0
        %1291 = vmatpush1.msra.mxu0 0.0
        %1292 = vmatprep.subr.mxu0 0.0
        %1293 = vmatpush1.msra.mxu0 0.0
        %1294 = vmatprep.subr.mxu0 0.0
        %1295 = vmatpush1.msra.mxu0 0.0
        %1296 = vmatprep.subr.mxu0 0.0
        %1297 = vmatpush1.msra.mxu0 0.0
        %1298 = vmatprep.subr.mxu0 0.0
        %1299 = vmatpush1.msra.mxu0 0.0
        %1300 = vmatprep.subr.mxu0 0.0
        %1301 = vmatpush1.msra.mxu0 0.0
        %1302 = vmatprep.subr.mxu0 0.0
        %1303 = vmatpush1.msra.mxu0 0.0
        %1304 = vmatprep.subr.mxu0 0.0
        %1305 = vmatpush1.msra.mxu0 0.0
        %1306 = vmatprep.subr.mxu0 0.0
        %1307 = vmatpush1.msra.mxu0 0.0
        %1308 = vmatprep.subr.mxu0 0.0
        %1309 = vmatpush1.msra.mxu0 0.0
        %1310 = vmatprep.subr.mxu0 0.0
        %1311 = vmatpush1.msra.mxu0 0.0
        %1312 = vmatprep.subr.mxu0 0.0
        %1313 = vmatpush1.msra.mxu0 0.0
        %1314 = vmatprep.subr.mxu0 0.0
        %1315 = vmatpush1.msra.mxu0 0.0
        %1316 = vmatprep.subr.mxu0 0.0
        %1317 = vmatpush1.msra.mxu0 0.0
        %1318 = vmatprep.subr.mxu0 0.0
        %1319 = vmatpush1.msra.mxu0 0.0
        %1320 = vmatprep.mubr.f32.mxu0 0.0
        %1321 = vmatmul.mubr.f32.gmra.mrb[0].mxu0 %v978
        %v1322 = vpop.f32.mrb[0].mxu0
        %v1323 = vadd.f32 0.0, %v1322
        %v1324 = vpop.f32.mrb[0].mxu0
        %v1325 = vadd.f32 0.0, %v1324
        %1326 = vmatprep.mubr.f32.mxu0 0.0
        %1327 = vmatmul.mubr.f32.gmra.mrb[0].mxu0 %v981
        %v1328 = vpop.f32.mrb[0].mxu0
        %v1329 = vadd.f32 0.0, %v1328
        %v1330 = vpop.f32.mrb[0].mxu0
        %v1331 = vadd.f32 0.0, %v1330
        %1332 = vmatprep.mubr.f32.mxu0 0.0
        %1333 = vmatmul.mubr.f32.gmra.mrb[0].mxu0 %v984
        %v1334 = vpop.f32.mrb[0].mxu0
        %v1335 = vadd.f32 0.0, %v1334
        %v1336 = vpop.f32.mrb[0].mxu0
        %v1337 = vadd.f32 0.0, %v1336
        %1338 = vmatprep.mubr.f32.mxu0 0.0
        %1339 = vmatmul.mubr.f32.gmra.mrb[0].mxu0 %v987
        %v1340 = vpop.f32.mrb[0].mxu0
        %v1341 = vadd.f32 0.0, %v1340
        %v1342 = vpop.f32.mrb[0].mxu0
        %v1343 = vadd.f32 0.0, %v1342
        %1344 = vdwg.mxu0
        %1345 = vmatprep.subr.mxu0 %v889
        %1346 = vmatpush1.msra.mxu0 %v888
        %1347 = vmatprep.subr.mxu0 %v913
        %1348 = vmatpush1.msra.mxu0 %v912
        %1349 = vmatprep.subr.mxu0 %v937
        %1350 = vmatpush1.msra.mxu0 %v936
        %1351 = vmatprep.subr.mxu0 %v961
        %1352 = vmatpush1.msra.mxu0 %v960
        %1353 = vmatprep.subr.mxu0 0.0
        %1354 = vmatpush1.msra.mxu0 0.0
        %1355 = vmatprep.subr.mxu0 0.0
        %1356 = vmatpush1.msra.mxu0 0.0
        %1357 = vmatprep.subr.mxu0 0.0
        %1358 = vmatpush1.msra.mxu0 0.0
        %1359 = vmatprep.subr.mxu0 0.0
        %1360 = vmatpush1.msra.mxu0 0.0
        %1361 = vmatprep.subr.mxu0 0.0
        %1362 = vmatpush1.msra.mxu0 0.0
        %1363 = vmatprep.subr.mxu0 0.0
        %1364 = vmatpush1.msra.mxu0 0.0
        %1365 = vmatprep.subr.mxu0 0.0
        %1366 = vmatpush1.msra.mxu0 0.0
        %1367 = vmatprep.subr.mxu0 0.0
        %1368 = vmatpush1.msra.mxu0 0.0
        %1369 = vmatprep.subr.mxu0 0.0
        %1370 = vmatpush1.msra.mxu0 0.0
        %1371 = vmatprep.subr.mxu0 0.0
        %1372 = vmatpush1.msra.mxu0 0.0
        %1373 = vmatprep.subr.mxu0 0.0
        %1374 = vmatpush1.msra.mxu0 0.0
        %1375 = vmatprep.subr.mxu0 0.0
        %1376 = vmatpush1.msra.mxu0 0.0
        %1377 = vmatprep.subr.mxu0 0.0
        %1378 = vmatpush1.msra.mxu0 0.0
        %1379 = vmatprep.subr.mxu0 0.0
        %1380 = vmatpush1.msra.mxu0 0.0
        %1381 = vmatprep.subr.mxu0 0.0
        %1382 = vmatpush1.msra.mxu0 0.0
        %1383 = vmatprep.subr.mxu0 0.0
        %1384 = vmatpush1.msra.mxu0 0.0
        %1385 = vmatprep.subr.mxu0 0.0
        %1386 = vmatpush1.msra.mxu0 0.0
        %1387 = vmatprep.subr.mxu0 0.0
        %1388 = vmatpush1.msra.mxu0 0.0
        %1389 = vmatprep.subr.mxu0 0.0
        %1390 = vmatpush1.msra.mxu0 0.0
        %1391 = vmatprep.subr.mxu0 0.0
        %1392 = vmatpush1.msra.mxu0 0.0
        %1393 = vmatprep.subr.mxu0 0.0
        %1394 = vmatpush1.msra.mxu0 0.0
        %1395 = vmatprep.subr.mxu0 0.0
        %1396 = vmatpush1.msra.mxu0 0.0
        %1397 = vmatprep.subr.mxu0 0.0
        %1398 = vmatpush1.msra.mxu0 0.0
        %1399 = vmatprep.subr.mxu0 0.0
        %1400 = vmatpush1.msra.mxu0 0.0
        %1401 = vmatprep.subr.mxu0 0.0
        %1402 = vmatpush1.msra.mxu0 0.0
        %1403 = vmatprep.subr.mxu0 0.0
        %1404 = vmatpush1.msra.mxu0 0.0
        %1405 = vmatprep.subr.mxu0 0.0
        %1406 = vmatpush1.msra.mxu0 0.0
        %1407 = vmatprep.subr.mxu0 0.0
        %1408 = vmatpush1.msra.mxu0 0.0
        %1409 = vmatprep.mubr.f32.mxu0 0.0
        %1410 = vmatmul.mubr.f32.gmra.mrb[0].mxu0 %v978
        %v1411 = vpop.f32.mrb[0].mxu0
        %v1412 = vadd.f32 0.0, %v1411
        %v1413 = vpop.f32.mrb[0].mxu0
        %v1414 = vadd.f32 0.0, %v1413
        %1415 = vmatprep.mubr.f32.mxu0 0.0
        %1416 = vmatmul.mubr.f32.gmra.mrb[0].mxu0 %v981
        %v1417 = vpop.f32.mrb[0].mxu0
        %v1418 = vadd.f32 0.0, %v1417
        %v1419 = vpop.f32.mrb[0].mxu0
        %v1420 = vadd.f32 0.0, %v1419
        %1421 = vmatprep.mubr.f32.mxu0 0.0
        %1422 = vmatmul.mubr.f32.gmra.mrb[0].mxu0 %v984
        %v1423 = vpop.f32.mrb[0].mxu0
        %v1424 = vadd.f32 0.0, %v1423
        %v1425 = vpop.f32.mrb[0].mxu0
        %v1426 = vadd.f32 0.0, %v1425
        %1427 = vmatprep.mubr.f32.mxu0 0.0
        %1428 = vmatmul.mubr.f32.gmra.mrb[0].mxu0 %v987
        %v1429 = vpop.f32.mrb[0].mxu0
        %v1430 = vadd.f32 0.0, %v1429
        %v1431 = vpop.f32.mrb[0].mxu0
        %v1432 = vadd.f32 0.0, %v1431
        %1433 = vdwg.mxu0
        %1434 = vmatprep.subr.mxu0 %v891
        %1435 = vmatpush1.msra.mxu0 %v890
        %1436 = vmatprep.subr.mxu0 %v915
        %1437 = vmatpush1.msra.mxu0 %v914
        %1438 = vmatprep.subr.mxu0 %v939
        %1439 = vmatpush1.msra.mxu0 %v938
        %1440 = vmatprep.subr.mxu0 %v963
        %1441 = vmatpush1.msra.mxu0 %v962
        %1442 = vmatprep.subr.mxu0 0.0
        %1443 = vmatpush1.msra.mxu0 0.0
        %1444 = vmatprep.subr.mxu0 0.0
        %1445 = vmatpush1.msra.mxu0 0.0
        %1446 = vmatprep.subr.mxu0 0.0
        %1447 = vmatpush1.msra.mxu0 0.0
        %1448 = vmatprep.subr.mxu0 0.0
        %1449 = vmatpush1.msra.mxu0 0.0
        %1450 = vmatprep.subr.mxu0 0.0
        %1451 = vmatpush1.msra.mxu0 0.0
        %1452 = vmatprep.subr.mxu0 0.0
        %1453 = vmatpush1.msra.mxu0 0.0
        %1454 = vmatprep.subr.mxu0 0.0
        %1455 = vmatpush1.msra.mxu0 0.0
        %1456 = vmatprep.subr.mxu0 0.0
        %1457 = vmatpush1.msra.mxu0 0.0
        %1458 = vmatprep.subr.mxu0 0.0
        %1459 = vmatpush1.msra.mxu0 0.0
        %1460 = vmatprep.subr.mxu0 0.0
        %1461 = vmatpush1.msra.mxu0 0.0
        %1462 = vmatprep.subr.mxu0 0.0
        %1463 = vmatpush1.msra.mxu0 0.0
        %1464 = vmatprep.subr.mxu0 0.0
        %1465 = vmatpush1.msra.mxu0 0.0
        %1466 = vmatprep.subr.mxu0 0.0
        %1467 = vmatpush1.msra.mxu0 0.0
        %1468 = vmatprep.subr.mxu0 0.0
        %1469 = vmatpush1.msra.mxu0 0.0
        %1470 = vmatprep.subr.mxu0 0.0
        %1471 = vmatpush1.msra.mxu0 0.0
        %1472 = vmatprep.subr.mxu0 0.0
        %1473 = vmatpush1.msra.mxu0 0.0
        %1474 = vmatprep.subr.mxu0 0.0
        %1475 = vmatpush1.msra.mxu0 0.0
        %1476 = vmatprep.subr.mxu0 0.0
        %1477 = vmatpush1.msra.mxu0 0.0
        %1478 = vmatprep.subr.mxu0 0.0
        %1479 = vmatpush1.msra.mxu0 0.0
        %1480 = vmatprep.subr.mxu0 0.0
        %1481 = vmatpush1.msra.mxu0 0.0
        %1482 = vmatprep.subr.mxu0 0.0
        %1483 = vmatpush1.msra.mxu0 0.0
        %1484 = vmatprep.subr.mxu0 0.0
        %1485 = vmatpush1.msra.mxu0 0.0
        %1486 = vmatprep.subr.mxu0 0.0
        %1487 = vmatpush1.msra.mxu0 0.0
        %1488 = vmatprep.subr.mxu0 0.0
        %1489 = vmatpush1.msra.mxu0 0.0
        %1490 = vmatprep.subr.mxu0 0.0
        %1491 = vmatpush1.msra.mxu0 0.0
        %1492 = vmatprep.subr.mxu0 0.0
        %1493 = vmatpush1.msra.mxu0 0.0
        %1494 = vmatprep.subr.mxu0 0.0
        %1495 = vmatpush1.msra.mxu0 0.0
        %1496 = vmatprep.subr.mxu0 0.0
        %1497 = vmatpush1.msra.mxu0 0.0
        %1498 = vmatprep.mubr.f32.mxu0 0.0
        %1499 = vmatmul.mubr.f32.gmra.mrb[0].mxu0 %v978
        %v1500 = vpop.f32.mrb[0].mxu0
        %v1501 = vadd.f32 0.0, %v1500
        %v1502 = vpop.f32.mrb[0].mxu0
        %v1503 = vadd.f32 0.0, %v1502
        %1504 = vmatprep.mubr.f32.mxu0 0.0
        %1505 = vmatmul.mubr.f32.gmra.mrb[0].mxu0 %v981
        %v1506 = vpop.f32.mrb[0].mxu0
        %v1507 = vadd.f32 0.0, %v1506
        %v1508 = vpop.f32.mrb[0].mxu0
        %v1509 = vadd.f32 0.0, %v1508
        %1510 = vmatprep.mubr.f32.mxu0 0.0
        %1511 = vmatmul.mubr.f32.gmra.mrb[0].mxu0 %v984
        %v1512 = vpop.f32.mrb[0].mxu0
        %v1513 = vadd.f32 0.0, %v1512
        %v1514 = vpop.f32.mrb[0].mxu0
        %v1515 = vadd.f32 0.0, %v1514
        %1516 = vmatprep.mubr.f32.mxu0 0.0
        %1517 = vmatmul.mubr.f32.gmra.mrb[0].mxu0 %v987
        %v1518 = vpop.f32.mrb[0].mxu0
        %v1519 = vadd.f32 0.0, %v1518
        %v1520 = vpop.f32.mrb[0].mxu0
        %v1521 = vadd.f32 0.0, %v1520
        %1522 = vdwg.mxu0
        %1523 = vmatprep.subr.mxu0 %v893
        %1524 = vmatpush1.msra.mxu0 %v892
        %1525 = vmatprep.subr.mxu0 %v917
        %1526 = vmatpush1.msra.mxu0 %v916
        %1527 = vmatprep.subr.mxu0 %v941
        %1528 = vmatpush1.msra.mxu0 %v940
        %1529 = vmatprep.subr.mxu0 %v965
        %1530 = vmatpush1.msra.mxu0 %v964
        %1531 = vmatprep.subr.mxu0 0.0
        %1532 = vmatpush1.msra.mxu0 0.0
        %1533 = vmatprep.subr.mxu0 0.0
        %1534 = vmatpush1.msra.mxu0 0.0
        %1535 = vmatprep.subr.mxu0 0.0
        %1536 = vmatpush1.msra.mxu0 0.0
        %1537 = vmatprep.subr.mxu0 0.0
        %1538 = vmatpush1.msra.mxu0 0.0
        %1539 = vmatprep.subr.mxu0 0.0
        %1540 = vmatpush1.msra.mxu0 0.0
        %1541 = vmatprep.subr.mxu0 0.0
        %1542 = vmatpush1.msra.mxu0 0.0
        %1543 = vmatprep.subr.mxu0 0.0
        %1544 = vmatpush1.msra.mxu0 0.0
        %1545 = vmatprep.subr.mxu0 0.0
        %1546 = vmatpush1.msra.mxu0 0.0
        %1547 = vmatprep.subr.mxu0 0.0
        %1548 = vmatpush1.msra.mxu0 0.0
        %1549 = vmatprep.subr.mxu0 0.0
        %1550 = vmatpush1.msra.mxu0 0.0
        %1551 = vmatprep.subr.mxu0 0.0
        %1552 = vmatpush1.msra.mxu0 0.0
        %1553 = vmatprep.subr.mxu0 0.0
        %1554 = vmatpush1.msra.mxu0 0.0
        %1555 = vmatprep.subr.mxu0 0.0
        %1556 = vmatpush1.msra.mxu0 0.0
        %1557 = vmatprep.subr.mxu0 0.0
        %1558 = vmatpush1.msra.mxu0 0.0
        %1559 = vmatprep.subr.mxu0 0.0
        %1560 = vmatpush1.msra.mxu0 0.0
        %1561 = vmatprep.subr.mxu0 0.0
        %1562 = vmatpush1.msra.mxu0 0.0
        %1563 = vmatprep.subr.mxu0 0.0
        %1564 = vmatpush1.msra.mxu0 0.0
        %1565 = vmatprep.subr.mxu0 0.0
        %1566 = vmatpush1.msra.mxu0 0.0
        %1567 = vmatprep.subr.mxu0 0.0
        %1568 = vmatpush1.msra.mxu0 0.0
        %1569 = vmatprep.subr.mxu0 0.0
        %1570 = vmatpush1.msra.mxu0 0.0
        %1571 = vmatprep.subr.mxu0 0.0
        %1572 = vmatpush1.msra.mxu0 0.0
        %1573 = vmatprep.subr.mxu0 0.0
        %1574 = vmatpush1.msra.mxu0 0.0
        %1575 = vmatprep.subr.mxu0 0.0
        %1576 = vmatpush1.msra.mxu0 0.0
        %1577 = vmatprep.subr.mxu0 0.0
        %1578 = vmatpush1.msra.mxu0 0.0
        %1579 = vmatprep.subr.mxu0 0.0
        %1580 = vmatpush1.msra.mxu0 0.0
        %1581 = vmatprep.subr.mxu0 0.0
        %1582 = vmatpush1.msra.mxu0 0.0
        %1583 = vmatprep.subr.mxu0 0.0
        %1584 = vmatpush1.msra.mxu0 0.0
        %1585 = vmatprep.subr.mxu0 0.0
        %1586 = vmatpush1.msra.mxu0 0.0
        %1587 = vmatprep.mubr.f32.mxu0 0.0
        %1588 = vmatmul.mubr.f32.gmra.mrb[0].mxu0 %v978
        %v1589 = vpop.f32.mrb[0].mxu0
        %v1590 = vadd.f32 0.0, %v1589
        %v1591 = vpop.f32.mrb[0].mxu0
        %v1592 = vadd.f32 0.0, %v1591
        %1593 = vmatprep.mubr.f32.mxu0 0.0
        %1594 = vmatmul.mubr.f32.gmra.mrb[0].mxu0 %v981
        %v1595 = vpop.f32.mrb[0].mxu0
        %v1596 = vadd.f32 0.0, %v1595
        %v1597 = vpop.f32.mrb[0].mxu0
        %v1598 = vadd.f32 0.0, %v1597
        %1599 = vmatprep.mubr.f32.mxu0 0.0
        %1600 = vmatmul.mubr.f32.gmra.mrb[0].mxu0 %v984
        %v1601 = vpop.f32.mrb[0].mxu0
        %v1602 = vadd.f32 0.0, %v1601
        %v1603 = vpop.f32.mrb[0].mxu0
        %v1604 = vadd.f32 0.0, %v1603
        %1605 = vmatprep.mubr.f32.mxu0 0.0
        %1606 = vmatmul.mubr.f32.gmra.mrb[0].mxu0 %v987
        %v1607 = vpop.f32.mrb[0].mxu0
        %v1608 = vadd.f32 0.0, %v1607
        %v1609 = vpop.f32.mrb[0].mxu0
        %v1610 = vadd.f32 0.0, %v1609
        %1611 = vdwg.mxu0
        %1612 = vmatprep.subr.mxu0 %v895
        %1613 = vmatpush1.msra.mxu0 %v894
        %1614 = vmatprep.subr.mxu0 %v919
        %1615 = vmatpush1.msra.mxu0 %v918
        %1616 = vmatprep.subr.mxu0 %v943
        %1617 = vmatpush1.msra.mxu0 %v942
        %1618 = vmatprep.subr.mxu0 %v967
        %1619 = vmatpush1.msra.mxu0 %v966
        %1620 = vmatprep.subr.mxu0 0.0
        %1621 = vmatpush1.msra.mxu0 0.0
        %1622 = vmatprep.subr.mxu0 0.0
        %1623 = vmatpush1.msra.mxu0 0.0
        %1624 = vmatprep.subr.mxu0 0.0
        %1625 = vmatpush1.msra.mxu0 0.0
        %1626 = vmatprep.subr.mxu0 0.0
        %1627 = vmatpush1.msra.mxu0 0.0
        %1628 = vmatprep.subr.mxu0 0.0
        %1629 = vmatpush1.msra.mxu0 0.0
        %1630 = vmatprep.subr.mxu0 0.0
        %1631 = vmatpush1.msra.mxu0 0.0
        %1632 = vmatprep.subr.mxu0 0.0
        %1633 = vmatpush1.msra.mxu0 0.0
        %1634 = vmatprep.subr.mxu0 0.0
        %1635 = vmatpush1.msra.mxu0 0.0
        %1636 = vmatprep.subr.mxu0 0.0
        %1637 = vmatpush1.msra.mxu0 0.0
        %1638 = vmatprep.subr.mxu0 0.0
        %1639 = vmatpush1.msra.mxu0 0.0
        %1640 = vmatprep.subr.mxu0 0.0
        %1641 = vmatpush1.msra.mxu0 0.0
        %1642 = vmatprep.subr.mxu0 0.0
        %1643 = vmatpush1.msra.mxu0 0.0
        %1644 = vmatprep.subr.mxu0 0.0
        %1645 = vmatpush1.msra.mxu0 0.0
        %1646 = vmatprep.subr.mxu0 0.0
        %1647 = vmatpush1.msra.mxu0 0.0
        %1648 = vmatprep.subr.mxu0 0.0
        %1649 = vmatpush1.msra.mxu0 0.0
        %1650 = vmatprep.subr.mxu0 0.0
        %1651 = vmatpush1.msra.mxu0 0.0
        %1652 = vmatprep.subr.mxu0 0.0
        %1653 = vmatpush1.msra.mxu0 0.0
        %1654 = vmatprep.subr.mxu0 0.0
        %1655 = vmatpush1.msra.mxu0 0.0
        %1656 = vmatprep.subr.mxu0 0.0
        %1657 = vmatpush1.msra.mxu0 0.0
        %1658 = vmatprep.subr.mxu0 0.0
        %1659 = vmatpush1.msra.mxu0 0.0
        %1660 = vmatprep.subr.mxu0 0.0
        %1661 = vmatpush1.msra.mxu0 0.0
        %1662 = vmatprep.subr.mxu0 0.0
        %1663 = vmatpush1.msra.mxu0 0.0
        %1664 = vmatprep.subr.mxu0 0.0
        %1665 = vmatpush1.msra.mxu0 0.0
        %1666 = vmatprep.subr.mxu0 0.0
        %1667 = vmatpush1.msra.mxu0 0.0
        %1668 = vmatprep.subr.mxu0 0.0
        %1669 = vmatpush1.msra.mxu0 0.0
        %1670 = vmatprep.subr.mxu0 0.0
        %1671 = vmatpush1.msra.mxu0 0.0
        %1672 = vmatprep.subr.mxu0 0.0
        %1673 = vmatpush1.msra.mxu0 0.0
        %1674 = vmatprep.subr.mxu0 0.0
        %1675 = vmatpush1.msra.mxu0 0.0
        %1676 = vmatprep.mubr.f32.mxu0 0.0
        %1677 = vmatmul.mubr.f32.gmra.mrb[0].mxu0 %v978
        %v1678 = vpop.f32.mrb[0].mxu0
        %v1679 = vadd.f32 0.0, %v1678
        %v1680 = vpop.f32.mrb[0].mxu0
        %v1681 = vadd.f32 0.0, %v1680
        %1682 = vmatprep.mubr.f32.mxu0 0.0
        %1683 = vmatmul.mubr.f32.gmra.mrb[0].mxu0 %v981
        %v1684 = vpop.f32.mrb[0].mxu0
        %v1685 = vadd.f32 0.0, %v1684
        %v1686 = vpop.f32.mrb[0].mxu0
        %v1687 = vadd.f32 0.0, %v1686
        %1688 = vmatprep.mubr.f32.mxu0 0.0
        %1689 = vmatmul.mubr.f32.gmra.mrb[0].mxu0 %v984
        %v1690 = vpop.f32.mrb[0].mxu0
        %v1691 = vadd.f32 0.0, %v1690
        %v1692 = vpop.f32.mrb[0].mxu0
        %v1693 = vadd.f32 0.0, %v1692
        %1694 = vmatprep.mubr.f32.mxu0 0.0
        %1695 = vmatmul.mubr.f32.gmra.mrb[0].mxu0 %v987
        %v1696 = vpop.f32.mrb[0].mxu0
        %v1697 = vadd.f32 0.0, %v1696
        %v1698 = vpop.f32.mrb[0].mxu0
        %v1699 = vadd.f32 0.0, %v1698
        %1700 = vdwg.mxu0
        %1701 = vmatprep.subr.mxu0 %v897
        %1702 = vmatpush1.msra.mxu0 %v896
        %1703 = vmatprep.subr.mxu0 %v921
        %1704 = vmatpush1.msra.mxu0 %v920
        %1705 = vmatprep.subr.mxu0 %v945
        %1706 = vmatpush1.msra.mxu0 %v944
        %1707 = vmatprep.subr.mxu0 %v969
        %1708 = vmatpush1.msra.mxu0 %v968
        %1709 = vmatprep.subr.mxu0 0.0
        %1710 = vmatpush1.msra.mxu0 0.0
        %1711 = vmatprep.subr.mxu0 0.0
        %1712 = vmatpush1.msra.mxu0 0.0
        %1713 = vmatprep.subr.mxu0 0.0
        %1714 = vmatpush1.msra.mxu0 0.0
        %1715 = vmatprep.subr.mxu0 0.0
        %1716 = vmatpush1.msra.mxu0 0.0
        %1717 = vmatprep.subr.mxu0 0.0
        %1718 = vmatpush1.msra.mxu0 0.0
        %1719 = vmatprep.subr.mxu0 0.0
        %1720 = vmatpush1.msra.mxu0 0.0
        %1721 = vmatprep.subr.mxu0 0.0
        %1722 = vmatpush1.msra.mxu0 0.0
        %1723 = vmatprep.subr.mxu0 0.0
        %1724 = vmatpush1.msra.mxu0 0.0
        %1725 = vmatprep.subr.mxu0 0.0
        %1726 = vmatpush1.msra.mxu0 0.0
        %1727 = vmatprep.subr.mxu0 0.0
        %1728 = vmatpush1.msra.mxu0 0.0
        %1729 = vmatprep.subr.mxu0 0.0
        %1730 = vmatpush1.msra.mxu0 0.0
        %1731 = vmatprep.subr.mxu0 0.0
        %1732 = vmatpush1.msra.mxu0 0.0
        %1733 = vmatprep.subr.mxu0 0.0
        %1734 = vmatpush1.msra.mxu0 0.0
        %1735 = vmatprep.subr.mxu0 0.0
        %1736 = vmatpush1.msra.mxu0 0.0
        %1737 = vmatprep.subr.mxu0 0.0
        %1738 = vmatpush1.msra.mxu0 0.0
        %1739 = vmatprep.subr.mxu0 0.0
        %1740 = vmatpush1.msra.mxu0 0.0
        %1741 = vmatprep.subr.mxu0 0.0
        %1742 = vmatpush1.msra.mxu0 0.0
        %1743 = vmatprep.subr.mxu0 0.0
        %1744 = vmatpush1.msra.mxu0 0.0
        %1745 = vmatprep.subr.mxu0 0.0
        %1746 = vmatpush1.msra.mxu0 0.0
        %1747 = vmatprep.subr.mxu0 0.0
        %1748 = vmatpush1.msra.mxu0 0.0
        %1749 = vmatprep.subr.mxu0 0.0
        %1750 = vmatpush1.msra.mxu0 0.0
        %1751 = vmatprep.subr.mxu0 0.0
        %1752 = vmatpush1.msra.mxu0 0.0
        %1753 = vmatprep.subr.mxu0 0.0
        %1754 = vmatpush1.msra.mxu0 0.0
        %1755 = vmatprep.subr.mxu0 0.0
        %1756 = vmatpush1.msra.mxu0 0.0
        %1757 = vmatprep.subr.mxu0 0.0
        %1758 = vmatpush1.msra.mxu0 0.0
        %1759 = vmatprep.subr.mxu0 0.0
        %1760 = vmatpush1.msra.mxu0 0.0
        %1761 = vmatprep.subr.mxu0 0.0
        %1762 = vmatpush1.msra.mxu0 0.0
        %1763 = vmatprep.subr.mxu0 0.0
        %1764 = vmatpush1.msra.mxu0 0.0
        %1765 = vmatprep.mubr.f32.mxu0 0.0
        %1766 = vmatmul.mubr.f32.gmra.mrb[0].mxu0 %v978
        %v1767 = vpop.f32.mrb[0].mxu0
        %v1768 = vadd.f32 0.0, %v1767
        %v1769 = vpop.f32.mrb[0].mxu0
        %v1770 = vadd.f32 0.0, %v1769
        %1771 = vmatprep.mubr.f32.mxu0 0.0
        %1772 = vmatmul.mubr.f32.gmra.mrb[0].mxu0 %v981
        %v1773 = vpop.f32.mrb[0].mxu0
        %v1774 = vadd.f32 0.0, %v1773
        %v1775 = vpop.f32.mrb[0].mxu0
        %v1776 = vadd.f32 0.0, %v1775
        %1777 = vmatprep.mubr.f32.mxu0 0.0
        %1778 = vmatmul.mubr.f32.gmra.mrb[0].mxu0 %v984
        %v1779 = vpop.f32.mrb[0].mxu0
        %v1780 = vadd.f32 0.0, %v1779
        %v1781 = vpop.f32.mrb[0].mxu0
        %v1782 = vadd.f32 0.0, %v1781
        %1783 = vmatprep.mubr.f32.mxu0 0.0
        %1784 = vmatmul.mubr.f32.gmra.mrb[0].mxu0 %v987
        %v1785 = vpop.f32.mrb[0].mxu0
        %v1786 = vadd.f32 0.0, %v1785
        %v1787 = vpop.f32.mrb[0].mxu0
        %v1788 = vadd.f32 0.0, %v1787
        %1789 = vdwg.mxu0
        %1790 = vmatprep.subr.mxu0 %v899
        %1791 = vmatpush1.msra.mxu0 %v898
        %1792 = vmatprep.subr.mxu0 %v923
        %1793 = vmatpush1.msra.mxu0 %v922
        %1794 = vmatprep.subr.mxu0 %v947
        %1795 = vmatpush1.msra.mxu0 %v946
        %1796 = vmatprep.subr.mxu0 %v971
        %1797 = vmatpush1.msra.mxu0 %v970
        %1798 = vmatprep.subr.mxu0 0.0
        %1799 = vmatpush1.msra.mxu0 0.0
        %1800 = vmatprep.subr.mxu0 0.0
        %1801 = vmatpush1.msra.mxu0 0.0
        %1802 = vmatprep.subr.mxu0 0.0
        %1803 = vmatpush1.msra.mxu0 0.0
        %1804 = vmatprep.subr.mxu0 0.0
        %1805 = vmatpush1.msra.mxu0 0.0
        %1806 = vmatprep.subr.mxu0 0.0
        %1807 = vmatpush1.msra.mxu0 0.0
        %1808 = vmatprep.subr.mxu0 0.0
        %1809 = vmatpush1.msra.mxu0 0.0
        %1810 = vmatprep.subr.mxu0 0.0
        %1811 = vmatpush1.msra.mxu0 0.0
        %1812 = vmatprep.subr.mxu0 0.0
        %1813 = vmatpush1.msra.mxu0 0.0
        %1814 = vmatprep.subr.mxu0 0.0
        %1815 = vmatpush1.msra.mxu0 0.0
        %1816 = vmatprep.subr.mxu0 0.0
        %1817 = vmatpush1.msra.mxu0 0.0
        %1818 = vmatprep.subr.mxu0 0.0
        %1819 = vmatpush1.msra.mxu0 0.0
        %1820 = vmatprep.subr.mxu0 0.0
        %1821 = vmatpush1.msra.mxu0 0.0
        %1822 = vmatprep.subr.mxu0 0.0
        %1823 = vmatpush1.msra.mxu0 0.0
        %1824 = vmatprep.subr.mxu0 0.0
        %1825 = vmatpush1.msra.mxu0 0.0
        %1826 = vmatprep.subr.mxu0 0.0
        %1827 = vmatpush1.msra.mxu0 0.0
        %1828 = vmatprep.subr.mxu0 0.0
        %1829 = vmatpush1.msra.mxu0 0.0
        %1830 = vmatprep.subr.mxu0 0.0
        %1831 = vmatpush1.msra.mxu0 0.0
        %1832 = vmatprep.subr.mxu0 0.0
        %1833 = vmatpush1.msra.mxu0 0.0
        %1834 = vmatprep.subr.mxu0 0.0
        %1835 = vmatpush1.msra.mxu0 0.0
        %1836 = vmatprep.subr.mxu0 0.0
        %1837 = vmatpush1.msra.mxu0 0.0
        %1838 = vmatprep.subr.mxu0 0.0
        %1839 = vmatpush1.msra.mxu0 0.0
        %1840 = vmatprep.subr.mxu0 0.0
        %1841 = vmatpush1.msra.mxu0 0.0
        %1842 = vmatprep.subr.mxu0 0.0
        %1843 = vmatpush1.msra.mxu0 0.0
        %1844 = vmatprep.subr.mxu0 0.0
        %1845 = vmatpush1.msra.mxu0 0.0
        %1846 = vmatprep.subr.mxu0 0.0
        %1847 = vmatpush1.msra.mxu0 0.0
        %1848 = vmatprep.subr.mxu0 0.0
        %1849 = vmatpush1.msra.mxu0 0.0
        %1850 = vmatprep.subr.mxu0 0.0
        %1851 = vmatpush1.msra.mxu0 0.0
        %1852 = vmatprep.subr.mxu0 0.0
        %1853 = vmatpush1.msra.mxu0 0.0
        %1854 = vmatprep.mubr.f32.mxu0 0.0
        %1855 = vmatmul.mubr.f32.gmra.mrb[0].mxu0 %v978
        %v1856 = vpop.f32.mrb[0].mxu0
        %v1857 = vadd.f32 0.0, %v1856
        %v1858 = vpop.f32.mrb[0].mxu0
        %v1859 = vadd.f32 0.0, %v1858
        %1860 = vmatprep.mubr.f32.mxu0 0.0
        %1861 = vmatmul.mubr.f32.gmra.mrb[0].mxu0 %v981
        %v1862 = vpop.f32.mrb[0].mxu0
        %v1863 = vadd.f32 0.0, %v1862
        %v1864 = vpop.f32.mrb[0].mxu0
        %v1865 = vadd.f32 0.0, %v1864
        %1866 = vmatprep.mubr.f32.mxu0 0.0
        %1867 = vmatmul.mubr.f32.gmra.mrb[0].mxu0 %v984
        %v1868 = vpop.f32.mrb[0].mxu0
        %v1869 = vadd.f32 0.0, %v1868
        %v1870 = vpop.f32.mrb[0].mxu0
        %v1871 = vadd.f32 0.0, %v1870
        %1872 = vmatprep.mubr.f32.mxu0 0.0
        %1873 = vmatmul.mubr.f32.gmra.mrb[0].mxu0 %v987
        %v1874 = vpop.f32.mrb[0].mxu0
        %v1875 = vadd.f32 0.0, %v1874
        %v1876 = vpop.f32.mrb[0].mxu0
        %v1877 = vadd.f32 0.0, %v1876
        %1878 = vdwg.mxu0
        %1879 = vmatprep.subr.mxu0 %v901
        %1880 = vmatpush1.msra.mxu0 %v900
        %1881 = vmatprep.subr.mxu0 %v925
        %1882 = vmatpush1.msra.mxu0 %v924
        %1883 = vmatprep.subr.mxu0 %v949
        %1884 = vmatpush1.msra.mxu0 %v948
        %1885 = vmatprep.subr.mxu0 %v973
        %1886 = vmatpush1.msra.mxu0 %v972
        %1887 = vmatprep.subr.mxu0 0.0
        %1888 = vmatpush1.msra.mxu0 0.0
        %1889 = vmatprep.subr.mxu0 0.0
        %1890 = vmatpush1.msra.mxu0 0.0
        %1891 = vmatprep.subr.mxu0 0.0
        %1892 = vmatpush1.msra.mxu0 0.0
        %1893 = vmatprep.subr.mxu0 0.0
        %1894 = vmatpush1.msra.mxu0 0.0
        %1895 = vmatprep.subr.mxu0 0.0
        %1896 = vmatpush1.msra.mxu0 0.0
        %1897 = vmatprep.subr.mxu0 0.0
        %1898 = vmatpush1.msra.mxu0 0.0
        %1899 = vmatprep.subr.mxu0 0.0
        %1900 = vmatpush1.msra.mxu0 0.0
        %1901 = vmatprep.subr.mxu0 0.0
        %1902 = vmatpush1.msra.mxu0 0.0
        %1903 = vmatprep.subr.mxu0 0.0
        %1904 = vmatpush1.msra.mxu0 0.0
        %1905 = vmatprep.subr.mxu0 0.0
        %1906 = vmatpush1.msra.mxu0 0.0
        %1907 = vmatprep.subr.mxu0 0.0
        %1908 = vmatpush1.msra.mxu0 0.0
        %1909 = vmatprep.subr.mxu0 0.0
        %1910 = vmatpush1.msra.mxu0 0.0
        %1911 = vmatprep.subr.mxu0 0.0
        %1912 = vmatpush1.msra.mxu0 0.0
        %1913 = vmatprep.subr.mxu0 0.0
        %1914 = vmatpush1.msra.mxu0 0.0
        %1915 = vmatprep.subr.mxu0 0.0
        %1916 = vmatpush1.msra.mxu0 0.0
        %1917 = vmatprep.subr.mxu0 0.0
        %1918 = vmatpush1.msra.mxu0 0.0
        %1919 = vmatprep.subr.mxu0 0.0
        %1920 = vmatpush1.msra.mxu0 0.0
        %1921 = vmatprep.subr.mxu0 0.0
        %1922 = vmatpush1.msra.mxu0 0.0
        %1923 = vmatprep.subr.mxu0 0.0
        %1924 = vmatpush1.msra.mxu0 0.0
        %1925 = vmatprep.subr.mxu0 0.0
        %1926 = vmatpush1.msra.mxu0 0.0
        %1927 = vmatprep.subr.mxu0 0.0
        %1928 = vmatpush1.msra.mxu0 0.0
        %1929 = vmatprep.subr.mxu0 0.0
        %1930 = vmatpush1.msra.mxu0 0.0
        %1931 = vmatprep.subr.mxu0 0.0
        %1932 = vmatpush1.msra.mxu0 0.0
        %1933 = vmatprep.subr.mxu0 0.0
        %1934 = vmatpush1.msra.mxu0 0.0
        %1935 = vmatprep.subr.mxu0 0.0
        %1936 = vmatpush1.msra.mxu0 0.0
        %1937 = vmatprep.subr.mxu0 0.0
        %1938 = vmatpush1.msra.mxu0 0.0
        %1939 = vmatprep.subr.mxu0 0.0
        %1940 = vmatpush1.msra.mxu0 0.0
        %1941 = vmatprep.subr.mxu0 0.0
        %1942 = vmatpush1.msra.mxu0 0.0
        %1943 = vmatprep.mubr.f32.mxu0 0.0
        %1944 = vmatmul.mubr.f32.gmra.mrb[0].mxu0 %v978
        %v1945 = vpop.f32.mrb[0].mxu0
        %v1946 = vadd.f32 0.0, %v1945
        %v1947 = vpop.f32.mrb[0].mxu0
        %v1948 = vadd.f32 0.0, %v1947
        %1949 = vmatprep.mubr.f32.mxu0 0.0
        %1950 = vmatmul.mubr.f32.gmra.mrb[0].mxu0 %v981
        %v1951 = vpop.f32.mrb[0].mxu0
        %v1952 = vadd.f32 0.0, %v1951
        %v1953 = vpop.f32.mrb[0].mxu0
        %v1954 = vadd.f32 0.0, %v1953
        %1955 = vmatprep.mubr.f32.mxu0 0.0
        %1956 = vmatmul.mubr.f32.gmra.mrb[0].mxu0 %v984
        %v1957 = vpop.f32.mrb[0].mxu0
        %v1958 = vadd.f32 0.0, %v1957
        %v1959 = vpop.f32.mrb[0].mxu0
        %v1960 = vadd.f32 0.0, %v1959
        %1961 = vmatprep.mubr.f32.mxu0 0.0
        %1962 = vmatmul.mubr.f32.gmra.mrb[0].mxu0 %v987
        %v1963 = vpop.f32.mrb[0].mxu0
        %v1964 = vadd.f32 0.0, %v1963
        %v1965 = vpop.f32.mrb[0].mxu0
        %v1966 = vadd.f32 0.0, %v1965
        %1967 = vdwg.mxu0
        %1968 = vmatprep.subr.mxu0 %v903
        %1969 = vmatpush1.msra.mxu0 %v902
        %1970 = vmatprep.subr.mxu0 %v927
        %1971 = vmatpush1.msra.mxu0 %v926
        %1972 = vmatprep.subr.mxu0 %v951
        %1973 = vmatpush1.msra.mxu0 %v950
        %1974 = vmatprep.subr.mxu0 %v975
        %1975 = vmatpush1.msra.mxu0 %v974
        %1976 = vmatprep.subr.mxu0 0.0
        %1977 = vmatpush1.msra.mxu0 0.0
        %1978 = vmatprep.subr.mxu0 0.0
        %1979 = vmatpush1.msra.mxu0 0.0
        %1980 = vmatprep.subr.mxu0 0.0
        %1981 = vmatpush1.msra.mxu0 0.0
        %1982 = vmatprep.subr.mxu0 0.0
        %1983 = vmatpush1.msra.mxu0 0.0
        %1984 = vmatprep.subr.mxu0 0.0
        %1985 = vmatpush1.msra.mxu0 0.0
        %1986 = vmatprep.subr.mxu0 0.0
        %1987 = vmatpush1.msra.mxu0 0.0
        %1988 = vmatprep.subr.mxu0 0.0
        %1989 = vmatpush1.msra.mxu0 0.0
        %1990 = vmatprep.subr.mxu0 0.0
        %1991 = vmatpush1.msra.mxu0 0.0
        %1992 = vmatprep.subr.mxu0 0.0
        %1993 = vmatpush1.msra.mxu0 0.0
        %1994 = vmatprep.subr.mxu0 0.0
        %1995 = vmatpush1.msra.mxu0 0.0
        %1996 = vmatprep.subr.mxu0 0.0
        %1997 = vmatpush1.msra.mxu0 0.0
        %1998 = vmatprep.subr.mxu0 0.0
        %1999 = vmatpush1.msra.mxu0 0.0
        %2000 = vmatprep.subr.mxu0 0.0
        %2001 = vmatpush1.msra.mxu0 0.0
        %2002 = vmatprep.subr.mxu0 0.0
        %2003 = vmatpush1.msra.mxu0 0.0
        %2004 = vmatprep.subr.mxu0 0.0
        %2005 = vmatpush1.msra.mxu0 0.0
        %2006 = vmatprep.subr.mxu0 0.0
        %2007 = vmatpush1.msra.mxu0 0.0
        %2008 = vmatprep.subr.mxu0 0.0
        %2009 = vmatpush1.msra.mxu0 0.0
        %2010 = vmatprep.subr.mxu0 0.0
        %2011 = vmatpush1.msra.mxu0 0.0
        %2012 = vmatprep.subr.mxu0 0.0
        %2013 = vmatpush1.msra.mxu0 0.0
        %2014 = vmatprep.subr.mxu0 0.0
        %2015 = vmatpush1.msra.mxu0 0.0
        %2016 = vmatprep.subr.mxu0 0.0
        %2017 = vmatpush1.msra.mxu0 0.0
        %2018 = vmatprep.subr.mxu0 0.0
        %2019 = vmatpush1.msra.mxu0 0.0
        %2020 = vmatprep.subr.mxu0 0.0
        %2021 = vmatpush1.msra.mxu0 0.0
        %2022 = vmatprep.subr.mxu0 0.0
        %2023 = vmatpush1.msra.mxu0 0.0
        %2024 = vmatprep.subr.mxu0 0.0
        %2025 = vmatpush1.msra.mxu0 0.0
        %2026 = vmatprep.subr.mxu0 0.0
        %2027 = vmatpush1.msra.mxu0 0.0
        %2028 = vmatprep.subr.mxu0 0.0
        %2029 = vmatpush1.msra.mxu0 0.0
        %2030 = vmatprep.subr.mxu0 0.0
        %2031 = vmatpush1.msra.mxu0 0.0
        %2032 = vmatprep.mubr.f32.mxu0 0.0
        %2033 = vmatmul.mubr.f32.gmra.mrb[0].mxu0 %v978
        %v2034 = vpop.f32.mrb[0].mxu0
        %v2035 = vadd.f32 0.0, %v2034
        %v2036 = vpop.f32.mrb[0].mxu0
        %v2037 = vadd.f32 0.0, %v2036
        %2038 = vmatprep.mubr.f32.mxu0 0.0
        %2039 = vmatmul.mubr.f32.gmra.mrb[0].mxu0 %v981
        %v2040 = vpop.f32.mrb[0].mxu0
        %v2041 = vadd.f32 0.0, %v2040
        %v2042 = vpop.f32.mrb[0].mxu0
        %v2043 = vadd.f32 0.0, %v2042
        %2044 = vmatprep.mubr.f32.mxu0 0.0
        %2045 = vmatmul.mubr.f32.gmra.mrb[0].mxu0 %v984
        %v2046 = vpop.f32.mrb[0].mxu0
        %v2047 = vadd.f32 0.0, %v2046
        %v2048 = vpop.f32.mrb[0].mxu0
        %v2049 = vadd.f32 0.0, %v2048
        %2050 = vmatprep.mubr.f32.mxu0 0.0
        %2051 = vmatmul.mubr.f32.gmra.mrb[0].mxu0 %v987
        %v2052 = vpop.f32.mrb[0].mxu0
        %v2053 = vadd.f32 0.0, %v2052
        %v2054 = vpop.f32.mrb[0].mxu0
        %v2055 = vadd.f32 0.0, %v2054
        %2056 = vdwg.mxu0
        %v2057 = vld [vmem:[%s4] sm:$0xff]
        %v2058 = vld [vmem:[%s4 + $0x8] sm:$0xff]
        %v2059 = vld [vmem:[%s4 + $0x10] sm:$0xff]
        %v2060 = vld [vmem:[%s4 + $0x18] sm:$0xff]
        %2062 = vset.pattern.permute.xlu0 0
        %2063 = vperm.xlu0 %2062, %v2057
        %v2064 = vpop.permute.xlu0 %2063
        %2067 = vset.pattern.permute.xlu0 0
        %2068 = vperm.xlu0 %2067, %v2058
        %v2069 = vpop.permute.xlu0 %2068
        %2072 = vset.pattern.permute.xlu0 0
        %2073 = vperm.xlu0 %2072, %v2059
        %v2074 = vpop.permute.xlu0 %2073
        %2077 = vset.pattern.permute.xlu0 0
        %2078 = vperm.xlu0 %2077, %v2060
        %v2079 = vpop.permute.xlu0 %2078
        %v2081 = vadd.f32 %v1056, %v2064
        %v2082 = vadd.f32 %v1058, %v2064
        %v2083 = vadd.f32 %v1145, %v2064
        %v2084 = vadd.f32 %v1147, %v2064
        %v2085 = vadd.f32 %v1234, %v2064
        %v2086 = vadd.f32 %v1236, %v2064
        %v2087 = vadd.f32 %v1323, %v2064
        %v2088 = vadd.f32 %v1325, %v2064
        %v2089 = vadd.f32 %v1062, %v2069
        %v2090 = vadd.f32 %v1064, %v2069
        %v2091 = vadd.f32 %v1151, %v2069
        %v2092 = vadd.f32 %v1153, %v2069
        %v2093 = vadd.f32 %v1240, %v2069
        %v2094 = vadd.f32 %v1242, %v2069
        %v2095 = vadd.f32 %v1329, %v2069
        %v2096 = vadd.f32 %v1331, %v2069
        %v2097 = vadd.f32 %v1068, %v2074
        %v2098 = vadd.f32 %v1070, %v2074
        %v2099 = vadd.f32 %v1157, %v2074
        %v2100 = vadd.f32 %v1159, %v2074
        %v2101 = vadd.f32 %v1246, %v2074
        %v2102 = vadd.f32 %v1248, %v2074
        %v2103 = vadd.f32 %v1335, %v2074
        %v2104 = vadd.f32 %v1337, %v2074
        %v2105 = vadd.f32 %v1074, %v2079
        %v2106 = vadd.f32 %v1076, %v2079
        %v2107 = vadd.f32 %v1163, %v2079
        %v2108 = vadd.f32 %v1165, %v2079
        %v2109 = vadd.f32 %v1252, %v2079
        %v2110 = vadd.f32 %v1254, %v2079
        %v2111 = vadd.f32 %v1341, %v2079
        %v2112 = vadd.f32 %v1343, %v2079
        %v2113 = vtanh.pop %v2081
        %v2114 = vtanh.pop %v2082
        %v2115 = vtanh.pop %v2083
        %v2116 = vtanh.pop %v2084
        %v2117 = vtanh.pop %v2085
        %v2118 = vtanh.pop %v2086
        %v2119 = vtanh.pop %v2087
        %v2120 = vtanh.pop %v2088
        %v2121 = vtanh.pop %v2089
        %v2122 = vtanh.pop %v2090
        %v2123 = vtanh.pop %v2091
        %v2124 = vtanh.pop %v2092
        %v2125 = vtanh.pop %v2093
        %v2126 = vtanh.pop %v2094
        %v2127 = vtanh.pop %v2095
        %v2128 = vtanh.pop %v2096
        %v2129 = vtanh.pop %v2097
        %v2130 = vtanh.pop %v2098
        %v2131 = vtanh.pop %v2099
        %v2132 = vtanh.pop %v2100
        %v2133 = vtanh.pop %v2101
        %v2134 = vtanh.pop %v2102
        %v2135 = vtanh.pop %v2103
        %v2136 = vtanh.pop %v2104
        %v2137 = vtanh.pop %v2105
        %v2138 = vtanh.pop %v2106
        %v2139 = vtanh.pop %v2107
        %v2140 = vtanh.pop %v2108
        %v2141 = vtanh.pop %v2109
        %v2142 = vtanh.pop %v2110
        %v2143 = vtanh.pop %v2111
        %v2144 = vtanh.pop %v2112
        %v2145 = vmul.f32 %v2113, %v2113
        %v2146 = vmul.f32 %v2114, %v2114
        %v2147 = vmul.f32 %v2115, %v2115
        %v2148 = vmul.f32 %v2116, %v2116
        %v2149 = vmul.f32 %v2117, %v2117
        %v2150 = vmul.f32 %v2118, %v2118
        %v2151 = vmul.f32 %v2119, %v2119
        %v2152 = vmul.f32 %v2120, %v2120
        %v2153 = vmul.f32 %v2121, %v2121
        %v2154 = vmul.f32 %v2122, %v2122
        %v2155 = vmul.f32 %v2123, %v2123
        %v2156 = vmul.f32 %v2124, %v2124
        %v2157 = vmul.f32 %v2125, %v2125
        %v2158 = vmul.f32 %v2126, %v2126
        %v2159 = vmul.f32 %v2127, %v2127
        %v2160 = vmul.f32 %v2128, %v2128
        %v2161 = vmul.f32 %v2129, %v2129
        %v2162 = vmul.f32 %v2130, %v2130
        %v2163 = vmul.f32 %v2131, %v2131
        %v2164 = vmul.f32 %v2132, %v2132
        %v2165 = vmul.f32 %v2133, %v2133
        %v2166 = vmul.f32 %v2134, %v2134
        %v2167 = vmul.f32 %v2135, %v2135
        %v2168 = vmul.f32 %v2136, %v2136
        %v2169 = vmul.f32 %v2137, %v2137
        %v2170 = vmul.f32 %v2138, %v2138
        %v2171 = vmul.f32 %v2139, %v2139
        %v2172 = vmul.f32 %v2140, %v2140
        %v2173 = vmul.f32 %v2141, %v2141
        %v2174 = vmul.f32 %v2142, %v2142
        %v2175 = vmul.f32 %v2143, %v2143
        %v2176 = vmul.f32 %v2144, %v2144
        %v2177 = vsub.f32 1.0, %v2145
        %v2178 = vsub.f32 1.0, %v2146
        %v2179 = vsub.f32 1.0, %v2147
        %v2180 = vsub.f32 1.0, %v2148
        %v2181 = vsub.f32 1.0, %v2149
        %v2182 = vsub.f32 1.0, %v2150
        %v2183 = vsub.f32 1.0, %v2151
        %v2184 = vsub.f32 1.0, %v2152
        %v2185 = vsub.f32 1.0, %v2153
        %v2186 = vsub.f32 1.0, %v2154
        %v2187 = vsub.f32 1.0, %v2155
        %v2188 = vsub.f32 1.0, %v2156
        %v2189 = vsub.f32 1.0, %v2157
        %v2190 = vsub.f32 1.0, %v2158
        %v2191 = vsub.f32 1.0, %v2159
        %v2192 = vsub.f32 1.0, %v2160
        %v2193 = vsub.f32 1.0, %v2161
        %v2194 = vsub.f32 1.0, %v2162
        %v2195 = vsub.f32 1.0, %v2163
        %v2196 = vsub.f32 1.0, %v2164
        %v2197 = vsub.f32 1.0, %v2165
        %v2198 = vsub.f32 1.0, %v2166
        %v2199 = vsub.f32 1.0, %v2167
        %v2200 = vsub.f32 1.0, %v2168
        %v2201 = vsub.f32 1.0, %v2169
        %v2202 = vsub.f32 1.0, %v2170
        %v2203 = vsub.f32 1.0, %v2171
        %v2204 = vsub.f32 1.0, %v2172
        %v2205 = vsub.f32 1.0, %v2173
        %v2206 = vsub.f32 1.0, %v2174
        %v2207 = vsub.f32 1.0, %v2175
        %v2208 = vsub.f32 1.0, %v2176
        %2209 = vst [vmem:[#allocation3] sm:$0xff] %v2113
        %2210 = vst [vmem:[#allocation3 + $0x8] sm:$0xff] %v2114
        %2211 = vst [vmem:[#allocation3 + $0x10] sm:$0xff] %v2115
        %2212 = vst [vmem:[#allocation3 + $0x18] sm:$0xff] %v2116
        %2213 = vst [vmem:[#allocation3 + $0x20] sm:$0xff] %v2117
        %2214 = vst [vmem:[#allocation3 + $0x28] sm:$0xff] %v2118
        %2215 = vst [vmem:[#allocation3 + $0x30] sm:$0xff] %v2119
        %2216 = vst [vmem:[#allocation3 + $0x38] sm:$0xff] %v2120
        %2217 = vst [vmem:[#allocation3 + $0xc0] sm:$0xff] %v2121
        %2218 = vst [vmem:[#allocation3 + $0xc8] sm:$0xff] %v2122
        %2219 = vst [vmem:[#allocation3 + $0xd0] sm:$0xff] %v2123
        %2220 = vst [vmem:[#allocation3 + $0xd8] sm:$0xff] %v2124
        %2221 = vst [vmem:[#allocation3 + $0xe0] sm:$0xff] %v2125
        %2222 = vst [vmem:[#allocation3 + $0xe8] sm:$0xff] %v2126
        %2223 = vst [vmem:[#allocation3 + $0xf0] sm:$0xff] %v2127
        %2224 = vst [vmem:[#allocation3 + $0xf8] sm:$0xff] %v2128
        %2225 = vst [vmem:[#allocation3 + $0x180] sm:$0xff] %v2129
        %2226 = vst [vmem:[#allocation3 + $0x188] sm:$0xff] %v2130
        %2227 = vst [vmem:[#allocation3 + $0x190] sm:$0xff] %v2131
        %2228 = vst [vmem:[#allocation3 + $0x198] sm:$0xff] %v2132
        %2229 = vst [vmem:[#allocation3 + $0x1a0] sm:$0xff] %v2133
        %2230 = vst [vmem:[#allocation3 + $0x1a8] sm:$0xff] %v2134
        %2231 = vst [vmem:[#allocation3 + $0x1b0] sm:$0xff] %v2135
        %2232 = vst [vmem:[#allocation3 + $0x1b8] sm:$0xff] %v2136
        %2233 = vst [vmem:[#allocation3 + $0x240] sm:$0xff] %v2137
        %2234 = vst [vmem:[#allocation3 + $0x248] sm:$0xff] %v2138
        %2235 = vst [vmem:[#allocation3 + $0x250] sm:$0xff] %v2139
        %2236 = vst [vmem:[#allocation3 + $0x258] sm:$0xff] %v2140
        %2237 = vst [vmem:[#allocation3 + $0x260] sm:$0xff] %v2141
        %2238 = vst [vmem:[#allocation3 + $0x268] sm:$0xff] %v2142
        %2239 = vst [vmem:[#allocation3 + $0x270] sm:$0xff] %v2143
        %2240 = vst [vmem:[#allocation3 + $0x278] sm:$0xff] %v2144
        %v2241 = vmul.f32 %v2177, %v1412
        %v2242 = vmul.f32 %v2178, %v1414
        %v2243 = vmul.f32 %v2179, %v1501
        %v2244 = vmul.f32 %v2180, %v1503
        %v2245 = vmul.f32 %v2181, %v1590
        %v2246 = vmul.f32 %v2182, %v1592
        %v2247 = vmul.f32 %v2183, %v1679
        %v2248 = vmul.f32 %v2184, %v1681
        %v2249 = vmul.f32 %v2185, %v1418
        %v2250 = vmul.f32 %v2186, %v1420
        %v2251 = vmul.f32 %v2187, %v1507
        %v2252 = vmul.f32 %v2188, %v1509
        %v2253 = vmul.f32 %v2189, %v1596
        %v2254 = vmul.f32 %v2190, %v1598
        %v2255 = vmul.f32 %v2191, %v1685
        %v2256 = vmul.f32 %v2192, %v1687
        %v2257 = vmul.f32 %v2193, %v1424
        %v2258 = vmul.f32 %v2194, %v1426
        %v2259 = vmul.f32 %v2195, %v1513
        %v2260 = vmul.f32 %v2196, %v1515
        %v2261 = vmul.f32 %v2197, %v1602
        %v2262 = vmul.f32 %v2198, %v1604
        %v2263 = vmul.f32 %v2199, %v1691
        %v2264 = vmul.f32 %v2200, %v1693
        %v2265 = vmul.f32 %v2201, %v1430
        %v2266 = vmul.f32 %v2202, %v1432
        %v2267 = vmul.f32 %v2203, %v1519
        %v2268 = vmul.f32 %v2204, %v1521
        %v2269 = vmul.f32 %v2205, %v1608
        %v2270 = vmul.f32 %v2206, %v1610
        %v2271 = vmul.f32 %v2207, %v1697
        %v2272 = vmul.f32 %v2208, %v1699
        %2273 = vst [vmem:[#allocation3 + $0x40] sm:$0xff] %v2241
        %2274 = vst [vmem:[#allocation3 + $0x48] sm:$0xff] %v2242
        %2275 = vst [vmem:[#allocation3 + $0x50] sm:$0xff] %v2243
        %2276 = vst [vmem:[#allocation3 + $0x58] sm:$0xff] %v2244
        %2277 = vst [vmem:[#allocation3 + $0x60] sm:$0xff] %v2245
        %2278 = vst [vmem:[#allocation3 + $0x68] sm:$0xff] %v2246
        %2279 = vst [vmem:[#allocation3 + $0x70] sm:$0xff] %v2247
        %2280 = vst [vmem:[#allocation3 + $0x78] sm:$0xff] %v2248
        %2281 = vst [vmem:[#allocation3 + $0x100] sm:$0xff] %v2249
        %2282 = vst [vmem:[#allocation3 + $0x108] sm:$0xff] %v2250
        %2283 = vst [vmem:[#allocation3 + $0x110] sm:$0xff] %v2251
        %2284 = vst [vmem:[#allocation3 + $0x118] sm:$0xff] %v2252
        %2285 = vst [vmem:[#allocation3 + $0x120] sm:$0xff] %v2253
        %2286 = vst [vmem:[#allocation3 + $0x128] sm:$0xff] %v2254
        %2287 = vst [vmem:[#allocation3 + $0x130] sm:$0xff] %v2255
        %2288 = vst [vmem:[#allocation3 + $0x138] sm:$0xff] %v2256
        %2289 = vst [vmem:[#allocation3 + $0x1c0] sm:$0xff] %v2257
        %2290 = vst [vmem:[#allocation3 + $0x1c8] sm:$0xff] %v2258
        %2291 = vst [vmem:[#allocation3 + $0x1d0] sm:$0xff] %v2259
        %2292 = vst [vmem:[#allocation3 + $0x1d8] sm:$0xff] %v2260
        %2293 = vst [vmem:[#allocation3 + $0x1e0] sm:$0xff] %v2261
        %2294 = vst [vmem:[#allocation3 + $0x1e8] sm:$0xff] %v2262
        %2295 = vst [vmem:[#allocation3 + $0x1f0] sm:$0xff] %v2263
        %2296 = vst [vmem:[#allocation3 + $0x1f8] sm:$0xff] %v2264
        %2297 = vst [vmem:[#allocation3 + $0x280] sm:$0xff] %v2265
        %2298 = vst [vmem:[#allocation3 + $0x288] sm:$0xff] %v2266
        %2299 = vst [vmem:[#allocation3 + $0x290] sm:$0xff] %v2267
        %2300 = vst [vmem:[#allocation3 + $0x298] sm:$0xff] %v2268
        %2301 = vst [vmem:[#allocation3 + $0x2a0] sm:$0xff] %v2269
        %2302 = vst [vmem:[#allocation3 + $0x2a8] sm:$0xff] %v2270
        %2303 = vst [vmem:[#allocation3 + $0x2b0] sm:$0xff] %v2271
        %2304 = vst [vmem:[#allocation3 + $0x2b8] sm:$0xff] %v2272
        %v2305 = vmul.f32 %v2177, %v1768
        %v2306 = vmul.f32 %v2178, %v1770
        %v2307 = vmul.f32 %v2179, %v1857
        %v2308 = vmul.f32 %v2180, %v1859
        %v2309 = vmul.f32 %v2181, %v1946
        %v2310 = vmul.f32 %v2182, %v1948
        %v2311 = vmul.f32 %v2183, %v2035
        %v2312 = vmul.f32 %v2184, %v2037
        %v2313 = vmul.f32 %v2185, %v1774
        %v2314 = vmul.f32 %v2186, %v1776
        %v2315 = vmul.f32 %v2187, %v1863
        %v2316 = vmul.f32 %v2188, %v1865
        %v2317 = vmul.f32 %v2189, %v1952
        %v2318 = vmul.f32 %v2190, %v1954
        %v2319 = vmul.f32 %v2191, %v2041
        %v2320 = vmul.f32 %v2192, %v2043
        %v2321 = vmul.f32 %v2193, %v1780
        %v2322 = vmul.f32 %v2194, %v1782
        %v2323 = vmul.f32 %v2195, %v1869
        %v2324 = vmul.f32 %v2196, %v1871
        %v2325 = vmul.f32 %v2197, %v1958
        %v2326 = vmul.f32 %v2198, %v1960
        %v2327 = vmul.f32 %v2199, %v2047
        %v2328 = vmul.f32 %v2200, %v2049
        %v2329 = vmul.f32 %v2201, %v1786
        %v2330 = vmul.f32 %v2202, %v1788
        %v2331 = vmul.f32 %v2203, %v1875
        %v2332 = vmul.f32 %v2204, %v1877
        %v2333 = vmul.f32 %v2205, %v1964
        %v2334 = vmul.f32 %v2206, %v1966
        %v2335 = vmul.f32 %v2207, %v2053
        %v2336 = vmul.f32 %v2208, %v2055
        %2337 = vst [vmem:[#allocation3 + $0x80] sm:$0xff] %v2305
        %2338 = vst [vmem:[#allocation3 + $0x88] sm:$0xff] %v2306
        %2339 = vst [vmem:[#allocation3 + $0x90] sm:$0xff] %v2307
        %2340 = vst [vmem:[#allocation3 + $0x98] sm:$0xff] %v2308
        %2341 = vst [vmem:[#allocation3 + $0xa0] sm:$0xff] %v2309
        %2342 = vst [vmem:[#allocation3 + $0xa8] sm:$0xff] %v2310
        %2343 = vst [vmem:[#allocation3 + $0xb0] sm:$0xff] %v2311
        %2344 = vst [vmem:[#allocation3 + $0xb8] sm:$0xff] %v2312
        %2345 = vst [vmem:[#allocation3 + $0x140] sm:$0xff] %v2313
        %2346 = vst [vmem:[#allocation3 + $0x148] sm:$0xff] %v2314
        %2347 = vst [vmem:[#allocation3 + $0x150] sm:$0xff] %v2315
        %2348 = vst [vmem:[#allocation3 + $0x158] sm:$0xff] %v2316
        %2349 = vst [vmem:[#allocation3 + $0x160] sm:$0xff] %v2317
        %2350 = vst [vmem:[#allocation3 + $0x168] sm:$0xff] %v2318
        %2351 = vst [vmem:[#allocation3 + $0x170] sm:$0xff] %v2319
        %2352 = vst [vmem:[#allocation3 + $0x178] sm:$0xff] %v2320
        %2353 = vst [vmem:[#allocation3 + $0x200] sm:$0xff] %v2321
        %2354 = vst [vmem:[#allocation3 + $0x208] sm:$0xff] %v2322
        %2355 = vst [vmem:[#allocation3 + $0x210] sm:$0xff] %v2323
        %2356 = vst [vmem:[#allocation3 + $0x218] sm:$0xff] %v2324
        %2357 = vst [vmem:[#allocation3 + $0x220] sm:$0xff] %v2325
        %2358 = vst [vmem:[#allocation3 + $0x228] sm:$0xff] %v2326
        %2359 = vst [vmem:[#allocation3 + $0x230] sm:$0xff] %v2327
        %2360 = vst [vmem:[#allocation3 + $0x238] sm:$0xff] %v2328
        %2361 = vst [vmem:[#allocation3 + $0x2c0] sm:$0xff] %v2329
        %2362 = vst [vmem:[#allocation3 + $0x2c8] sm:$0xff] %v2330
        %2363 = vst [vmem:[#allocation3 + $0x2d0] sm:$0xff] %v2331
        %2364 = vst [vmem:[#allocation3 + $0x2d8] sm:$0xff] %v2332
        %2365 = vst [vmem:[#allocation3 + $0x2e0] sm:$0xff] %v2333
        %2366 = vst [vmem:[#allocation3 + $0x2e8] sm:$0xff] %v2334
        %2367 = vst [vmem:[#allocation3 + $0x2f0] sm:$0xff] %v2335
        %2368 = vst [vmem:[#allocation3 + $0x2f8] sm:$0xff] %v2336
        %v2369 = vld [vmem:[%s5] sm:$0xff]
        %v2370 = vld [vmem:[#allocation3] sm:$0xff]
        %v2371 = vld [vmem:[#allocation3 + $0x8] sm:$0xff]
        %v2372 = vld [vmem:[#allocation3 + $0x10] sm:$0xff]
        %v2373 = vld [vmem:[#allocation3 + $0x18] sm:$0xff]
        %v2374 = vld [vmem:[#allocation3 + $0x20] sm:$0xff]
        %v2375 = vld [vmem:[#allocation3 + $0x28] sm:$0xff]
        %v2376 = vld [vmem:[#allocation3 + $0x30] sm:$0xff]
        %v2377 = vld [vmem:[#allocation3 + $0x38] sm:$0xff]
        %v2378 = vld [vmem:[#allocation3 + $0x40] sm:$0xff]
        %v2379 = vld [vmem:[#allocation3 + $0x48] sm:$0xff]
        %v2380 = vld [vmem:[#allocation3 + $0x50] sm:$0xff]
        %v2381 = vld [vmem:[#allocation3 + $0x58] sm:$0xff]
        %v2382 = vld [vmem:[#allocation3 + $0x60] sm:$0xff]
        %v2383 = vld [vmem:[#allocation3 + $0x68] sm:$0xff]
        %v2384 = vld [vmem:[#allocation3 + $0x70] sm:$0xff]
        %v2385 = vld [vmem:[#allocation3 + $0x78] sm:$0xff]
        %v2386 = vld [vmem:[#allocation3 + $0x80] sm:$0xff]
        %v2387 = vld [vmem:[#allocation3 + $0x88] sm:$0xff]
        %v2388 = vld [vmem:[#allocation3 + $0x90] sm:$0xff]
        %v2389 = vld [vmem:[#allocation3 + $0x98] sm:$0xff]
        %v2390 = vld [vmem:[#allocation3 + $0xa0] sm:$0xff]
        %v2391 = vld [vmem:[#allocation3 + $0xa8] sm:$0xff]
        %v2392 = vld [vmem:[#allocation3 + $0xb0] sm:$0xff]
        %v2393 = vld [vmem:[#allocation3 + $0xb8] sm:$0xff]
        %v2394 = vld [vmem:[#allocation3 + $0xc0] sm:$0xff]
        %v2395 = vld [vmem:[#allocation3 + $0xc8] sm:$0xff]
        %v2396 = vld [vmem:[#allocation3 + $0xd0] sm:$0xff]
        %v2397 = vld [vmem:[#allocation3 + $0xd8] sm:$0xff]
        %v2398 = vld [vmem:[#allocation3 + $0xe0] sm:$0xff]
        %v2399 = vld [vmem:[#allocation3 + $0xe8] sm:$0xff]
        %v2400 = vld [vmem:[#allocation3 + $0xf0] sm:$0xff]
        %v2401 = vld [vmem:[#allocation3 + $0xf8] sm:$0xff]
        %v2402 = vld [vmem:[#allocation3 + $0x100] sm:$0xff]
        %v2403 = vld [vmem:[#allocation3 + $0x108] sm:$0xff]
        %v2404 = vld [vmem:[#allocation3 + $0x110] sm:$0xff]
        %v2405 = vld [vmem:[#allocation3 + $0x118] sm:$0xff]
        %v2406 = vld [vmem:[#allocation3 + $0x120] sm:$0xff]
        %v2407 = vld [vmem:[#allocation3 + $0x128] sm:$0xff]
        %v2408 = vld [vmem:[#allocation3 + $0x130] sm:$0xff]
        %v2409 = vld [vmem:[#allocation3 + $0x138] sm:$0xff]
        %v2410 = vld [vmem:[#allocation3 + $0x140] sm:$0xff]
        %v2411 = vld [vmem:[#allocation3 + $0x148] sm:$0xff]
        %v2412 = vld [vmem:[#allocation3 + $0x150] sm:$0xff]
        %v2413 = vld [vmem:[#allocation3 + $0x158] sm:$0xff]
        %v2414 = vld [vmem:[#allocation3 + $0x160] sm:$0xff]
        %v2415 = vld [vmem:[#allocation3 + $0x168] sm:$0xff]
        %v2416 = vld [vmem:[#allocation3 + $0x170] sm:$0xff]
        %v2417 = vld [vmem:[#allocation3 + $0x178] sm:$0xff]
        %v2418 = vld [vmem:[#allocation3 + $0x180] sm:$0xff]
        %v2419 = vld [vmem:[#allocation3 + $0x188] sm:$0xff]
        %v2420 = vld [vmem:[#allocation3 + $0x190] sm:$0xff]
        %v2421 = vld [vmem:[#allocation3 + $0x198] sm:$0xff]
        %v2422 = vld [vmem:[#allocation3 + $0x1a0] sm:$0xff]
        %v2423 = vld [vmem:[#allocation3 + $0x1a8] sm:$0xff]
        %v2424 = vld [vmem:[#allocation3 + $0x1b0] sm:$0xff]
        %v2425 = vld [vmem:[#allocation3 + $0x1b8] sm:$0xff]
        %v2426 = vld [vmem:[#allocation3 + $0x1c0] sm:$0xff]
        %v2427 = vld [vmem:[#allocation3 + $0x1c8] sm:$0xff]
        %v2428 = vld [vmem:[#allocation3 + $0x1d0] sm:$0xff]
        %v2429 = vld [vmem:[#allocation3 + $0x1d8] sm:$0xff]
        %v2430 = vld [vmem:[#allocation3 + $0x1e0] sm:$0xff]
        %v2431 = vld [vmem:[#allocation3 + $0x1e8] sm:$0xff]
        %v2432 = vld [vmem:[#allocation3 + $0x1f0] sm:$0xff]
        %v2433 = vld [vmem:[#allocation3 + $0x1f8] sm:$0xff]
        %v2434 = vld [vmem:[#allocation3 + $0x200] sm:$0xff]
        %v2435 = vld [vmem:[#allocation3 + $0x208] sm:$0xff]
        %v2436 = vld [vmem:[#allocation3 + $0x210] sm:$0xff]
        %v2437 = vld [vmem:[#allocation3 + $0x218] sm:$0xff]
        %v2438 = vld [vmem:[#allocation3 + $0x220] sm:$0xff]
        %v2439 = vld [vmem:[#allocation3 + $0x228] sm:$0xff]
        %v2440 = vld [vmem:[#allocation3 + $0x230] sm:$0xff]
        %v2441 = vld [vmem:[#allocation3 + $0x238] sm:$0xff]
        %v2442 = vld [vmem:[#allocation3 + $0x240] sm:$0xff]
        %v2443 = vld [vmem:[#allocation3 + $0x248] sm:$0xff]
        %v2444 = vld [vmem:[#allocation3 + $0x250] sm:$0xff]
        %v2445 = vld [vmem:[#allocation3 + $0x258] sm:$0xff]
        %v2446 = vld [vmem:[#allocation3 + $0x260] sm:$0xff]
        %v2447 = vld [vmem:[#allocation3 + $0x268] sm:$0xff]
        %v2448 = vld [vmem:[#allocation3 + $0x270] sm:$0xff]
        %v2449 = vld [vmem:[#allocation3 + $0x278] sm:$0xff]
        %v2450 = vld [vmem:[#allocation3 + $0x280] sm:$0xff]
        %v2451 = vld [vmem:[#allocation3 + $0x288] sm:$0xff]
        %v2452 = vld [vmem:[#allocation3 + $0x290] sm:$0xff]
        %v2453 = vld [vmem:[#allocation3 + $0x298] sm:$0xff]
        %v2454 = vld [vmem:[#allocation3 + $0x2a0] sm:$0xff]
        %v2455 = vld [vmem:[#allocation3 + $0x2a8] sm:$0xff]
        %v2456 = vld [vmem:[#allocation3 + $0x2b0] sm:$0xff]
        %v2457 = vld [vmem:[#allocation3 + $0x2b8] sm:$0xff]
        %v2458 = vld [vmem:[#allocation3 + $0x2c0] sm:$0xff]
        %v2459 = vld [vmem:[#allocation3 + $0x2c8] sm:$0xff]
        %v2460 = vld [vmem:[#allocation3 + $0x2d0] sm:$0xff]
        %v2461 = vld [vmem:[#allocation3 + $0x2d8] sm:$0xff]
        %v2462 = vld [vmem:[#allocation3 + $0x2e0] sm:$0xff]
        %v2463 = vld [vmem:[#allocation3 + $0x2e8] sm:$0xff]
        %v2464 = vld [vmem:[#allocation3 + $0x2f0] sm:$0xff]
        %v2465 = vld [vmem:[#allocation3 + $0x2f8] sm:$0xff]
        %v2467 = vsel %vm976, %v2369, 0
        %2469 = vmatprep.subr.mxu0 %v2371
        %2470 = vmatpush1.msra.mxu0 %v2370
        %2471 = vmatprep.subr.mxu0 %v2395
        %2472 = vmatpush1.msra.mxu0 %v2394
        %2473 = vmatprep.subr.mxu0 %v2419
        %2474 = vmatpush1.msra.mxu0 %v2418
        %2475 = vmatprep.subr.mxu0 %v2443
        %2476 = vmatpush1.msra.mxu0 %v2442
        %2477 = vmatprep.subr.mxu0 0.0
        %2478 = vmatpush1.msra.mxu0 0.0
        %2479 = vmatprep.subr.mxu0 0.0
        %2480 = vmatpush1.msra.mxu0 0.0
        %2481 = vmatprep.subr.mxu0 0.0
        %2482 = vmatpush1.msra.mxu0 0.0
        %2483 = vmatprep.subr.mxu0 0.0
        %2484 = vmatpush1.msra.mxu0 0.0
        %2485 = vmatprep.subr.mxu0 0.0
        %2486 = vmatpush1.msra.mxu0 0.0
        %2487 = vmatprep.subr.mxu0 0.0
        %2488 = vmatpush1.msra.mxu0 0.0
        %2489 = vmatprep.subr.mxu0 0.0
        %2490 = vmatpush1.msra.mxu0 0.0
        %2491 = vmatprep.subr.mxu0 0.0
        %2492 = vmatpush1.msra.mxu0 0.0
        %2493 = vmatprep.subr.mxu0 0.0
        %2494 = vmatpush1.msra.mxu0 0.0
        %2495 = vmatprep.subr.mxu0 0.0
        %2496 = vmatpush1.msra.mxu0 0.0
        %2497 = vmatprep.subr.mxu0 0.0
        %2498 = vmatpush1.msra.mxu0 0.0
        %2499 = vmatprep.subr.mxu0 0.0
        %2500 = vmatpush1.msra.mxu0 0.0
        %2501 = vmatprep.subr.mxu0 0.0
        %2502 = vmatpush1.msra.mxu0 0.0
        %2503 = vmatprep.subr.mxu0 0.0
        %2504 = vmatpush1.msra.mxu0 0.0
        %2505 = vmatprep.subr.mxu0 0.0
        %2506 = vmatpush1.msra.mxu0 0.0
        %2507 = vmatprep.subr.mxu0 0.0
        %2508 = vmatpush1.msra.mxu0 0.0
        %2509 = vmatprep.subr.mxu0 0.0
        %2510 = vmatpush1.msra.mxu0 0.0
        %2511 = vmatprep.subr.mxu0 0.0
        %2512 = vmatpush1.msra.mxu0 0.0
        %2513 = vmatprep.subr.mxu0 0.0
        %2514 = vmatpush1.msra.mxu0 0.0
        %2515 = vmatprep.subr.mxu0 0.0
        %2516 = vmatpush1.msra.mxu0 0.0
        %2517 = vmatprep.subr.mxu0 0.0
        %2518 = vmatpush1.msra.mxu0 0.0
        %2519 = vmatprep.subr.mxu0 0.0
        %2520 = vmatpush1.msra.mxu0 0.0
        %2521 = vmatprep.subr.mxu0 0.0
        %2522 = vmatpush1.msra.mxu0 0.0
        %2523 = vmatprep.subr.mxu0 0.0
        %2524 = vmatpush1.msra.mxu0 0.0
        %2525 = vmatprep.subr.mxu0 0.0
        %2526 = vmatpush1.msra.mxu0 0.0
        %2527 = vmatprep.subr.mxu0 0.0
        %2528 = vmatpush1.msra.mxu0 0.0
        %2529 = vmatprep.subr.mxu0 0.0
        %2530 = vmatpush1.msra.mxu0 0.0
        %2531 = vmatprep.subr.mxu0 0.0
        %2532 = vmatpush1.msra.mxu0 0.0
        %2533 = vmatprep.mubr.f32.mxu0 0.0
        %2534 = vmatmul.mubr.f32.gmra.mrb[0].mxu0 %v2467
        %v2535 = vpop.f32.mrb[0].mxu0
        %v2536 = vadd.f32 0.0, %v2535
        %v2537 = vpop.f32.mrb[0].mxu0
        %v2538 = vadd.f32 0.0, %v2537
        %2539 = vdwg.mxu0
        %2540 = vmatprep.subr.mxu0 %v2373
        %2541 = vmatpush1.msra.mxu0 %v2372
        %2542 = vmatprep.subr.mxu0 %v2397
        %2543 = vmatpush1.msra.mxu0 %v2396
        %2544 = vmatprep.subr.mxu0 %v2421
        %2545 = vmatpush1.msra.mxu0 %v2420
        %2546 = vmatprep.subr.mxu0 %v2445
        %2547 = vmatpush1.msra.mxu0 %v2444
        %2548 = vmatprep.subr.mxu0 0.0
        %2549 = vmatpush1.msra.mxu0 0.0
        %2550 = vmatprep.subr.mxu0 0.0
        %2551 = vmatpush1.msra.mxu0 0.0
        %2552 = vmatprep.subr.mxu0 0.0
        %2553 = vmatpush1.msra.mxu0 0.0
        %2554 = vmatprep.subr.mxu0 0.0
        %2555 = vmatpush1.msra.mxu0 0.0
        %2556 = vmatprep.subr.mxu0 0.0
        %2557 = vmatpush1.msra.mxu0 0.0
        %2558 = vmatprep.subr.mxu0 0.0
        %2559 = vmatpush1.msra.mxu0 0.0
        %2560 = vmatprep.subr.mxu0 0.0
        %2561 = vmatpush1.msra.mxu0 0.0
        %2562 = vmatprep.subr.mxu0 0.0
        %2563 = vmatpush1.msra.mxu0 0.0
        %2564 = vmatprep.subr.mxu0 0.0
        %2565 = vmatpush1.msra.mxu0 0.0
        %2566 = vmatprep.subr.mxu0 0.0
        %2567 = vmatpush1.msra.mxu0 0.0
        %2568 = vmatprep.subr.mxu0 0.0
        %2569 = vmatpush1.msra.mxu0 0.0
        %2570 = vmatprep.subr.mxu0 0.0
        %2571 = vmatpush1.msra.mxu0 0.0
        %2572 = vmatprep.subr.mxu0 0.0
        %2573 = vmatpush1.msra.mxu0 0.0
        %2574 = vmatprep.subr.mxu0 0.0
        %2575 = vmatpush1.msra.mxu0 0.0
        %2576 = vmatprep.subr.mxu0 0.0
        %2577 = vmatpush1.msra.mxu0 0.0
        %2578 = vmatprep.subr.mxu0 0.0
        %2579 = vmatpush1.msra.mxu0 0.0
        %2580 = vmatprep.subr.mxu0 0.0
        %2581 = vmatpush1.msra.mxu0 0.0
        %2582 = vmatprep.subr.mxu0 0.0
        %2583 = vmatpush1.msra.mxu0 0.0
        %2584 = vmatprep.subr.mxu0 0.0
        %2585 = vmatpush1.msra.mxu0 0.0
        %2586 = vmatprep.subr.mxu0 0.0
        %2587 = vmatpush1.msra.mxu0 0.0
        %2588 = vmatprep.subr.mxu0 0.0
        %2589 = vmatpush1.msra.mxu0 0.0
        %2590 = vmatprep.subr.mxu0 0.0
        %2591 = vmatpush1.msra.mxu0 0.0
        %2592 = vmatprep.subr.mxu0 0.0
        %2593 = vmatpush1.msra.mxu0 0.0
        %2594 = vmatprep.subr.mxu0 0.0
        %2595 = vmatpush1.msra.mxu0 0.0
        %2596 = vmatprep.subr.mxu0 0.0
        %2597 = vmatpush1.msra.mxu0 0.0
        %2598 = vmatprep.subr.mxu0 0.0
        %2599 = vmatpush1.msra.mxu0 0.0
        %2600 = vmatprep.subr.mxu0 0.0
        %2601 = vmatpush1.msra.mxu0 0.0
        %2602 = vmatprep.subr.mxu0 0.0
        %2603 = vmatpush1.msra.mxu0 0.0
        %2604 = vmatprep.mubr.f32.mxu0 0.0
        %2605 = vmatmul.mubr.f32.gmra.mrb[0].mxu0 %v2467
        %v2606 = vpop.f32.mrb[0].mxu0
        %v2607 = vadd.f32 0.0, %v2606
        %v2608 = vpop.f32.mrb[0].mxu0
        %v2609 = vadd.f32 0.0, %v2608
        %2610 = vdwg.mxu0
        %2611 = vmatprep.subr.mxu0 %v2375
        %2612 = vmatpush1.msra.mxu0 %v2374
        %2613 = vmatprep.subr.mxu0 %v2399
        %2614 = vmatpush1.msra.mxu0 %v2398
        %2615 = vmatprep.subr.mxu0 %v2423
        %2616 = vmatpush1.msra.mxu0 %v2422
        %2617 = vmatprep.subr.mxu0 %v2447
        %2618 = vmatpush1.msra.mxu0 %v2446
        %2619 = vmatprep.subr.mxu0 0.0
        %2620 = vmatpush1.msra.mxu0 0.0
        %2621 = vmatprep.subr.mxu0 0.0
        %2622 = vmatpush1.msra.mxu0 0.0
        %2623 = vmatprep.subr.mxu0 0.0
        %2624 = vmatpush1.msra.mxu0 0.0
        %2625 = vmatprep.subr.mxu0 0.0
        %2626 = vmatpush1.msra.mxu0 0.0
        %2627 = vmatprep.subr.mxu0 0.0
        %2628 = vmatpush1.msra.mxu0 0.0
        %2629 = vmatprep.subr.mxu0 0.0
        %2630 = vmatpush1.msra.mxu0 0.0
        %2631 = vmatprep.subr.mxu0 0.0
        %2632 = vmatpush1.msra.mxu0 0.0
        %2633 = vmatprep.subr.mxu0 0.0
        %2634 = vmatpush1.msra.mxu0 0.0
        %2635 = vmatprep.subr.mxu0 0.0
        %2636 = vmatpush1.msra.mxu0 0.0
        %2637 = vmatprep.subr.mxu0 0.0
        %2638 = vmatpush1.msra.mxu0 0.0
        %2639 = vmatprep.subr.mxu0 0.0
        %2640 = vmatpush1.msra.mxu0 0.0
        %2641 = vmatprep.subr.mxu0 0.0
        %2642 = vmatpush1.msra.mxu0 0.0
        %2643 = vmatprep.subr.mxu0 0.0
        %2644 = vmatpush1.msra.mxu0 0.0
        %2645 = vmatprep.subr.mxu0 0.0
        %2646 = vmatpush1.msra.mxu0 0.0
        %2647 = vmatprep.subr.mxu0 0.0
        %2648 = vmatpush1.msra.mxu0 0.0
        %2649 = vmatprep.subr.mxu0 0.0
        %2650 = vmatpush1.msra.mxu0 0.0
        %2651 = vmatprep.subr.mxu0 0.0
        %2652 = vmatpush1.msra.mxu0 0.0
        %2653 = vmatprep.subr.mxu0 0.0
        %2654 = vmatpush1.msra.mxu0 0.0
        %2655 = vmatprep.subr.mxu0 0.0
        %2656 = vmatpush1.msra.mxu0 0.0
        %2657 = vmatprep.subr.mxu0 0.0
        %2658 = vmatpush1.msra.mxu0 0.0
        %2659 = vmatprep.subr.mxu0 0.0
        %2660 = vmatpush1.msra.mxu0 0.0
        %2661 = vmatprep.subr.mxu0 0.0
        %2662 = vmatpush1.msra.mxu0 0.0
        %2663 = vmatprep.subr.mxu0 0.0
        %2664 = vmatpush1.msra.mxu0 0.0
        %2665 = vmatprep.subr.mxu0 0.0
        %2666 = vmatpush1.msra.mxu0 0.0
        %2667 = vmatprep.subr.mxu0 0.0
        %2668 = vmatpush1.msra.mxu0 0.0
        %2669 = vmatprep.subr.mxu0 0.0
        %2670 = vmatpush1.msra.mxu0 0.0
        %2671 = vmatprep.subr.mxu0 0.0
        %2672 = vmatpush1.msra.mxu0 0.0
        %2673 = vmatprep.subr.mxu0 0.0
        %2674 = vmatpush1.msra.mxu0 0.0
        %2675 = vmatprep.mubr.f32.mxu0 0.0
        %2676 = vmatmul.mubr.f32.gmra.mrb[0].mxu0 %v2467
        %v2677 = vpop.f32.mrb[0].mxu0
        %v2678 = vadd.f32 0.0, %v2677
        %v2679 = vpop.f32.mrb[0].mxu0
        %v2680 = vadd.f32 0.0, %v2679
        %2681 = vdwg.mxu0
        %2682 = vmatprep.subr.mxu0 %v2377
        %2683 = vmatpush1.msra.mxu0 %v2376
        %2684 = vmatprep.subr.mxu0 %v2401
        %2685 = vmatpush1.msra.mxu0 %v2400
        %2686 = vmatprep.subr.mxu0 %v2425
        %2687 = vmatpush1.msra.mxu0 %v2424
        %2688 = vmatprep.subr.mxu0 %v2449
        %2689 = vmatpush1.msra.mxu0 %v2448
        %2690 = vmatprep.subr.mxu0 0.0
        %2691 = vmatpush1.msra.mxu0 0.0
        %2692 = vmatprep.subr.mxu0 0.0
        %2693 = vmatpush1.msra.mxu0 0.0
        %2694 = vmatprep.subr.mxu0 0.0
        %2695 = vmatpush1.msra.mxu0 0.0
        %2696 = vmatprep.subr.mxu0 0.0
        %2697 = vmatpush1.msra.mxu0 0.0
        %2698 = vmatprep.subr.mxu0 0.0
        %2699 = vmatpush1.msra.mxu0 0.0
        %2700 = vmatprep.subr.mxu0 0.0
        %2701 = vmatpush1.msra.mxu0 0.0
        %2702 = vmatprep.subr.mxu0 0.0
        %2703 = vmatpush1.msra.mxu0 0.0
        %2704 = vmatprep.subr.mxu0 0.0
        %2705 = vmatpush1.msra.mxu0 0.0
        %2706 = vmatprep.subr.mxu0 0.0
        %2707 = vmatpush1.msra.mxu0 0.0
        %2708 = vmatprep.subr.mxu0 0.0
        %2709 = vmatpush1.msra.mxu0 0.0
        %2710 = vmatprep.subr.mxu0 0.0
        %2711 = vmatpush1.msra.mxu0 0.0
        %2712 = vmatprep.subr.mxu0 0.0
        %2713 = vmatpush1.msra.mxu0 0.0
        %2714 = vmatprep.subr.mxu0 0.0
        %2715 = vmatpush1.msra.mxu0 0.0
        %2716 = vmatprep.subr.mxu0 0.0
        %2717 = vmatpush1.msra.mxu0 0.0
        %2718 = vmatprep.subr.mxu0 0.0
        %2719 = vmatpush1.msra.mxu0 0.0
        %2720 = vmatprep.subr.mxu0 0.0
        %2721 = vmatpush1.msra.mxu0 0.0
        %2722 = vmatprep.subr.mxu0 0.0
        %2723 = vmatpush1.msra.mxu0 0.0
        %2724 = vmatprep.subr.mxu0 0.0
        %2725 = vmatpush1.msra.mxu0 0.0
        %2726 = vmatprep.subr.mxu0 0.0
        %2727 = vmatpush1.msra.mxu0 0.0
        %2728 = vmatprep.subr.mxu0 0.0
        %2729 = vmatpush1.msra.mxu0 0.0
        %2730 = vmatprep.subr.mxu0 0.0
        %2731 = vmatpush1.msra.mxu0 0.0
        %2732 = vmatprep.subr.mxu0 0.0
        %2733 = vmatpush1.msra.mxu0 0.0
        %2734 = vmatprep.subr.mxu0 0.0
        %2735 = vmatpush1.msra.mxu0 0.0
        %2736 = vmatprep.subr.mxu0 0.0
        %2737 = vmatpush1.msra.mxu0 0.0
        %2738 = vmatprep.subr.mxu0 0.0
        %2739 = vmatpush1.msra.mxu0 0.0
        %2740 = vmatprep.subr.mxu0 0.0
        %2741 = vmatpush1.msra.mxu0 0.0
        %2742 = vmatprep.subr.mxu0 0.0
        %2743 = vmatpush1.msra.mxu0 0.0
        %2744 = vmatprep.subr.mxu0 0.0
        %2745 = vmatpush1.msra.mxu0 0.0
        %2746 = vmatprep.mubr.f32.mxu0 0.0
        %2747 = vmatmul.mubr.f32.gmra.mrb[0].mxu0 %v2467
        %v2748 = vpop.f32.mrb[0].mxu0
        %v2749 = vadd.f32 0.0, %v2748
        %v2750 = vpop.f32.mrb[0].mxu0
        %v2751 = vadd.f32 0.0, %v2750
        %2752 = vdwg.mxu0
        %2753 = vmatprep.subr.mxu0 %v2379
        %2754 = vmatpush1.msra.mxu0 %v2378
        %2755 = vmatprep.subr.mxu0 %v2403
        %2756 = vmatpush1.msra.mxu0 %v2402
        %2757 = vmatprep.subr.mxu0 %v2427
        %2758 = vmatpush1.msra.mxu0 %v2426
        %2759 = vmatprep.subr.mxu0 %v2451
        %2760 = vmatpush1.msra.mxu0 %v2450
        %2761 = vmatprep.subr.mxu0 0.0
        %2762 = vmatpush1.msra.mxu0 0.0
        %2763 = vmatprep.subr.mxu0 0.0
        %2764 = vmatpush1.msra.mxu0 0.0
        %2765 = vmatprep.subr.mxu0 0.0
        %2766 = vmatpush1.msra.mxu0 0.0
        %2767 = vmatprep.subr.mxu0 0.0
        %2768 = vmatpush1.msra.mxu0 0.0
        %2769 = vmatprep.subr.mxu0 0.0
        %2770 = vmatpush1.msra.mxu0 0.0
        %2771 = vmatprep.subr.mxu0 0.0
        %2772 = vmatpush1.msra.mxu0 0.0
        %2773 = vmatprep.subr.mxu0 0.0
        %2774 = vmatpush1.msra.mxu0 0.0
        %2775 = vmatprep.subr.mxu0 0.0
        %2776 = vmatpush1.msra.mxu0 0.0
        %2777 = vmatprep.subr.mxu0 0.0
        %2778 = vmatpush1.msra.mxu0 0.0
        %2779 = vmatprep.subr.mxu0 0.0
        %2780 = vmatpush1.msra.mxu0 0.0
        %2781 = vmatprep.subr.mxu0 0.0
        %2782 = vmatpush1.msra.mxu0 0.0
        %2783 = vmatprep.subr.mxu0 0.0
        %2784 = vmatpush1.msra.mxu0 0.0
        %2785 = vmatprep.subr.mxu0 0.0
        %2786 = vmatpush1.msra.mxu0 0.0
        %2787 = vmatprep.subr.mxu0 0.0
        %2788 = vmatpush1.msra.mxu0 0.0
        %2789 = vmatprep.subr.mxu0 0.0
        %2790 = vmatpush1.msra.mxu0 0.0
        %2791 = vmatprep.subr.mxu0 0.0
        %2792 = vmatpush1.msra.mxu0 0.0
        %2793 = vmatprep.subr.mxu0 0.0
        %2794 = vmatpush1.msra.mxu0 0.0
        %2795 = vmatprep.subr.mxu0 0.0
        %2796 = vmatpush1.msra.mxu0 0.0
        %2797 = vmatprep.subr.mxu0 0.0
        %2798 = vmatpush1.msra.mxu0 0.0
        %2799 = vmatprep.subr.mxu0 0.0
        %2800 = vmatpush1.msra.mxu0 0.0
        %2801 = vmatprep.subr.mxu0 0.0
        %2802 = vmatpush1.msra.mxu0 0.0
        %2803 = vmatprep.subr.mxu0 0.0
        %2804 = vmatpush1.msra.mxu0 0.0
        %2805 = vmatprep.subr.mxu0 0.0
        %2806 = vmatpush1.msra.mxu0 0.0
        %2807 = vmatprep.subr.mxu0 0.0
        %2808 = vmatpush1.msra.mxu0 0.0
        %2809 = vmatprep.subr.mxu0 0.0
        %2810 = vmatpush1.msra.mxu0 0.0
        %2811 = vmatprep.subr.mxu0 0.0
        %2812 = vmatpush1.msra.mxu0 0.0
        %2813 = vmatprep.subr.mxu0 0.0
        %2814 = vmatpush1.msra.mxu0 0.0
        %2815 = vmatprep.subr.mxu0 0.0
        %2816 = vmatpush1.msra.mxu0 0.0
        %2817 = vmatprep.mubr.f32.mxu0 0.0
        %2818 = vmatmul.mubr.f32.gmra.mrb[0].mxu0 %v2467
        %v2819 = vpop.f32.mrb[0].mxu0
        %v2820 = vadd.f32 0.0, %v2819
        %v2821 = vpop.f32.mrb[0].mxu0
        %v2822 = vadd.f32 0.0, %v2821
        %2823 = vdwg.mxu0
        %2824 = vmatprep.subr.mxu0 %v2381
        %2825 = vmatpush1.msra.mxu0 %v2380
        %2826 = vmatprep.subr.mxu0 %v2405
        %2827 = vmatpush1.msra.mxu0 %v2404
        %2828 = vmatprep.subr.mxu0 %v2429
        %2829 = vmatpush1.msra.mxu0 %v2428
        %2830 = vmatprep.subr.mxu0 %v2453
        %2831 = vmatpush1.msra.mxu0 %v2452
        %2832 = vmatprep.subr.mxu0 0.0
        %2833 = vmatpush1.msra.mxu0 0.0
        %2834 = vmatprep.subr.mxu0 0.0
        %2835 = vmatpush1.msra.mxu0 0.0
        %2836 = vmatprep.subr.mxu0 0.0
        %2837 = vmatpush1.msra.mxu0 0.0
        %2838 = vmatprep.subr.mxu0 0.0
        %2839 = vmatpush1.msra.mxu0 0.0
        %2840 = vmatprep.subr.mxu0 0.0
        %2841 = vmatpush1.msra.mxu0 0.0
        %2842 = vmatprep.subr.mxu0 0.0
        %2843 = vmatpush1.msra.mxu0 0.0
        %2844 = vmatprep.subr.mxu0 0.0
        %2845 = vmatpush1.msra.mxu0 0.0
        %2846 = vmatprep.subr.mxu0 0.0
        %2847 = vmatpush1.msra.mxu0 0.0
        %2848 = vmatprep.subr.mxu0 0.0
        %2849 = vmatpush1.msra.mxu0 0.0
        %2850 = vmatprep.subr.mxu0 0.0
        %2851 = vmatpush1.msra.mxu0 0.0
        %2852 = vmatprep.subr.mxu0 0.0
        %2853 = vmatpush1.msra.mxu0 0.0
        %2854 = vmatprep.subr.mxu0 0.0
        %2855 = vmatpush1.msra.mxu0 0.0
        %2856 = vmatprep.subr.mxu0 0.0
        %2857 = vmatpush1.msra.mxu0 0.0
        %2858 = vmatprep.subr.mxu0 0.0
        %2859 = vmatpush1.msra.mxu0 0.0
        %2860 = vmatprep.subr.mxu0 0.0
        %2861 = vmatpush1.msra.mxu0 0.0
        %2862 = vmatprep.subr.mxu0 0.0
        %2863 = vmatpush1.msra.mxu0 0.0
        %2864 = vmatprep.subr.mxu0 0.0
        %2865 = vmatpush1.msra.mxu0 0.0
        %2866 = vmatprep.subr.mxu0 0.0
        %2867 = vmatpush1.msra.mxu0 0.0
        %2868 = vmatprep.subr.mxu0 0.0
        %2869 = vmatpush1.msra.mxu0 0.0
        %2870 = vmatprep.subr.mxu0 0.0
        %2871 = vmatpush1.msra.mxu0 0.0
        %2872 = vmatprep.subr.mxu0 0.0
        %2873 = vmatpush1.msra.mxu0 0.0
        %2874 = vmatprep.subr.mxu0 0.0
        %2875 = vmatpush1.msra.mxu0 0.0
        %2876 = vmatprep.subr.mxu0 0.0
        %2877 = vmatpush1.msra.mxu0 0.0
        %2878 = vmatprep.subr.mxu0 0.0
        %2879 = vmatpush1.msra.mxu0 0.0
        %2880 = vmatprep.subr.mxu0 0.0
        %2881 = vmatpush1.msra.mxu0 0.0
        %2882 = vmatprep.subr.mxu0 0.0
        %2883 = vmatpush1.msra.mxu0 0.0
        %2884 = vmatprep.subr.mxu0 0.0
        %2885 = vmatpush1.msra.mxu0 0.0
        %2886 = vmatprep.subr.mxu0 0.0
        %2887 = vmatpush1.msra.mxu0 0.0
        %2888 = vmatprep.mubr.f32.mxu0 0.0
        %2889 = vmatmul.mubr.f32.gmra.mrb[0].mxu0 %v2467
        %v2890 = vpop.f32.mrb[0].mxu0
        %v2891 = vadd.f32 0.0, %v2890
        %v2892 = vpop.f32.mrb[0].mxu0
        %v2893 = vadd.f32 0.0, %v2892
        %2894 = vdwg.mxu0
        %2895 = vmatprep.subr.mxu0 %v2383
        %2896 = vmatpush1.msra.mxu0 %v2382
        %2897 = vmatprep.subr.mxu0 %v2407
        %2898 = vmatpush1.msra.mxu0 %v2406
        %2899 = vmatprep.subr.mxu0 %v2431
        %2900 = vmatpush1.msra.mxu0 %v2430
        %2901 = vmatprep.subr.mxu0 %v2455
        %2902 = vmatpush1.msra.mxu0 %v2454
        %2903 = vmatprep.subr.mxu0 0.0
        %2904 = vmatpush1.msra.mxu0 0.0
        %2905 = vmatprep.subr.mxu0 0.0
        %2906 = vmatpush1.msra.mxu0 0.0
        %2907 = vmatprep.subr.mxu0 0.0
        %2908 = vmatpush1.msra.mxu0 0.0
        %2909 = vmatprep.subr.mxu0 0.0
        %2910 = vmatpush1.msra.mxu0 0.0
        %2911 = vmatprep.subr.mxu0 0.0
        %2912 = vmatpush1.msra.mxu0 0.0
        %2913 = vmatprep.subr.mxu0 0.0
        %2914 = vmatpush1.msra.mxu0 0.0
        %2915 = vmatprep.subr.mxu0 0.0
        %2916 = vmatpush1.msra.mxu0 0.0
        %2917 = vmatprep.subr.mxu0 0.0
        %2918 = vmatpush1.msra.mxu0 0.0
        %2919 = vmatprep.subr.mxu0 0.0
        %2920 = vmatpush1.msra.mxu0 0.0
        %2921 = vmatprep.subr.mxu0 0.0
        %2922 = vmatpush1.msra.mxu0 0.0
        %2923 = vmatprep.subr.mxu0 0.0
        %2924 = vmatpush1.msra.mxu0 0.0
        %2925 = vmatprep.subr.mxu0 0.0
        %2926 = vmatpush1.msra.mxu0 0.0
        %2927 = vmatprep.subr.mxu0 0.0
        %2928 = vmatpush1.msra.mxu0 0.0
        %2929 = vmatprep.subr.mxu0 0.0
        %2930 = vmatpush1.msra.mxu0 0.0
        %2931 = vmatprep.subr.mxu0 0.0
        %2932 = vmatpush1.msra.mxu0 0.0
        %2933 = vmatprep.subr.mxu0 0.0
        %2934 = vmatpush1.msra.mxu0 0.0
        %2935 = vmatprep.subr.mxu0 0.0
        %2936 = vmatpush1.msra.mxu0 0.0
        %2937 = vmatprep.subr.mxu0 0.0
        %2938 = vmatpush1.msra.mxu0 0.0
        %2939 = vmatprep.subr.mxu0 0.0
        %2940 = vmatpush1.msra.mxu0 0.0
        %2941 = vmatprep.subr.mxu0 0.0
        %2942 = vmatpush1.msra.mxu0 0.0
        %2943 = vmatprep.subr.mxu0 0.0
        %2944 = vmatpush1.msra.mxu0 0.0
        %2945 = vmatprep.subr.mxu0 0.0
        %2946 = vmatpush1.msra.mxu0 0.0
        %2947 = vmatprep.subr.mxu0 0.0
        %2948 = vmatpush1.msra.mxu0 0.0
        %2949 = vmatprep.subr.mxu0 0.0
        %2950 = vmatpush1.msra.mxu0 0.0
        %2951 = vmatprep.subr.mxu0 0.0
        %2952 = vmatpush1.msra.mxu0 0.0
        %2953 = vmatprep.subr.mxu0 0.0
        %2954 = vmatpush1.msra.mxu0 0.0
        %2955 = vmatprep.subr.mxu0 0.0
        %2956 = vmatpush1.msra.mxu0 0.0
        %2957 = vmatprep.subr.mxu0 0.0
        %2958 = vmatpush1.msra.mxu0 0.0
        %2959 = vmatprep.mubr.f32.mxu0 0.0
        %2960 = vmatmul.mubr.f32.gmra.mrb[0].mxu0 %v2467
        %v2961 = vpop.f32.mrb[0].mxu0
        %v2962 = vadd.f32 0.0, %v2961
        %v2963 = vpop.f32.mrb[0].mxu0
        %v2964 = vadd.f32 0.0, %v2963
        %2965 = vdwg.mxu0
        %2966 = vmatprep.subr.mxu0 %v2385
        %2967 = vmatpush1.msra.mxu0 %v2384
        %2968 = vmatprep.subr.mxu0 %v2409
        %2969 = vmatpush1.msra.mxu0 %v2408
        %2970 = vmatprep.subr.mxu0 %v2433
        %2971 = vmatpush1.msra.mxu0 %v2432
        %2972 = vmatprep.subr.mxu0 %v2457
        %2973 = vmatpush1.msra.mxu0 %v2456
        %2974 = vmatprep.subr.mxu0 0.0
        %2975 = vmatpush1.msra.mxu0 0.0
        %2976 = vmatprep.subr.mxu0 0.0
        %2977 = vmatpush1.msra.mxu0 0.0
        %2978 = vmatprep.subr.mxu0 0.0
        %2979 = vmatpush1.msra.mxu0 0.0
        %2980 = vmatprep.subr.mxu0 0.0
        %2981 = vmatpush1.msra.mxu0 0.0
        %2982 = vmatprep.subr.mxu0 0.0
        %2983 = vmatpush1.msra.mxu0 0.0
        %2984 = vmatprep.subr.mxu0 0.0
        %2985 = vmatpush1.msra.mxu0 0.0
        %2986 = vmatprep.subr.mxu0 0.0
        %2987 = vmatpush1.msra.mxu0 0.0
        %2988 = vmatprep.subr.mxu0 0.0
        %2989 = vmatpush1.msra.mxu0 0.0
        %2990 = vmatprep.subr.mxu0 0.0
        %2991 = vmatpush1.msra.mxu0 0.0
        %2992 = vmatprep.subr.mxu0 0.0
        %2993 = vmatpush1.msra.mxu0 0.0
        %2994 = vmatprep.subr.mxu0 0.0
        %2995 = vmatpush1.msra.mxu0 0.0
        %2996 = vmatprep.subr.mxu0 0.0
        %2997 = vmatpush1.msra.mxu0 0.0
        %2998 = vmatprep.subr.mxu0 0.0
        %2999 = vmatpush1.msra.mxu0 0.0
        %3000 = vmatprep.subr.mxu0 0.0
        %3001 = vmatpush1.msra.mxu0 0.0
        %3002 = vmatprep.subr.mxu0 0.0
        %3003 = vmatpush1.msra.mxu0 0.0
        %3004 = vmatprep.subr.mxu0 0.0
        %3005 = vmatpush1.msra.mxu0 0.0
        %3006 = vmatprep.subr.mxu0 0.0
        %3007 = vmatpush1.msra.mxu0 0.0
        %3008 = vmatprep.subr.mxu0 0.0
        %3009 = vmatpush1.msra.mxu0 0.0
        %3010 = vmatprep.subr.mxu0 0.0
        %3011 = vmatpush1.msra.mxu0 0.0
        %3012 = vmatprep.subr.mxu0 0.0
        %3013 = vmatpush1.msra.mxu0 0.0
        %3014 = vmatprep.subr.mxu0 0.0
        %3015 = vmatpush1.msra.mxu0 0.0
        %3016 = vmatprep.subr.mxu0 0.0
        %3017 = vmatpush1.msra.mxu0 0.0
        %3018 = vmatprep.subr.mxu0 0.0
        %3019 = vmatpush1.msra.mxu0 0.0
        %3020 = vmatprep.subr.mxu0 0.0
        %3021 = vmatpush1.msra.mxu0 0.0
        %3022 = vmatprep.subr.mxu0 0.0
        %3023 = vmatpush1.msra.mxu0 0.0
        %3024 = vmatprep.subr.mxu0 0.0
        %3025 = vmatpush1.msra.mxu0 0.0
        %3026 = vmatprep.subr.mxu0 0.0
        %3027 = vmatpush1.msra.mxu0 0.0
        %3028 = vmatprep.subr.mxu0 0.0
        %3029 = vmatpush1.msra.mxu0 0.0
        %3030 = vmatprep.mubr.f32.mxu0 0.0
        %3031 = vmatmul.mubr.f32.gmra.mrb[0].mxu0 %v2467
        %v3032 = vpop.f32.mrb[0].mxu0
        %v3033 = vadd.f32 0.0, %v3032
        %v3034 = vpop.f32.mrb[0].mxu0
        %v3035 = vadd.f32 0.0, %v3034
        %3036 = vdwg.mxu0
        %3037 = vmatprep.subr.mxu0 %v2387
        %3038 = vmatpush1.msra.mxu0 %v2386
        %3039 = vmatprep.subr.mxu0 %v2411
        %3040 = vmatpush1.msra.mxu0 %v2410
        %3041 = vmatprep.subr.mxu0 %v2435
        %3042 = vmatpush1.msra.mxu0 %v2434
        %3043 = vmatprep.subr.mxu0 %v2459
        %3044 = vmatpush1.msra.mxu0 %v2458
        %3045 = vmatprep.subr.mxu0 0.0
        %3046 = vmatpush1.msra.mxu0 0.0
        %3047 = vmatprep.subr.mxu0 0.0
        %3048 = vmatpush1.msra.mxu0 0.0
        %3049 = vmatprep.subr.mxu0 0.0
        %3050 = vmatpush1.msra.mxu0 0.0
        %3051 = vmatprep.subr.mxu0 0.0
        %3052 = vmatpush1.msra.mxu0 0.0
        %3053 = vmatprep.subr.mxu0 0.0
        %3054 = vmatpush1.msra.mxu0 0.0
        %3055 = vmatprep.subr.mxu0 0.0
        %3056 = vmatpush1.msra.mxu0 0.0
        %3057 = vmatprep.subr.mxu0 0.0
        %3058 = vmatpush1.msra.mxu0 0.0
        %3059 = vmatprep.subr.mxu0 0.0
        %3060 = vmatpush1.msra.mxu0 0.0
        %3061 = vmatprep.subr.mxu0 0.0
        %3062 = vmatpush1.msra.mxu0 0.0
        %3063 = vmatprep.subr.mxu0 0.0
        %3064 = vmatpush1.msra.mxu0 0.0
        %3065 = vmatprep.subr.mxu0 0.0
        %3066 = vmatpush1.msra.mxu0 0.0
        %3067 = vmatprep.subr.mxu0 0.0
        %3068 = vmatpush1.msra.mxu0 0.0
        %3069 = vmatprep.subr.mxu0 0.0
        %3070 = vmatpush1.msra.mxu0 0.0
        %3071 = vmatprep.subr.mxu0 0.0
        %3072 = vmatpush1.msra.mxu0 0.0
        %3073 = vmatprep.subr.mxu0 0.0
        %3074 = vmatpush1.msra.mxu0 0.0
        %3075 = vmatprep.subr.mxu0 0.0
        %3076 = vmatpush1.msra.mxu0 0.0
        %3077 = vmatprep.subr.mxu0 0.0
        %3078 = vmatpush1.msra.mxu0 0.0
        %3079 = vmatprep.subr.mxu0 0.0
        %3080 = vmatpush1.msra.mxu0 0.0
        %3081 = vmatprep.subr.mxu0 0.0
        %3082 = vmatpush1.msra.mxu0 0.0
        %3083 = vmatprep.subr.mxu0 0.0
        %3084 = vmatpush1.msra.mxu0 0.0
        %3085 = vmatprep.subr.mxu0 0.0
        %3086 = vmatpush1.msra.mxu0 0.0
        %3087 = vmatprep.subr.mxu0 0.0
        %3088 = vmatpush1.msra.mxu0 0.0
        %3089 = vmatprep.subr.mxu0 0.0
        %3090 = vmatpush1.msra.mxu0 0.0
        %3091 = vmatprep.subr.mxu0 0.0
        %3092 = vmatpush1.msra.mxu0 0.0
        %3093 = vmatprep.subr.mxu0 0.0
        %3094 = vmatpush1.msra.mxu0 0.0
        %3095 = vmatprep.subr.mxu0 0.0
        %3096 = vmatpush1.msra.mxu0 0.0
        %3097 = vmatprep.subr.mxu0 0.0
        %3098 = vmatpush1.msra.mxu0 0.0
        %3099 = vmatprep.subr.mxu0 0.0
        %3100 = vmatpush1.msra.mxu0 0.0
        %3101 = vmatprep.mubr.f32.mxu0 0.0
        %3102 = vmatmul.mubr.f32.gmra.mrb[0].mxu0 %v2467
        %v3103 = vpop.f32.mrb[0].mxu0
        %v3104 = vadd.f32 0.0, %v3103
        %v3105 = vpop.f32.mrb[0].mxu0
        %v3106 = vadd.f32 0.0, %v3105
        %3107 = vdwg.mxu0
        %3108 = vmatprep.subr.mxu0 %v2389
        %3109 = vmatpush1.msra.mxu0 %v2388
        %3110 = vmatprep.subr.mxu0 %v2413
        %3111 = vmatpush1.msra.mxu0 %v2412
        %3112 = vmatprep.subr.mxu0 %v2437
        %3113 = vmatpush1.msra.mxu0 %v2436
        %3114 = vmatprep.subr.mxu0 %v2461
        %3115 = vmatpush1.msra.mxu0 %v2460
        %3116 = vmatprep.subr.mxu0 0.0
        %3117 = vmatpush1.msra.mxu0 0.0
        %3118 = vmatprep.subr.mxu0 0.0
        %3119 = vmatpush1.msra.mxu0 0.0
        %3120 = vmatprep.subr.mxu0 0.0
        %3121 = vmatpush1.msra.mxu0 0.0
        %3122 = vmatprep.subr.mxu0 0.0
        %3123 = vmatpush1.msra.mxu0 0.0
        %3124 = vmatprep.subr.mxu0 0.0
        %3125 = vmatpush1.msra.mxu0 0.0
        %3126 = vmatprep.subr.mxu0 0.0
        %3127 = vmatpush1.msra.mxu0 0.0
        %3128 = vmatprep.subr.mxu0 0.0
        %3129 = vmatpush1.msra.mxu0 0.0
        %3130 = vmatprep.subr.mxu0 0.0
        %3131 = vmatpush1.msra.mxu0 0.0
        %3132 = vmatprep.subr.mxu0 0.0
        %3133 = vmatpush1.msra.mxu0 0.0
        %3134 = vmatprep.subr.mxu0 0.0
        %3135 = vmatpush1.msra.mxu0 0.0
        %3136 = vmatprep.subr.mxu0 0.0
        %3137 = vmatpush1.msra.mxu0 0.0
        %3138 = vmatprep.subr.mxu0 0.0
        %3139 = vmatpush1.msra.mxu0 0.0
        %3140 = vmatprep.subr.mxu0 0.0
        %3141 = vmatpush1.msra.mxu0 0.0
        %3142 = vmatprep.subr.mxu0 0.0
        %3143 = vmatpush1.msra.mxu0 0.0
        %3144 = vmatprep.subr.mxu0 0.0
        %3145 = vmatpush1.msra.mxu0 0.0
        %3146 = vmatprep.subr.mxu0 0.0
        %3147 = vmatpush1.msra.mxu0 0.0
        %3148 = vmatprep.subr.mxu0 0.0
        %3149 = vmatpush1.msra.mxu0 0.0
        %3150 = vmatprep.subr.mxu0 0.0
        %3151 = vmatpush1.msra.mxu0 0.0
        %3152 = vmatprep.subr.mxu0 0.0
        %3153 = vmatpush1.msra.mxu0 0.0
        %3154 = vmatprep.subr.mxu0 0.0
        %3155 = vmatpush1.msra.mxu0 0.0
        %3156 = vmatprep.subr.mxu0 0.0
        %3157 = vmatpush1.msra.mxu0 0.0
        %3158 = vmatprep.subr.mxu0 0.0
        %3159 = vmatpush1.msra.mxu0 0.0
        %3160 = vmatprep.subr.mxu0 0.0
        %3161 = vmatpush1.msra.mxu0 0.0
        %3162 = vmatprep.subr.mxu0 0.0
        %3163 = vmatpush1.msra.mxu0 0.0
        %3164 = vmatprep.subr.mxu0 0.0
        %3165 = vmatpush1.msra.mxu0 0.0
        %3166 = vmatprep.subr.mxu0 0.0
        %3167 = vmatpush1.msra.mxu0 0.0
        %3168 = vmatprep.subr.mxu0 0.0
        %3169 = vmatpush1.msra.mxu0 0.0
        %3170 = vmatprep.subr.mxu0 0.0
        %3171 = vmatpush1.msra.mxu0 0.0
        %3172 = vmatprep.mubr.f32.mxu0 0.0
        %3173 = vmatmul.mubr.f32.gmra.mrb[0].mxu0 %v2467
        %v3174 = vpop.f32.mrb[0].mxu0
        %v3175 = vadd.f32 0.0, %v3174
        %v3176 = vpop.f32.mrb[0].mxu0
        %v3177 = vadd.f32 0.0, %v3176
        %3178 = vdwg.mxu0
        %3179 = vmatprep.subr.mxu0 %v2391
        %3180 = vmatpush1.msra.mxu0 %v2390
        %3181 = vmatprep.subr.mxu0 %v2415
        %3182 = vmatpush1.msra.mxu0 %v2414
        %3183 = vmatprep.subr.mxu0 %v2439
        %3184 = vmatpush1.msra.mxu0 %v2438
        %3185 = vmatprep.subr.mxu0 %v2463
        %3186 = vmatpush1.msra.mxu0 %v2462
        %3187 = vmatprep.subr.mxu0 0.0
        %3188 = vmatpush1.msra.mxu0 0.0
        %3189 = vmatprep.subr.mxu0 0.0
        %3190 = vmatpush1.msra.mxu0 0.0
        %3191 = vmatprep.subr.mxu0 0.0
        %3192 = vmatpush1.msra.mxu0 0.0
        %3193 = vmatprep.subr.mxu0 0.0
        %3194 = vmatpush1.msra.mxu0 0.0
        %3195 = vmatprep.subr.mxu0 0.0
        %3196 = vmatpush1.msra.mxu0 0.0
        %3197 = vmatprep.subr.mxu0 0.0
        %3198 = vmatpush1.msra.mxu0 0.0
        %3199 = vmatprep.subr.mxu0 0.0
        %3200 = vmatpush1.msra.mxu0 0.0
        %3201 = vmatprep.subr.mxu0 0.0
        %3202 = vmatpush1.msra.mxu0 0.0
        %3203 = vmatprep.subr.mxu0 0.0
        %3204 = vmatpush1.msra.mxu0 0.0
        %3205 = vmatprep.subr.mxu0 0.0
        %3206 = vmatpush1.msra.mxu0 0.0
        %3207 = vmatprep.subr.mxu0 0.0
        %3208 = vmatpush1.msra.mxu0 0.0
        %3209 = vmatprep.subr.mxu0 0.0
        %3210 = vmatpush1.msra.mxu0 0.0
        %3211 = vmatprep.subr.mxu0 0.0
        %3212 = vmatpush1.msra.mxu0 0.0
        %3213 = vmatprep.subr.mxu0 0.0
        %3214 = vmatpush1.msra.mxu0 0.0
        %3215 = vmatprep.subr.mxu0 0.0
        %3216 = vmatpush1.msra.mxu0 0.0
        %3217 = vmatprep.subr.mxu0 0.0
        %3218 = vmatpush1.msra.mxu0 0.0
        %3219 = vmatprep.subr.mxu0 0.0
        %3220 = vmatpush1.msra.mxu0 0.0
        %3221 = vmatprep.subr.mxu0 0.0
        %3222 = vmatpush1.msra.mxu0 0.0
        %3223 = vmatprep.subr.mxu0 0.0
        %3224 = vmatpush1.msra.mxu0 0.0
        %3225 = vmatprep.subr.mxu0 0.0
        %3226 = vmatpush1.msra.mxu0 0.0
        %3227 = vmatprep.subr.mxu0 0.0
        %3228 = vmatpush1.msra.mxu0 0.0
        %3229 = vmatprep.subr.mxu0 0.0
        %3230 = vmatpush1.msra.mxu0 0.0
        %3231 = vmatprep.subr.mxu0 0.0
        %3232 = vmatpush1.msra.mxu0 0.0
        %3233 = vmatprep.subr.mxu0 0.0
        %3234 = vmatpush1.msra.mxu0 0.0
        %3235 = vmatprep.subr.mxu0 0.0
        %3236 = vmatpush1.msra.mxu0 0.0
        %3237 = vmatprep.subr.mxu0 0.0
        %3238 = vmatpush1.msra.mxu0 0.0
        %3239 = vmatprep.subr.mxu0 0.0
        %3240 = vmatpush1.msra.mxu0 0.0
        %3241 = vmatprep.subr.mxu0 0.0
        %3242 = vmatpush1.msra.mxu0 0.0
        %3243 = vmatprep.mubr.f32.mxu0 0.0
        %3244 = vmatmul.mubr.f32.gmra.mrb[0].mxu0 %v2467
        %v3245 = vpop.f32.mrb[0].mxu0
        %v3246 = vadd.f32 0.0, %v3245
        %v3247 = vpop.f32.mrb[0].mxu0
        %v3248 = vadd.f32 0.0, %v3247
        %3249 = vdwg.mxu0
        %3250 = vmatprep.subr.mxu0 %v2393
        %3251 = vmatpush1.msra.mxu0 %v2392
        %3252 = vmatprep.subr.mxu0 %v2417
        %3253 = vmatpush1.msra.mxu0 %v2416
        %3254 = vmatprep.subr.mxu0 %v2441
        %3255 = vmatpush1.msra.mxu0 %v2440
        %3256 = vmatprep.subr.mxu0 %v2465
        %3257 = vmatpush1.msra.mxu0 %v2464
        %3258 = vmatprep.subr.mxu0 0.0
        %3259 = vmatpush1.msra.mxu0 0.0
        %3260 = vmatprep.subr.mxu0 0.0
        %3261 = vmatpush1.msra.mxu0 0.0
        %3262 = vmatprep.subr.mxu0 0.0
        %3263 = vmatpush1.msra.mxu0 0.0
        %3264 = vmatprep.subr.mxu0 0.0
        %3265 = vmatpush1.msra.mxu0 0.0
        %3266 = vmatprep.subr.mxu0 0.0
        %3267 = vmatpush1.msra.mxu0 0.0
        %3268 = vmatprep.subr.mxu0 0.0
        %3269 = vmatpush1.msra.mxu0 0.0
        %3270 = vmatprep.subr.mxu0 0.0
        %3271 = vmatpush1.msra.mxu0 0.0
        %3272 = vmatprep.subr.mxu0 0.0
        %3273 = vmatpush1.msra.mxu0 0.0
        %3274 = vmatprep.subr.mxu0 0.0
        %3275 = vmatpush1.msra.mxu0 0.0
        %3276 = vmatprep.subr.mxu0 0.0
        %3277 = vmatpush1.msra.mxu0 0.0
        %3278 = vmatprep.subr.mxu0 0.0
        %3279 = vmatpush1.msra.mxu0 0.0
        %3280 = vmatprep.subr.mxu0 0.0
        %3281 = vmatpush1.msra.mxu0 0.0
        %3282 = vmatprep.subr.mxu0 0.0
        %3283 = vmatpush1.msra.mxu0 0.0
        %3284 = vmatprep.subr.mxu0 0.0
        %3285 = vmatpush1.msra.mxu0 0.0
        %3286 = vmatprep.subr.mxu0 0.0
        %3287 = vmatpush1.msra.mxu0 0.0
        %3288 = vmatprep.subr.mxu0 0.0
        %3289 = vmatpush1.msra.mxu0 0.0
        %3290 = vmatprep.subr.mxu0 0.0
        %3291 = vmatpush1.msra.mxu0 0.0
        %3292 = vmatprep.subr.mxu0 0.0
        %3293 = vmatpush1.msra.mxu0 0.0
        %3294 = vmatprep.subr.mxu0 0.0
        %3295 = vmatpush1.msra.mxu0 0.0
        %3296 = vmatprep.subr.mxu0 0.0
        %3297 = vmatpush1.msra.mxu0 0.0
        %3298 = vmatprep.subr.mxu0 0.0
        %3299 = vmatpush1.msra.mxu0 0.0
        %3300 = vmatprep.subr.mxu0 0.0
        %3301 = vmatpush1.msra.mxu0 0.0
        %3302 = vmatprep.subr.mxu0 0.0
        %3303 = vmatpush1.msra.mxu0 0.0
        %3304 = vmatprep.subr.mxu0 0.0
        %3305 = vmatpush1.msra.mxu0 0.0
        %3306 = vmatprep.subr.mxu0 0.0
        %3307 = vmatpush1.msra.mxu0 0.0
        %3308 = vmatprep.subr.mxu0 0.0
        %3309 = vmatpush1.msra.mxu0 0.0
        %3310 = vmatprep.subr.mxu0 0.0
        %3311 = vmatpush1.msra.mxu0 0.0
        %3312 = vmatprep.subr.mxu0 0.0
        %3313 = vmatpush1.msra.mxu0 0.0
        %3314 = vmatprep.mubr.f32.mxu0 0.0
        %3315 = vmatmul.mubr.f32.gmra.mrb[0].mxu0 %v2467
        %v3316 = vpop.f32.mrb[0].mxu0
        %v3317 = vadd.f32 0.0, %v3316
        %v3318 = vpop.f32.mrb[0].mxu0
        %v3319 = vadd.f32 0.0, %v3318
        %3320 = vdwg.mxu0
        %v3321 = vld [vmem:[%s6] sm:$0xff]
        %3323 = vset.pattern.permute.xlu0 0
        %3324 = vperm.xlu0 %3323, %v3321
        %v3325 = vpop.permute.xlu0 %3324
        %v3327 = vadd.f32 %v2536, %v3325
        %v3328 = vadd.f32 %v2538, %v3325
        %v3329 = vadd.f32 %v2607, %v3325
        %v3330 = vadd.f32 %v2609, %v3325
        %v3331 = vadd.f32 %v2678, %v3325
        %v3332 = vadd.f32 %v2680, %v3325
        %v3333 = vadd.f32 %v2749, %v3325
        %v3334 = vadd.f32 %v2751, %v3325
        %3335 = vst [vmem:[%s272] sm:$0xff] %v3327
        %3336 = vst [vmem:[%s272 + $0x8] sm:$0xff] %v3328
        %3337 = vst [vmem:[%s272 + $0x10] sm:$0xff] %v3329
        %3338 = vst [vmem:[%s272 + $0x18] sm:$0xff] %v3330
        %3339 = vst [vmem:[%s272 + $0x20] sm:$0xff] %v3331
        %3340 = vst [vmem:[%s272 + $0x28] sm:$0xff] %v3332
        %3341 = vst [vmem:[%s272 + $0x30] sm:$0xff] %v3333
        %3342 = vst [vmem:[%s272 + $0x38] sm:$0xff] %v3334
        %3343 = vst [vmem:[%s272 + $0x40] sm:$0xff] %v3104
        %3344 = vst [vmem:[%s272 + $0x48] sm:$0xff] %v3106
        %3345 = vst [vmem:[%s272 + $0x50] sm:$0xff] %v3175
        %3346 = vst [vmem:[%s272 + $0x58] sm:$0xff] %v3177
        %3347 = vst [vmem:[%s272 + $0x60] sm:$0xff] %v3246
        %3348 = vst [vmem:[%s272 + $0x68] sm:$0xff] %v3248
        %3349 = vst [vmem:[%s272 + $0x70] sm:$0xff] %v3317
        %3350 = vst [vmem:[%s272 + $0x78] sm:$0xff] %v3319
        %v3351 = vsub.f32 0.0, %v2820
        %v3352 = vsub.f32 0.0, %v2822
        %v3353 = vsub.f32 0.0, %v2891
        %v3354 = vsub.f32 0.0, %v2893
        %v3355 = vsub.f32 0.0, %v2962
        %v3356 = vsub.f32 0.0, %v2964
        %v3357 = vsub.f32 0.0, %v3033
        %v3358 = vsub.f32 0.0, %v3035
        %3359 = vst [vmem:[%s272 + $0x80] sm:$0xff] %v3351
        %3360 = vst [vmem:[%s272 + $0x88] sm:$0xff] %v3352
        %3361 = vst [vmem:[%s272 + $0x90] sm:$0xff] %v3353
        %3362 = vst [vmem:[%s272 + $0x98] sm:$0xff] %v3354
        %3363 = vst [vmem:[%s272 + $0xa0] sm:$0xff] %v3355
        %3364 = vst [vmem:[%s272 + $0xa8] sm:$0xff] %v3356
        %3365 = vst [vmem:[%s272 + $0xb0] sm:$0xff] %v3357
        %3366 = vst [vmem:[%s272 + $0xb8] sm:$0xff] %v3358
        %s3367 = sand.u32 %s181, 1
        %s3368 = scalar_lea.sflag [#allocation5], %s3367
        %s3369 = sand.u32 %s181, 1
        %s3370 = smul.addr %s3369, 192
        %s3371 = scalar_lea.vmem [#allocation4], %s3370
        // Predicated region
        $region49: #{tpu_custom_call.1} parent=47 // pred_check
          %p3372 = pneg %p191
        $region50: #{tpu_custom_call.1} parent=47 // pred_check_branch
          %3374 = sbr.rel (%p3372) target = $region52
        $region51: #{tpu_custom_call.1} parent=47 // pred_region
          %s3375 = smul.u32 8, %s21
          %s3377 = ssub.s32 3072, 3072
          %3378 = vsyncadd %s3368, %s3377
          %s3379 = smul.addr %s3375, 128
          %s3380 = scalar_lea.hbm %s7, %s3379
          %s3381 = sshll.u32 %s3371, 4
          %s3382 = int_to_ptr.vmem [resolvable:$true] %s3381
          %3387 = dma.vmem_to_hbm [thread:$0]  %s3382, 3072, %s3380, %s3368, 1024, 2048, 64
        $region52: #{tpu_custom_call.1} parent=47 // pred_fallthru
          _
      $region48: #{tpu_custom_call.1} parent=5 // pred_fallthru
        _
      %p3388 = scmp.le.s32.totalorder 2, %s16
      // Predicated region
      $region53: #{tpu_custom_call.1} parent=5 // pred_check
        %p3389 = pneg %p3388
      $region54: #{tpu_custom_call.1} parent=5 // pred_check_branch
        %3391 = sbr.rel (%p3389) target = $region56
      $region55: #{tpu_custom_call.1} parent=5 // pred_region
        %s3392 = ssub.s32 %s16, 2
        // Predicated region
        $region57: #{tpu_custom_call.1} parent=55 // pred_check
          %p3393 = pneg %p197
        $region58: #{tpu_custom_call.1} parent=55 // pred_check_branch
          %3395 = sbr.rel (%p3393) target = $region60
        $region59: #{tpu_custom_call.1} parent=55 // pred_region
          %s3396 = sand.u32 %s182, 1
          %s3397 = scalar_lea.sflag [#allocation5], %s3396
          %s3398 = sand.u32 %s182, 1
          %s3399 = smul.addr %s3398, 192
          %s3400 = scalar_lea.vmem [#allocation4], %s3399
          %3401 = dma.done %s3397, 3072
        $region60: #{tpu_custom_call.1} parent=55 // pred_fallthru
          _
      $region56: #{tpu_custom_call.1} parent=5 // pred_fallthru
        _
    $region6: #{tpu_custom_call.1} parent=1 // loop_footer
      %s20 = sadd.s32 1, %s16
    $region7: #{tpu_custom_call.1} parent=1 // loop_footer_branch
      %15 = sbr.rel target = $region3
    $region8: #{tpu_custom_call.1} parent=1 // loop_exit
      _
    %3402 = vsyncpa [#allocation5], 1
    %s3403 = scalar_lea.sflag [#allocation5], 1
    %3404 = vsyncpa %s3403, 1

</llo_original>
